<compile_context>
chip_gen: v5e
topology: v5e:2x2
jax: 0.10.0
libtpu: 0.0.40
codegen_flags: <defaults>
</compile_context>

<pallas_src>
import functools

import jax
import jax.numpy as jnp
from jax.experimental import pallas as pl
from jax.experimental.pallas import tpu as pltpu

LEAK = 0.2
HIDDEN = 128
EMBED_OUT = 64
IN_CHANNELS = 256
# 5 x Conv1d(128,128,3,2,1)+LeakyReLU, then Conv1d(128,128,2,2,0)
CONV_CFGS = ((3, 2, 1),) * 5 + ((2, 2, 0),)
MAX_K = 3

# --- packed bf16 weight-slab layout (all blocks are (rows, 128)) -------------
CONV_ROWS = MAX_K * HIDDEN                 # 384 rows per conv layer (zero-padded taps)
OFF_W1M = 0                                # embed_mag   L1: (256, 128)
OFF_W1P = OFF_W1M + IN_CHANNELS            # embed_phase L1: (256, 128)
OFF_W2M = OFF_W1P + IN_CHANNELS            # embed_mag   L2: (128, 128)
OFF_W2P = OFF_W2M + HIDDEN                 # embed_phase L2: (128, 128)
OFF_W3 = OFF_W2P + HIDDEN                  # fused block-diag heads: (256, 128)
OFF_CONV = OFF_W3 + 2 * HIDDEN             # conv layer l at OFF_CONV + l*384
TOTAL_W_ROWS = OFF_CONV + len(CONV_CFGS) * CONV_ROWS      # 3328


def _leaky(x, slope=LEAK):
    return jnp.where(x > 0, x, slope * x)


def _conv_time_sizes(t):
    sizes = [t]
    for (k, s, p) in CONV_CFGS:
        t = (t + 2 * p - k) // s + 1
        assert t >= 1, "time dim does not survive the conv stack"
        sizes.append(t)
    return sizes


# ---------------------------------------------------------------------------
# Fused encoder kernel: single invocation (no grid), everything in VMEM.
# ---------------------------------------------------------------------------
def encoder_kernel(mag_ref,      # (B*T, 256) bf16
                   phase_ref,    # (B*T, 256) bf16
                   w_ref,        # (3328, 128) bf16 packed weight slab
                   b_ref,        # (11, 128)  f32  packed biases
                   o_ref,        # (B, t_final, 128) f32
                   h_scr,        # (B*(T+8), 128) f32 scratch
                   *, batch, time):
    f32 = jnp.float32
    bf16 = jnp.bfloat16
    slab = time + 8                      # per-batch scratch stride (guard row + T rows)

    def w(off, rows):                    # static-offset read of the packed weight slab
        return w_ref[pl.ds(off, rows), :]

    def bias(i):                         # (1, 128) f32
        return b_ref[pl.ds(i, 1), :]

    # ---- embedding MLPs: batch folded into the matmul rows (M = B*T) --------
    hm = _leaky(jnp.dot(mag_ref[...], w(OFF_W1M, IN_CHANNELS),
                        preferred_element_type=f32) + bias(0))
    hm = _leaky(jnp.dot(hm.astype(bf16), w(OFF_W2M, HIDDEN),
                        preferred_element_type=f32) + bias(1))
    hp = _leaky(jnp.dot(phase_ref[...], w(OFF_W1P, IN_CHANNELS),
                        preferred_element_type=f32) + bias(2))
    hp = _leaky(jnp.dot(hp.astype(bf16), w(OFF_W2P, HIDDEN),
                        preferred_element_type=f32) + bias(3))

    # Fused lane-dense heads: [hm | hp] @ blockdiag(W3_mag, W3_phase)
    #   == torch.cat([embed_mag(mag), embed_phase(phase)], dim=-1)
    hmp = jnp.concatenate([hm, hp], axis=-1).astype(bf16)          # (B*T, 256)
    h = jnp.dot(hmp, w(OFF_W3, 2 * HIDDEN),
                preferred_element_type=f32) + bias(4)              # (B*T, 128) f32

    # ---- stage into scratch: zero guard row + T activation rows per batch ----
    # scratch row base+1+r holds time step r; row base stays 0 so the "left
    # pad" tap of the stride-2 / pad-1 convs reads an exact zero.
    for b in range(batch):
        base = b * slab
        h_scr[pl.ds(base, 1), :] = jnp.zeros((1, HIDDEN), f32)
        h_scr[pl.ds(base + 1, time), :] = h[b * time:(b + 1) * time, :]

    # ---- conv stack: implicit im2col via strided sublane reads ---------------
    n_layers = len(CONV_CFGS)
    t_in = time
    for l, (k, s, p) in enumerate(CONV_CFGS):
        t_out = (t_in + 2 * p - k) // s + 1
        w_l = w(OFF_CONV + l * CONV_ROWS, k * HIDDEN)              # (k*128, 128) bf16
        b_l = bias(5 + l)
        for b in range(batch):
            base = b * slab
            # tap j of output step t reads input row s*t + j - p, i.e. scratch
            # row  base + 1 + j - p + s*t  (the guard row supplies the pad).
            taps = [h_scr[pl.ds(base + 1 + j - p, t_out, stride=s), :]
                    for j in range(k)]
            patch = jnp.concatenate(taps, axis=-1).astype(bf16)    # (t_out, k*128)
            y = jnp.dot(patch, w_l, preferred_element_type=f32) + b_l
            if l < n_layers - 1:
                h_scr[pl.ds(base + 1, t_out), :] = _leaky(y)       # feed next layer
            else:
                o_ref[b, :, :] = y                                 # final Conv1d (no act)
        t_in = t_out


# ---------------------------------------------------------------------------
# Parameters (deterministic, uniform(-0.1, 0.1)) in their "natural" layout.
# ---------------------------------------------------------------------------
def _uniform(key, shape, lim=0.1):
    return jax.random.uniform(key, shape, jnp.float32, -lim, lim)


def make_params(key):
    keys = iter(jax.random.split(key, 64))

    def stack():  # LinearOutputStack(128, 2, out=64, in=256)
        return dict(
            w1=_uniform(next(keys), (IN_CHANNELS, HIDDEN)), b1=_uniform(next(keys), (1, HIDDEN)),
            w2=_uniform(next(keys), (HIDDEN, HIDDEN)),      b2=_uniform(next(keys), (1, HIDDEN)),
            w3=_uniform(next(keys), (HIDDEN, EMBED_OUT)),   b3=_uniform(next(keys), (1, EMBED_OUT)),
        )

    conv_w, conv_b = [], []
    for (k, _, _) in CONV_CFGS:
        wmat = jnp.zeros((MAX_K, HIDDEN, HIDDEN), jnp.float32)
        wmat = wmat.at[:k].set(_uniform(next(keys), (k, HIDDEN, HIDDEN)))
        conv_w.append(wmat)                                 # unused taps stay zero
        conv_b.append(_uniform(next(keys), (1, HIDDEN)))

    return dict(
        embed_mag=stack(),
        embed_phase=stack(),
        conv_w=jnp.stack(conv_w),   # (6, 3, 128, 128)
        conv_b=jnp.stack(conv_b),   # (6, 1, 128)
    )


def _pack_params(params):
    """Pack every weight into one (3328,128) bf16 slab and one (11,128) f32 bias slab."""
    em, ep = params["embed_mag"], params["embed_phase"]

    # Block-diagonal fused output heads (exactly torch.cat([mag, phase], -1)).
    w3 = jnp.zeros((2 * HIDDEN, HIDDEN), jnp.float32)
    w3 = w3.at[:HIDDEN, :EMBED_OUT].set(em["w3"])
    w3 = w3.at[HIDDEN:, EMBED_OUT:].set(ep["w3"])

    conv_flat = params["conv_w"].reshape(len(CONV_CFGS) * MAX_K * HIDDEN, HIDDEN)
    w_packed = jnp.concatenate(
        [em["w1"], ep["w1"], em["w2"], ep["w2"], w3, conv_flat], axis=0
    ).astype(jnp.bfloat16)
    assert w_packed.shape == (TOTAL_W_ROWS, HIDDEN)

    b3 = jnp.concatenate([em["b3"], ep["b3"]], axis=1)        # (1, 128)
    biases = jnp.concatenate(
        [em["b1"], em["b2"], ep["b1"], ep["b2"], b3,
         params["conv_b"].reshape(len(CONV_CFGS), HIDDEN)], axis=0)   # (11, 128) f32
    return w_packed, biases


# ---------------------------------------------------------------------------
# Encoder forward (single fused pallas_call, no grid).
# ---------------------------------------------------------------------------
@jax.jit
def encoder_forward(x, params):
    b, two, t, c = x.shape
    assert two == 2 and c == IN_CHANNELS
    assert t % 8 == 0
    t_final = _conv_time_sizes(t)[-1]

    w_packed, biases = _pack_params(params)
    mag = x[:, 0].reshape(b * t, c).astype(jnp.bfloat16)
    phase = x[:, 1].reshape(b * t, c).astype(jnp.bfloat16)

    # Advisory cost estimate for XLA scheduling.
    mac = b * t * (3 * IN_CHANNELS * HIDDEN + 2 * HIDDEN * HIDDEN)
    t_i = t
    for (k, s, p) in CONV_CFGS:
        t_o = (t_i + 2 * p - k) // s + 1
        mac += b * t_o * k * HIDDEN * HIDDEN
        t_i = t_o
    bytes_accessed = sum(a.size * a.dtype.itemsize for a in (mag, phase, w_packed, biases))
    bytes_accessed += b * t_final * HIDDEN * 4

    out = pl.pallas_call(
        functools.partial(encoder_kernel, batch=b, time=t),
        out_shape=jax.ShapeDtypeStruct((b, t_final, HIDDEN), jnp.float32),
        scratch_shapes=[pltpu.VMEM((b * (t + 8), HIDDEN), jnp.float32)],
        cost_estimate=pl.CostEstimate(flops=2 * mac, transcendentals=0,
                                      bytes_accessed=int(bytes_accessed)),
    )(mag, phase, w_packed, biases)

    # PyTorch reshapes the (B, C, T_out) tensor to (B, C*T_out); kernel output
    # is channels-last, so transpose before flattening (no-op copy for T_out=1).
    return jnp.transpose(out, (0, 2, 1)).reshape(b, -1)


# ---------------------------------------------------------------------------
# Pure-JAX reference (same params) for a numerical sanity check.
# ---------------------------------------------------------------------------
def encoder_reference(x, params):
    b, _, t, c = x.shape

    def mlp(h, p):
        h = _leaky(h @ p["w1"] + p["b1"])
        h = _leaky(h @ p["w2"] + p["b2"])
        return h @ p["w3"] + p["b3"]

    mag = mlp(x[:, 0].reshape(b * t, c), params["embed_mag"]).reshape(b, t, EMBED_OUT)
    phase = mlp(x[:, 1].reshape(b * t, c), params["embed_phase"]).reshape(b, t, EMBED_OUT)
    h = jnp.concatenate([mag, phase], axis=-1)                # (B, T, 128)

    for l, (k, s, p) in enumerate(CONV_CFGS):
        w = params["conv_w"][l]
        bias = params["conv_b"][l]
        t_in = h.shape[1]
        t_out = (t_in + 2 * p - k) // s + 1
        hp_ = jnp.pad(h, ((0, 0), (p, p), (0, 0)))
        y = jnp.zeros((b, t_out, HIDDEN), jnp.float32)
        for j in range(k):
            sl = hp_[:, j:j + s * (t_out - 1) + 1:s, :]
            y = y + jnp.einsum("btc,cd->btd", sl, w[j])
        y = y + bias
        if l < len(CONV_CFGS) - 1:
            y = _leaky(y)
        h = y

    return jnp.transpose(h, (0, 2, 1)).reshape(b, -1)


if __name__ == "__main__":
    key = jax.random.PRNGKey(0)
    k_params, k_x = jax.random.split(key)

    params = make_params(k_params)

    # time=64 survives the six stride-2 convs: 64->32->16->8->4->2->1.
    B, T = 2, 64
    x = jax.random.normal(k_x, (B, 2, T, IN_CHANNELS), jnp.float32)

    out = jax.block_until_ready(encoder_forward(x, params))
    ref = jax.block_until_ready(encoder_reference(x, params))

    t_final = _conv_time_sizes(T)[-1]
    assert out.shape == (B, HIDDEN * t_final), out.shape
    assert bool(jnp.all(jnp.isfinite(out)))
    max_err = float(jnp.max(jnp.abs(out - ref)))
    assert max_err < 5e-2, max_err
    print("KERNEL_OK")
</pallas_src>

<mosaic_0001>
module attributes {stable_mosaic.version = 11 : i64} {
  func.func @encoder_kernel(%arg0: memref<128x256xbf16, #tpu.memory_space<vmem>>, %arg1: memref<128x256xbf16, #tpu.memory_space<vmem>>, %arg2: memref<3328x128xbf16, #tpu.memory_space<vmem>>, %arg3: memref<11x128xf32, #tpu.memory_space<vmem>>, %arg4: memref<2x1x128xf32, #tpu.memory_space<vmem>>, %arg5: memref<144x128xf32, #tpu.memory_space<vmem>>) attributes {dimension_semantics = [], scalar_prefetch = 0 : i64, scratch_operands = 1 : i64, tpu.core_type = #tpu.core_type<tc>} {
    %c0 = arith.constant 0 : index
    %c0_0 = arith.constant 0 : index
    %0 = vector.load %arg0[%c0, %c0_0] : memref<128x256xbf16, #tpu.memory_space<vmem>>, vector<128x256xbf16>
    %c0_1 = arith.constant 0 : index
    %c0_2 = arith.constant 0 : index
    %1 = vector.load %arg2[%c0_1, %c0_2] : memref<3328x128xbf16, #tpu.memory_space<vmem>>, vector<256x128xbf16>
    %cst = arith.constant dense<0.000000e+00> : vector<128x128xf32>
    %2 = tpu.matmul %0, %1, %cst {dimension_numbers = #tpu.dot_dimension_numbers<[1], [0], [0], [1], [0, 0, 1, 1], [], []>} : vector<128x256xbf16>, vector<256x128xbf16>, vector<128x128xf32> -> vector<128x128xf32>
    %c0_3 = arith.constant 0 : index
    %c0_4 = arith.constant 0 : index
    %3 = vector.load %arg3[%c0_3, %c0_4] : memref<11x128xf32, #tpu.memory_space<vmem>>, vector<1x128xf32>
    %4 = vector.broadcast %3 : vector<1x128xf32> to vector<128x128xf32>
    %5 = arith.addf %2, %4 : vector<128x128xf32>
    %cst_5 = arith.constant 0.000000e+00 : f32
    %6 = vector.broadcast %cst_5 : f32 to vector<128x128xf32>
    %7 = arith.cmpf ogt, %5, %6 : vector<128x128xf32>
    %cst_6 = arith.constant 2.000000e-01 : f32
    %8 = vector.broadcast %cst_6 : f32 to vector<128x128xf32>
    %9 = arith.mulf %8, %5 : vector<128x128xf32>
    %10 = arith.select %7, %5, %9 : vector<128x128xi1>, vector<128x128xf32>
    %11 = arith.truncf %10 : vector<128x128xf32> to vector<128x128xbf16>
    %c512 = arith.constant 512 : index
    %c0_7 = arith.constant 0 : index
    %12 = vector.load %arg2[%c512, %c0_7] : memref<3328x128xbf16, #tpu.memory_space<vmem>>, vector<128x128xbf16>
    %cst_8 = arith.constant dense<0.000000e+00> : vector<128x128xf32>
    %13 = tpu.matmul %11, %12, %cst_8 {dimension_numbers = #tpu.dot_dimension_numbers<[1], [0], [0], [1], [0, 0, 1, 1], [], []>} : vector<128x128xbf16>, vector<128x128xbf16>, vector<128x128xf32> -> vector<128x128xf32>
    %c1 = arith.constant 1 : index
    %c0_9 = arith.constant 0 : index
    %14 = vector.load %arg3[%c1, %c0_9] : memref<11x128xf32, #tpu.memory_space<vmem>>, vector<1x128xf32>
    %15 = vector.broadcast %14 : vector<1x128xf32> to vector<128x128xf32>
    %16 = arith.addf %13, %15 : vector<128x128xf32>
    %cst_10 = arith.constant 0.000000e+00 : f32
    %17 = vector.broadcast %cst_10 : f32 to vector<128x128xf32>
    %18 = arith.cmpf ogt, %16, %17 : vector<128x128xf32>
    %cst_11 = arith.constant 2.000000e-01 : f32
    %19 = vector.broadcast %cst_11 : f32 to vector<128x128xf32>
    %20 = arith.mulf %19, %16 : vector<128x128xf32>
    %21 = arith.select %18, %16, %20 : vector<128x128xi1>, vector<128x128xf32>
    %c0_12 = arith.constant 0 : index
    %c0_13 = arith.constant 0 : index
    %22 = vector.load %arg1[%c0_12, %c0_13] : memref<128x256xbf16, #tpu.memory_space<vmem>>, vector<128x256xbf16>
    %c256 = arith.constant 256 : index
    %c0_14 = arith.constant 0 : index
    %23 = vector.load %arg2[%c256, %c0_14] : memref<3328x128xbf16, #tpu.memory_space<vmem>>, vector<256x128xbf16>
    %cst_15 = arith.constant dense<0.000000e+00> : vector<128x128xf32>
    %24 = tpu.matmul %22, %23, %cst_15 {dimension_numbers = #tpu.dot_dimension_numbers<[1], [0], [0], [1], [0, 0, 1, 1], [], []>} : vector<128x256xbf16>, vector<256x128xbf16>, vector<128x128xf32> -> vector<128x128xf32>
    %c2 = arith.constant 2 : index
    %c0_16 = arith.constant 0 : index
    %25 = vector.load %arg3[%c2, %c0_16] : memref<11x128xf32, #tpu.memory_space<vmem>>, vector<1x128xf32>
    %26 = vector.broadcast %25 : vector<1x128xf32> to vector<128x128xf32>
    %27 = arith.addf %24, %26 : vector<128x128xf32>
    %cst_17 = arith.constant 0.000000e+00 : f32
    %28 = vector.broadcast %cst_17 : f32 to vector<128x128xf32>
    %29 = arith.cmpf ogt, %27, %28 : vector<128x128xf32>
    %cst_18 = arith.constant 2.000000e-01 : f32
    %30 = vector.broadcast %cst_18 : f32 to vector<128x128xf32>
    %31 = arith.mulf %30, %27 : vector<128x128xf32>
    %32 = arith.select %29, %27, %31 : vector<128x128xi1>, vector<128x128xf32>
    %33 = arith.truncf %32 : vector<128x128xf32> to vector<128x128xbf16>
    %c640 = arith.constant 640 : index
    %c0_19 = arith.constant 0 : index
    %34 = vector.load %arg2[%c640, %c0_19] : memref<3328x128xbf16, #tpu.memory_space<vmem>>, vector<128x128xbf16>
    %cst_20 = arith.constant dense<0.000000e+00> : vector<128x128xf32>
    %35 = tpu.matmul %33, %34, %cst_20 {dimension_numbers = #tpu.dot_dimension_numbers<[1], [0], [0], [1], [0, 0, 1, 1], [], []>} : vector<128x128xbf16>, vector<128x128xbf16>, vector<128x128xf32> -> vector<128x128xf32>
    %c3 = arith.constant 3 : index
    %c0_21 = arith.constant 0 : index
    %36 = vector.load %arg3[%c3, %c0_21] : memref<11x128xf32, #tpu.memory_space<vmem>>, vector<1x128xf32>
    %37 = vector.broadcast %36 : vector<1x128xf32> to vector<128x128xf32>
    %38 = arith.addf %35, %37 : vector<128x128xf32>
    %cst_22 = arith.constant 0.000000e+00 : f32
    %39 = vector.broadcast %cst_22 : f32 to vector<128x128xf32>
    %40 = arith.cmpf ogt, %38, %39 : vector<128x128xf32>
    %cst_23 = arith.constant 2.000000e-01 : f32
    %41 = vector.broadcast %cst_23 : f32 to vector<128x128xf32>
    %42 = arith.mulf %41, %38 : vector<128x128xf32>
    %43 = arith.select %40, %38, %42 : vector<128x128xi1>, vector<128x128xf32>
    %44 = tpu.concatenate %21, %43 in 1 : vector<128x128xf32>, vector<128x128xf32> -> vector<128x256xf32>
    %45 = arith.truncf %44 : vector<128x256xf32> to vector<128x256xbf16>
    %c768 = arith.constant 768 : index
    %c0_24 = arith.constant 0 : index
    %46 = vector.load %arg2[%c768, %c0_24] : memref<3328x128xbf16, #tpu.memory_space<vmem>>, vector<256x128xbf16>
    %cst_25 = arith.constant dense<0.000000e+00> : vector<128x128xf32>
    %47 = tpu.matmul %45, %46, %cst_25 {dimension_numbers = #tpu.dot_dimension_numbers<[1], [0], [0], [1], [0, 0, 1, 1], [], []>} : vector<128x256xbf16>, vector<256x128xbf16>, vector<128x128xf32> -> vector<128x128xf32>
    %c4 = arith.constant 4 : index
    %c0_26 = arith.constant 0 : index
    %48 = vector.load %arg3[%c4, %c0_26] : memref<11x128xf32, #tpu.memory_space<vmem>>, vector<1x128xf32>
    %49 = vector.broadcast %48 : vector<1x128xf32> to vector<128x128xf32>
    %50 = arith.addf %47, %49 : vector<128x128xf32>
    %cst_27 = arith.constant 0.000000e+00 : f32
    %51 = vector.broadcast %cst_27 : f32 to vector<1x128xf32>
    %c0_28 = arith.constant 0 : index
    %c0_29 = arith.constant 0 : index
    %52 = vector.load %arg5[%c0_28, %c0_29] : memref<144x128xf32, #tpu.memory_space<vmem>>, vector<1x128xf32>
    tpu.vector_store %arg5[%c0_28, %c0_29], %51 {strides = array<i32>} : memref<144x128xf32, #tpu.memory_space<vmem>>, vector<1x128xf32>,
    %53 = vector.extract_strided_slice %50 {offsets = [0, 0], sizes = [64, 128], strides = [1, 1]} : vector<128x128xf32> to vector<64x128xf32>
    %c1_30 = arith.constant 1 : index
    %c0_31 = arith.constant 0 : index
    %54 = vector.load %arg5[%c1_30, %c0_31] : memref<144x128xf32, #tpu.memory_space<vmem>>, vector<64x128xf32>
    tpu.vector_store %arg5[%c1_30, %c0_31], %53 {strides = array<i32>} : memref<144x128xf32, #tpu.memory_space<vmem>>, vector<64x128xf32>,
    %cst_32 = arith.constant 0.000000e+00 : f32
    %55 = vector.broadcast %cst_32 : f32 to vector<1x128xf32>
    %c72 = arith.constant 72 : index
    %c0_33 = arith.constant 0 : index
    %56 = vector.load %arg5[%c72, %c0_33] : memref<144x128xf32, #tpu.memory_space<vmem>>, vector<1x128xf32>
    tpu.vector_store %arg5[%c72, %c0_33], %55 {strides = array<i32>} : memref<144x128xf32, #tpu.memory_space<vmem>>, vector<1x128xf32>,
    %57 = vector.extract_strided_slice %50 {offsets = [64, 0], sizes = [64, 128], strides = [1, 1]} : vector<128x128xf32> to vector<64x128xf32>
    %c73 = arith.constant 73 : index
    %c0_34 = arith.constant 0 : index
    %58 = vector.load %arg5[%c73, %c0_34] : memref<144x128xf32, #tpu.memory_space<vmem>>, vector<64x128xf32>
    tpu.vector_store %arg5[%c73, %c0_34], %57 {strides = array<i32>} : memref<144x128xf32, #tpu.memory_space<vmem>>, vector<64x128xf32>,
    %c1024 = arith.constant 1024 : index
    %c0_35 = arith.constant 0 : index
    %59 = vector.load %arg2[%c1024, %c0_35] : memref<3328x128xbf16, #tpu.memory_space<vmem>>, vector<384x128xbf16>
    %c5 = arith.constant 5 : index
    %c0_36 = arith.constant 0 : index
    %60 = vector.load %arg3[%c5, %c0_36] : memref<11x128xf32, #tpu.memory_space<vmem>>, vector<1x128xf32>
    %c0_37 = arith.constant 0 : index
    %c0_38 = arith.constant 0 : index
    %61 = tpu.strided_load %arg5[%c0_37, %c0_38] {strides = array<i32: 2, 1>} : memref<144x128xf32, #tpu.memory_space<vmem>>, vector<32x128xf32>
    %c1_39 = arith.constant 1 : index
    %c0_40 = arith.constant 0 : index
    %62 = tpu.strided_load %arg5[%c1_39, %c0_40] {strides = array<i32: 2, 1>} : memref<144x128xf32, #tpu.memory_space<vmem>>, vector<32x128xf32>
    %c2_41 = arith.constant 2 : index
    %c0_42 = arith.constant 0 : index
    %63 = tpu.strided_load %arg5[%c2_41, %c0_42] {strides = array<i32: 2, 1>} : memref<144x128xf32, #tpu.memory_space<vmem>>, vector<32x128xf32>
    %64 = tpu.concatenate %61, %62, %63 in 1 : vector<32x128xf32>, vector<32x128xf32>, vector<32x128xf32> -> vector<32x384xf32>
    %65 = arith.truncf %64 : vector<32x384xf32> to vector<32x384xbf16>
    %cst_43 = arith.constant dense<0.000000e+00> : vector<32x128xf32>
    %66 = tpu.matmul %65, %59, %cst_43 {dimension_numbers = #tpu.dot_dimension_numbers<[1], [0], [0], [1], [0, 0, 1, 1], [], []>} : vector<32x384xbf16>, vector<384x128xbf16>, vector<32x128xf32> -> vector<32x128xf32>
    %67 = vector.broadcast %60 : vector<1x128xf32> to vector<32x128xf32>
    %68 = arith.addf %66, %67 : vector<32x128xf32>
    %cst_44 = arith.constant 0.000000e+00 : f32
    %69 = vector.broadcast %cst_44 : f32 to vector<32x128xf32>
    %70 = arith.cmpf ogt, %68, %69 : vector<32x128xf32>
    %cst_45 = arith.constant 2.000000e-01 : f32
    %71 = vector.broadcast %cst_45 : f32 to vector<32x128xf32>
    %72 = arith.mulf %71, %68 : vector<32x128xf32>
    %73 = arith.select %70, %68, %72 : vector<32x128xi1>, vector<32x128xf32>
    %c1_46 = arith.constant 1 : index
    %c0_47 = arith.constant 0 : index
    %74 = vector.load %arg5[%c1_46, %c0_47] : memref<144x128xf32, #tpu.memory_space<vmem>>, vector<32x128xf32>
    tpu.vector_store %arg5[%c1_46, %c0_47], %73 {strides = array<i32>} : memref<144x128xf32, #tpu.memory_space<vmem>>, vector<32x128xf32>,
    %c72_48 = arith.constant 72 : index
    %c0_49 = arith.constant 0 : index
    %75 = tpu.strided_load %arg5[%c72_48, %c0_49] {strides = array<i32: 2, 1>} : memref<144x128xf32, #tpu.memory_space<vmem>>, vector<32x128xf32>
    %c73_50 = arith.constant 73 : index
    %c0_51 = arith.constant 0 : index
    %76 = tpu.strided_load %arg5[%c73_50, %c0_51] {strides = array<i32: 2, 1>} : memref<144x128xf32, #tpu.memory_space<vmem>>, vector<32x128xf32>
    %c74 = arith.constant 74 : index
    %c0_52 = arith.constant 0 : index
    %77 = tpu.strided_load %arg5[%c74, %c0_52] {strides = array<i32: 2, 1>} : memref<144x128xf32, #tpu.memory_space<vmem>>, vector<32x128xf32>
    %78 = tpu.concatenate %75, %76, %77 in 1 : vector<32x128xf32>, vector<32x128xf32>, vector<32x128xf32> -> vector<32x384xf32>
    %79 = arith.truncf %78 : vector<32x384xf32> to vector<32x384xbf16>
    %cst_53 = arith.constant dense<0.000000e+00> : vector<32x128xf32>
    %80 = tpu.matmul %79, %59, %cst_53 {dimension_numbers = #tpu.dot_dimension_numbers<[1], [0], [0], [1], [0, 0, 1, 1], [], []>} : vector<32x384xbf16>, vector<384x128xbf16>, vector<32x128xf32> -> vector<32x128xf32>
    %81 = vector.broadcast %60 : vector<1x128xf32> to vector<32x128xf32>
    %82 = arith.addf %80, %81 : vector<32x128xf32>
    %cst_54 = arith.constant 0.000000e+00 : f32
    %83 = vector.broadcast %cst_54 : f32 to vector<32x128xf32>
    %84 = arith.cmpf ogt, %82, %83 : vector<32x128xf32>
    %cst_55 = arith.constant 2.000000e-01 : f32
    %85 = vector.broadcast %cst_55 : f32 to vector<32x128xf32>
    %86 = arith.mulf %85, %82 : vector<32x128xf32>
    %87 = arith.select %84, %82, %86 : vector<32x128xi1>, vector<32x128xf32>
    %c73_56 = arith.constant 73 : index
    %c0_57 = arith.constant 0 : index
    %88 = vector.load %arg5[%c73_56, %c0_57] : memref<144x128xf32, #tpu.memory_space<vmem>>, vector<32x128xf32>
    tpu.vector_store %arg5[%c73_56, %c0_57], %87 {strides = array<i32>} : memref<144x128xf32, #tpu.memory_space<vmem>>, vector<32x128xf32>,
    %c1408 = arith.constant 1408 : index
    %c0_58 = arith.constant 0 : index
    %89 = vector.load %arg2[%c1408, %c0_58] : memref<3328x128xbf16, #tpu.memory_space<vmem>>, vector<384x128xbf16>
    %c6 = arith.constant 6 : index
    %c0_59 = arith.constant 0 : index
    %90 = vector.load %arg3[%c6, %c0_59] : memref<11x128xf32, #tpu.memory_space<vmem>>, vector<1x128xf32>
    %c0_60 = arith.constant 0 : index
    %c0_61 = arith.constant 0 : index
    %91 = tpu.strided_load %arg5[%c0_60, %c0_61] {strides = array<i32: 2, 1>} : memref<144x128xf32, #tpu.memory_space<vmem>>, vector<16x128xf32>
    %c1_62 = arith.constant 1 : index
    %c0_63 = arith.constant 0 : index
    %92 = tpu.strided_load %arg5[%c1_62, %c0_63] {strides = array<i32: 2, 1>} : memref<144x128xf32, #tpu.memory_space<vmem>>, vector<16x128xf32>
    %c2_64 = arith.constant 2 : index
    %c0_65 = arith.constant 0 : index
    %93 = tpu.strided_load %arg5[%c2_64, %c0_65] {strides = array<i32: 2, 1>} : memref<144x128xf32, #tpu.memory_space<vmem>>, vector<16x128xf32>
    %94 = tpu.concatenate %91, %92, %93 in 1 : vector<16x128xf32>, vector<16x128xf32>, vector<16x128xf32> -> vector<16x384xf32>
    %95 = arith.truncf %94 : vector<16x384xf32> to vector<16x384xbf16>
    %cst_66 = arith.constant dense<0.000000e+00> : vector<16x128xf32>
    %96 = tpu.matmul %95, %89, %cst_66 {dimension_numbers = #tpu.dot_dimension_numbers<[1], [0], [0], [1], [0, 0, 1, 1], [], []>} : vector<16x384xbf16>, vector<384x128xbf16>, vector<16x128xf32> -> vector<16x128xf32>
    %97 = vector.broadcast %90 : vector<1x128xf32> to vector<16x128xf32>
    %98 = arith.addf %96, %97 : vector<16x128xf32>
    %cst_67 = arith.constant 0.000000e+00 : f32
    %99 = vector.broadcast %cst_67 : f32 to vector<16x128xf32>
    %100 = arith.cmpf ogt, %98, %99 : vector<16x128xf32>
    %cst_68 = arith.constant 2.000000e-01 : f32
    %101 = vector.broadcast %cst_68 : f32 to vector<16x128xf32>
    %102 = arith.mulf %101, %98 : vector<16x128xf32>
    %103 = arith.select %100, %98, %102 : vector<16x128xi1>, vector<16x128xf32>
    %c1_69 = arith.constant 1 : index
    %c0_70 = arith.constant 0 : index
    %104 = vector.load %arg5[%c1_69, %c0_70] : memref<144x128xf32, #tpu.memory_space<vmem>>, vector<16x128xf32>
    tpu.vector_store %arg5[%c1_69, %c0_70], %103 {strides = array<i32>} : memref<144x128xf32, #tpu.memory_space<vmem>>, vector<16x128xf32>,
    %c72_71 = arith.constant 72 : index
    %c0_72 = arith.constant 0 : index
    %105 = tpu.strided_load %arg5[%c72_71, %c0_72] {strides = array<i32: 2, 1>} : memref<144x128xf32, #tpu.memory_space<vmem>>, vector<16x128xf32>
    %c73_73 = arith.constant 73 : index
    %c0_74 = arith.constant 0 : index
    %106 = tpu.strided_load %arg5[%c73_73, %c0_74] {strides = array<i32: 2, 1>} : memref<144x128xf32, #tpu.memory_space<vmem>>, vector<16x128xf32>
    %c74_75 = arith.constant 74 : index
    %c0_76 = arith.constant 0 : index
    %107 = tpu.strided_load %arg5[%c74_75, %c0_76] {strides = array<i32: 2, 1>} : memref<144x128xf32, #tpu.memory_space<vmem>>, vector<16x128xf32>
    %108 = tpu.concatenate %105, %106, %107 in 1 : vector<16x128xf32>, vector<16x128xf32>, vector<16x128xf32> -> vector<16x384xf32>
    %109 = arith.truncf %108 : vector<16x384xf32> to vector<16x384xbf16>
    %cst_77 = arith.constant dense<0.000000e+00> : vector<16x128xf32>
    %110 = tpu.matmul %109, %89, %cst_77 {dimension_numbers = #tpu.dot_dimension_numbers<[1], [0], [0], [1], [0, 0, 1, 1], [], []>} : vector<16x384xbf16>, vector<384x128xbf16>, vector<16x128xf32> -> vector<16x128xf32>
    %111 = vector.broadcast %90 : vector<1x128xf32> to vector<16x128xf32>
    %112 = arith.addf %110, %111 : vector<16x128xf32>
    %cst_78 = arith.constant 0.000000e+00 : f32
    %113 = vector.broadcast %cst_78 : f32 to vector<16x128xf32>
    %114 = arith.cmpf ogt, %112, %113 : vector<16x128xf32>
    %cst_79 = arith.constant 2.000000e-01 : f32
    %115 = vector.broadcast %cst_79 : f32 to vector<16x128xf32>
    %116 = arith.mulf %115, %112 : vector<16x128xf32>
    %117 = arith.select %114, %112, %116 : vector<16x128xi1>, vector<16x128xf32>
    %c73_80 = arith.constant 73 : index
    %c0_81 = arith.constant 0 : index
    %118 = vector.load %arg5[%c73_80, %c0_81] : memref<144x128xf32, #tpu.memory_space<vmem>>, vector<16x128xf32>
    tpu.vector_store %arg5[%c73_80, %c0_81], %117 {strides = array<i32>} : memref<144x128xf32, #tpu.memory_space<vmem>>, vector<16x128xf32>,
    %c1792 = arith.constant 1792 : index
    %c0_82 = arith.constant 0 : index
    %119 = vector.load %arg2[%c1792, %c0_82] : memref<3328x128xbf16, #tpu.memory_space<vmem>>, vector<384x128xbf16>
    %c7 = arith.constant 7 : index
    %c0_83 = arith.constant 0 : index
    %120 = vector.load %arg3[%c7, %c0_83] : memref<11x128xf32, #tpu.memory_space<vmem>>, vector<1x128xf32>
    %c0_84 = arith.constant 0 : index
    %c0_85 = arith.constant 0 : index
    %121 = tpu.strided_load %arg5[%c0_84, %c0_85] {strides = array<i32: 2, 1>} : memref<144x128xf32, #tpu.memory_space<vmem>>, vector<8x128xf32>
    %c1_86 = arith.constant 1 : index
    %c0_87 = arith.constant 0 : index
    %122 = tpu.strided_load %arg5[%c1_86, %c0_87] {strides = array<i32: 2, 1>} : memref<144x128xf32, #tpu.memory_space<vmem>>, vector<8x128xf32>
    %c2_88 = arith.constant 2 : index
    %c0_89 = arith.constant 0 : index
    %123 = tpu.strided_load %arg5[%c2_88, %c0_89] {strides = array<i32: 2, 1>} : memref<144x128xf32, #tpu.memory_space<vmem>>, vector<8x128xf32>
    %124 = tpu.concatenate %121, %122, %123 in 1 : vector<8x128xf32>, vector<8x128xf32>, vector<8x128xf32> -> vector<8x384xf32>
    %125 = arith.truncf %124 : vector<8x384xf32> to vector<8x384xbf16>
    %cst_90 = arith.constant dense<0.000000e+00> : vector<8x128xf32>
    %126 = tpu.matmul %125, %119, %cst_90 {dimension_numbers = #tpu.dot_dimension_numbers<[1], [0], [0], [1], [0, 0, 1, 1], [], []>} : vector<8x384xbf16>, vector<384x128xbf16>, vector<8x128xf32> -> vector<8x128xf32>
    %127 = vector.broadcast %120 : vector<1x128xf32> to vector<8x128xf32>
    %128 = arith.addf %126, %127 : vector<8x128xf32>
    %cst_91 = arith.constant 0.000000e+00 : f32
    %129 = vector.broadcast %cst_91 : f32 to vector<8x128xf32>
    %130 = arith.cmpf ogt, %128, %129 : vector<8x128xf32>
    %cst_92 = arith.constant 2.000000e-01 : f32
    %131 = vector.broadcast %cst_92 : f32 to vector<8x128xf32>
    %132 = arith.mulf %131, %128 : vector<8x128xf32>
    %133 = arith.select %130, %128, %132 : vector<8x128xi1>, vector<8x128xf32>
    %c1_93 = arith.constant 1 : index
    %c0_94 = arith.constant 0 : index
    %134 = vector.load %arg5[%c1_93, %c0_94] : memref<144x128xf32, #tpu.memory_space<vmem>>, vector<8x128xf32>
    tpu.vector_store %arg5[%c1_93, %c0_94], %133 {strides = array<i32>} : memref<144x128xf32, #tpu.memory_space<vmem>>, vector<8x128xf32>,
    %c72_95 = arith.constant 72 : index
    %c0_96 = arith.constant 0 : index
    %135 = tpu.strided_load %arg5[%c72_95, %c0_96] {strides = array<i32: 2, 1>} : memref<144x128xf32, #tpu.memory_space<vmem>>, vector<8x128xf32>
    %c73_97 = arith.constant 73 : index
    %c0_98 = arith.constant 0 : index
    %136 = tpu.strided_load %arg5[%c73_97, %c0_98] {strides = array<i32: 2, 1>} : memref<144x128xf32, #tpu.memory_space<vmem>>, vector<8x128xf32>
    %c74_99 = arith.constant 74 : index
    %c0_100 = arith.constant 0 : index
    %137 = tpu.strided_load %arg5[%c74_99, %c0_100] {strides = array<i32: 2, 1>} : memref<144x128xf32, #tpu.memory_space<vmem>>, vector<8x128xf32>
    %138 = tpu.concatenate %135, %136, %137 in 1 : vector<8x128xf32>, vector<8x128xf32>, vector<8x128xf32> -> vector<8x384xf32>
    %139 = arith.truncf %138 : vector<8x384xf32> to vector<8x384xbf16>
    %cst_101 = arith.constant dense<0.000000e+00> : vector<8x128xf32>
    %140 = tpu.matmul %139, %119, %cst_101 {dimension_numbers = #tpu.dot_dimension_numbers<[1], [0], [0], [1], [0, 0, 1, 1], [], []>} : vector<8x384xbf16>, vector<384x128xbf16>, vector<8x128xf32> -> vector<8x128xf32>
    %141 = vector.broadcast %120 : vector<1x128xf32> to vector<8x128xf32>
    %142 = arith.addf %140, %141 : vector<8x128xf32>
    %cst_102 = arith.constant 0.000000e+00 : f32
    %143 = vector.broadcast %cst_102 : f32 to vector<8x128xf32>
    %144 = arith.cmpf ogt, %142, %143 : vector<8x128xf32>
    %cst_103 = arith.constant 2.000000e-01 : f32
    %145 = vector.broadcast %cst_103 : f32 to vector<8x128xf32>
    %146 = arith.mulf %145, %142 : vector<8x128xf32>
    %147 = arith.select %144, %142, %146 : vector<8x128xi1>, vector<8x128xf32>
    %c73_104 = arith.constant 73 : index
    %c0_105 = arith.constant 0 : index
    %148 = vector.load %arg5[%c73_104, %c0_105] : memref<144x128xf32, #tpu.memory_space<vmem>>, vector<8x128xf32>
    tpu.vector_store %arg5[%c73_104, %c0_105], %147 {strides = array<i32>} : memref<144x128xf32, #tpu.memory_space<vmem>>, vector<8x128xf32>,
    %c2176 = arith.constant 2176 : index
    %c0_106 = arith.constant 0 : index
    %149 = vector.load %arg2[%c2176, %c0_106] : memref<3328x128xbf16, #tpu.memory_space<vmem>>, vector<384x128xbf16>
    %c8 = arith.constant 8 : index
    %c0_107 = arith.constant 0 : index
    %150 = vector.load %arg3[%c8, %c0_107] : memref<11x128xf32, #tpu.memory_space<vmem>>, vector<1x128xf32>
    %c0_108 = arith.constant 0 : index
    %c0_109 = arith.constant 0 : index
    %151 = tpu.strided_load %arg5[%c0_108, %c0_109] {strides = array<i32: 2, 1>} : memref<144x128xf32, #tpu.memory_space<vmem>>, vector<4x128xf32>
    %c1_110 = arith.constant 1 : index
    %c0_111 = arith.constant 0 : index
    %152 = tpu.strided_load %arg5[%c1_110, %c0_111] {strides = array<i32: 2, 1>} : memref<144x128xf32, #tpu.memory_space<vmem>>, vector<4x128xf32>
    %c2_112 = arith.constant 2 : index
    %c0_113 = arith.constant 0 : index
    %153 = tpu.strided_load %arg5[%c2_112, %c0_113] {strides = array<i32: 2, 1>} : memref<144x128xf32, #tpu.memory_space<vmem>>, vector<4x128xf32>
    %154 = tpu.concatenate %151, %152, %153 in 1 : vector<4x128xf32>, vector<4x128xf32>, vector<4x128xf32> -> vector<4x384xf32>
    %155 = arith.truncf %154 : vector<4x384xf32> to vector<4x384xbf16>
    %cst_114 = arith.constant dense<0.000000e+00> : vector<4x128xf32>
    %156 = tpu.matmul %155, %149, %cst_114 {dimension_numbers = #tpu.dot_dimension_numbers<[1], [0], [0], [1], [0, 0, 1, 1], [], []>} : vector<4x384xbf16>, vector<384x128xbf16>, vector<4x128xf32> -> vector<4x128xf32>
    %157 = vector.broadcast %150 : vector<1x128xf32> to vector<4x128xf32>
    %158 = arith.addf %156, %157 : vector<4x128xf32>
    %cst_115 = arith.constant 0.000000e+00 : f32
    %159 = vector.broadcast %cst_115 : f32 to vector<4x128xf32>
    %160 = arith.cmpf ogt, %158, %159 : vector<4x128xf32>
    %cst_116 = arith.constant 2.000000e-01 : f32
    %161 = vector.broadcast %cst_116 : f32 to vector<4x128xf32>
    %162 = arith.mulf %161, %158 : vector<4x128xf32>
    %163 = arith.select %160, %158, %162 : vector<4x128xi1>, vector<4x128xf32>
    %c1_117 = arith.constant 1 : index
    %c0_118 = arith.constant 0 : index
    %164 = vector.load %arg5[%c1_117, %c0_118] : memref<144x128xf32, #tpu.memory_space<vmem>>, vector<4x128xf32>
    tpu.vector_store %arg5[%c1_117, %c0_118], %163 {strides = array<i32>} : memref<144x128xf32, #tpu.memory_space<vmem>>, vector<4x128xf32>,
    %c72_119 = arith.constant 72 : index
    %c0_120 = arith.constant 0 : index
    %165 = tpu.strided_load %arg5[%c72_119, %c0_120] {strides = array<i32: 2, 1>} : memref<144x128xf32, #tpu.memory_space<vmem>>, vector<4x128xf32>
    %c73_121 = arith.constant 73 : index
    %c0_122 = arith.constant 0 : index
    %166 = tpu.strided_load %arg5[%c73_121, %c0_122] {strides = array<i32: 2, 1>} : memref<144x128xf32, #tpu.memory_space<vmem>>, vector<4x128xf32>
    %c74_123 = arith.constant 74 : index
    %c0_124 = arith.constant 0 : index
    %167 = tpu.strided_load %arg5[%c74_123, %c0_124] {strides = array<i32: 2, 1>} : memref<144x128xf32, #tpu.memory_space<vmem>>, vector<4x128xf32>
    %168 = tpu.concatenate %165, %166, %167 in 1 : vector<4x128xf32>, vector<4x128xf32>, vector<4x128xf32> -> vector<4x384xf32>
    %169 = arith.truncf %168 : vector<4x384xf32> to vector<4x384xbf16>
    %cst_125 = arith.constant dense<0.000000e+00> : vector<4x128xf32>
    %170 = tpu.matmul %169, %149, %cst_125 {dimension_numbers = #tpu.dot_dimension_numbers<[1], [0], [0], [1], [0, 0, 1, 1], [], []>} : vector<4x384xbf16>, vector<384x128xbf16>, vector<4x128xf32> -> vector<4x128xf32>
    %171 = vector.broadcast %150 : vector<1x128xf32> to vector<4x128xf32>
    %172 = arith.addf %170, %171 : vector<4x128xf32>
    %cst_126 = arith.constant 0.000000e+00 : f32
    %173 = vector.broadcast %cst_126 : f32 to vector<4x128xf32>
    %174 = arith.cmpf ogt, %172, %173 : vector<4x128xf32>
    %cst_127 = arith.constant 2.000000e-01 : f32
    %175 = vector.broadcast %cst_127 : f32 to vector<4x128xf32>
    %176 = arith.mulf %175, %172 : vector<4x128xf32>
    %177 = arith.select %174, %172, %176 : vector<4x128xi1>, vector<4x128xf32>
    %c73_128 = arith.constant 73 : index
    %c0_129 = arith.constant 0 : index
    %178 = vector.load %arg5[%c73_128, %c0_129] : memref<144x128xf32, #tpu.memory_space<vmem>>, vector<4x128xf32>
    tpu.vector_store %arg5[%c73_128, %c0_129], %177 {strides = array<i32>} : memref<144x128xf32, #tpu.memory_space<vmem>>, vector<4x128xf32>,
    %c2560 = arith.constant 2560 : index
    %c0_130 = arith.constant 0 : index
    %179 = vector.load %arg2[%c2560, %c0_130] : memref<3328x128xbf16, #tpu.memory_space<vmem>>, vector<384x128xbf16>
    %c9 = arith.constant 9 : index
    %c0_131 = arith.constant 0 : index
    %180 = vector.load %arg3[%c9, %c0_131] : memref<11x128xf32, #tpu.memory_space<vmem>>, vector<1x128xf32>
    %c0_132 = arith.constant 0 : index
    %c0_133 = arith.constant 0 : index
    %181 = tpu.strided_load %arg5[%c0_132, %c0_133] {strides = array<i32: 2, 1>} : memref<144x128xf32, #tpu.memory_space<vmem>>, vector<2x128xf32>
    %c1_134 = arith.constant 1 : index
    %c0_135 = arith.constant 0 : index
    %182 = tpu.strided_load %arg5[%c1_134, %c0_135] {strides = array<i32: 2, 1>} : memref<144x128xf32, #tpu.memory_space<vmem>>, vector<2x128xf32>
    %c2_136 = arith.constant 2 : index
    %c0_137 = arith.constant 0 : index
    %183 = tpu.strided_load %arg5[%c2_136, %c0_137] {strides = array<i32: 2, 1>} : memref<144x128xf32, #tpu.memory_space<vmem>>, vector<2x128xf32>
    %184 = tpu.concatenate %181, %182, %183 in 1 : vector<2x128xf32>, vector<2x128xf32>, vector<2x128xf32> -> vector<2x384xf32>
    %185 = arith.truncf %184 : vector<2x384xf32> to vector<2x384xbf16>
    %cst_138 = arith.constant dense<0.000000e+00> : vector<2x128xf32>
    %186 = tpu.matmul %185, %179, %cst_138 {dimension_numbers = #tpu.dot_dimension_numbers<[1], [0], [0], [1], [0, 0, 1, 1], [], []>} : vector<2x384xbf16>, vector<384x128xbf16>, vector<2x128xf32> -> vector<2x128xf32>
    %187 = vector.broadcast %180 : vector<1x128xf32> to vector<2x128xf32>
    %188 = arith.addf %186, %187 : vector<2x128xf32>
    %cst_139 = arith.constant 0.000000e+00 : f32
    %189 = vector.broadcast %cst_139 : f32 to vector<2x128xf32>
    %190 = arith.cmpf ogt, %188, %189 : vector<2x128xf32>
    %cst_140 = arith.constant 2.000000e-01 : f32
    %191 = vector.broadcast %cst_140 : f32 to vector<2x128xf32>
    %192 = arith.mulf %191, %188 : vector<2x128xf32>
    %193 = arith.select %190, %188, %192 : vector<2x128xi1>, vector<2x128xf32>
    %c1_141 = arith.constant 1 : index
    %c0_142 = arith.constant 0 : index
    %194 = vector.load %arg5[%c1_141, %c0_142] : memref<144x128xf32, #tpu.memory_space<vmem>>, vector<2x128xf32>
    tpu.vector_store %arg5[%c1_141, %c0_142], %193 {strides = array<i32>} : memref<144x128xf32, #tpu.memory_space<vmem>>, vector<2x128xf32>,
    %c72_143 = arith.constant 72 : index
    %c0_144 = arith.constant 0 : index
    %195 = tpu.strided_load %arg5[%c72_143, %c0_144] {strides = array<i32: 2, 1>} : memref<144x128xf32, #tpu.memory_space<vmem>>, vector<2x128xf32>
    %c73_145 = arith.constant 73 : index
    %c0_146 = arith.constant 0 : index
    %196 = tpu.strided_load %arg5[%c73_145, %c0_146] {strides = array<i32: 2, 1>} : memref<144x128xf32, #tpu.memory_space<vmem>>, vector<2x128xf32>
    %c74_147 = arith.constant 74 : index
    %c0_148 = arith.constant 0 : index
    %197 = tpu.strided_load %arg5[%c74_147, %c0_148] {strides = array<i32: 2, 1>} : memref<144x128xf32, #tpu.memory_space<vmem>>, vector<2x128xf32>
    %198 = tpu.concatenate %195, %196, %197 in 1 : vector<2x128xf32>, vector<2x128xf32>, vector<2x128xf32> -> vector<2x384xf32>
    %199 = arith.truncf %198 : vector<2x384xf32> to vector<2x384xbf16>
    %cst_149 = arith.constant dense<0.000000e+00> : vector<2x128xf32>
    %200 = tpu.matmul %199, %179, %cst_149 {dimension_numbers = #tpu.dot_dimension_numbers<[1], [0], [0], [1], [0, 0, 1, 1], [], []>} : vector<2x384xbf16>, vector<384x128xbf16>, vector<2x128xf32> -> vector<2x128xf32>
    %201 = vector.broadcast %180 : vector<1x128xf32> to vector<2x128xf32>
    %202 = arith.addf %200, %201 : vector<2x128xf32>
    %cst_150 = arith.constant 0.000000e+00 : f32
    %203 = vector.broadcast %cst_150 : f32 to vector<2x128xf32>
    %204 = arith.cmpf ogt, %202, %203 : vector<2x128xf32>
    %cst_151 = arith.constant 2.000000e-01 : f32
    %205 = vector.broadcast %cst_151 : f32 to vector<2x128xf32>
    %206 = arith.mulf %205, %202 : vector<2x128xf32>
    %207 = arith.select %204, %202, %206 : vector<2x128xi1>, vector<2x128xf32>
    %c73_152 = arith.constant 73 : index
    %c0_153 = arith.constant 0 : index
    %208 = vector.load %arg5[%c73_152, %c0_153] : memref<144x128xf32, #tpu.memory_space<vmem>>, vector<2x128xf32>
    tpu.vector_store %arg5[%c73_152, %c0_153], %207 {strides = array<i32>} : memref<144x128xf32, #tpu.memory_space<vmem>>, vector<2x128xf32>,
    %c2944 = arith.constant 2944 : index
    %c0_154 = arith.constant 0 : index
    %209 = vector.load %arg2[%c2944, %c0_154] : memref<3328x128xbf16, #tpu.memory_space<vmem>>, vector<256x128xbf16>
    %c10 = arith.constant 10 : index
    %c0_155 = arith.constant 0 : index
    %210 = vector.load %arg3[%c10, %c0_155] : memref<11x128xf32, #tpu.memory_space<vmem>>, vector<1x128xf32>
    %c1_156 = arith.constant 1 : index
    %c0_157 = arith.constant 0 : index
    %211 = tpu.strided_load %arg5[%c1_156, %c0_157] {strides = array<i32: 2, 1>} : memref<144x128xf32, #tpu.memory_space<vmem>>, vector<1x128xf32>
    %c2_158 = arith.constant 2 : index
    %c0_159 = arith.constant 0 : index
    %212 = tpu.strided_load %arg5[%c2_158, %c0_159] {strides = array<i32: 2, 1>} : memref<144x128xf32, #tpu.memory_space<vmem>>, vector<1x128xf32>
    %213 = tpu.concatenate %211, %212 in 1 : vector<1x128xf32>, vector<1x128xf32> -> vector<1x256xf32>
    %214 = arith.truncf %213 : vector<1x256xf32> to vector<1x256xbf16>
    %cst_160 = arith.constant dense<0.000000e+00> : vector<1x128xf32>
    %215 = tpu.matmul %214, %209, %cst_160 {dimension_numbers = #tpu.dot_dimension_numbers<[1], [0], [0], [1], [0, 0, 1, 1], [], []>} : vector<1x256xbf16>, vector<256x128xbf16>, vector<1x128xf32> -> vector<1x128xf32>
    %216 = arith.addf %215, %210 : vector<1x128xf32>
    %c0_161 = arith.constant 0 : index
    %c0_162 = arith.constant 0 : index
    %c0_163 = arith.constant 0 : index
    %217 = vector.load %arg4[%c0_161, %c0_162, %c0_163] : memref<2x1x128xf32, #tpu.memory_space<vmem>>, vector<1x1x128xf32>
    %218 = vector.shape_cast %217 : vector<1x1x128xf32> to vector<1x128xf32>
    %219 = vector.shape_cast %216 : vector<1x128xf32> to vector<1x1x128xf32>
    tpu.vector_store %arg4[%c0_161, %c0_162, %c0_163], %219 {strides = array<i32>} : memref<2x1x128xf32, #tpu.memory_space<vmem>>, vector<1x1x128xf32>,
    %c73_164 = arith.constant 73 : index
    %c0_165 = arith.constant 0 : index
    %220 = tpu.strided_load %arg5[%c73_164, %c0_165] {strides = array<i32: 2, 1>} : memref<144x128xf32, #tpu.memory_space<vmem>>, vector<1x128xf32>
    %c74_166 = arith.constant 74 : index
    %c0_167 = arith.constant 0 : index
    %221 = tpu.strided_load %arg5[%c74_166, %c0_167] {strides = array<i32: 2, 1>} : memref<144x128xf32, #tpu.memory_space<vmem>>, vector<1x128xf32>
    %222 = tpu.concatenate %220, %221 in 1 : vector<1x128xf32>, vector<1x128xf32> -> vector<1x256xf32>
    %223 = arith.truncf %222 : vector<1x256xf32> to vector<1x256xbf16>
    %cst_168 = arith.constant dense<0.000000e+00> : vector<1x128xf32>
    %224 = tpu.matmul %223, %209, %cst_168 {dimension_numbers = #tpu.dot_dimension_numbers<[1], [0], [0], [1], [0, 0, 1, 1], [], []>} : vector<1x256xbf16>, vector<256x128xbf16>, vector<1x128xf32> -> vector<1x128xf32>
    %225 = arith.addf %224, %210 : vector<1x128xf32>
    %c1_169 = arith.constant 1 : index
    %c0_170 = arith.constant 0 : index
    %c0_171 = arith.constant 0 : index
    %226 = vector.load %arg4[%c1_169, %c0_170, %c0_171] : memref<2x1x128xf32, #tpu.memory_space<vmem>>, vector<1x1x128xf32>
    %227 = vector.shape_cast %226 : vector<1x1x128xf32> to vector<1x128xf32>
    %228 = vector.shape_cast %225 : vector<1x128xf32> to vector<1x1x128xf32>
    tpu.vector_store %arg4[%c1_169, %c0_170, %c0_171], %228 {strides = array<i32>} : memref<2x1x128xf32, #tpu.memory_space<vmem>>, vector<1x1x128xf32>,
    return
  }
}

</mosaic_0001>

<llo_original>
// kernel: encoder_forward.1
$region0: #{encoder_forward.1}
  #allocation0 [shape = 'u32[]', space=smem, size = 0x4, offset = 0x4, fixed_abs, tag = 'smem constant byte address 0x4 - core index']
  #allocation1 [shape = 'u32[72,128]{1,0:T(1,128)}', space=vmem, size = 0x9000, scoped, tag = 'internal scratch']
  #allocation2 [shape = 'f32[144,128]{1,0:T(8,128)}', space=vmem, size = 0x12000, scoped, tag = 'scratch operand']
  %s0 = inlined_call_operand.vmem [shape: bf16[128,256], index: 0, kind: input, shape index: {}]
  %s1 = inlined_call_operand.vmem [shape: bf16[128,256], index: 1, kind: input, shape index: {}]
  %s2 = inlined_call_operand.vmem [shape: bf16[3328,128], index: 2, kind: input, shape index: {}]
  %s3 = inlined_call_operand.vmem [shape: f32[11,128], index: 3, kind: input, shape index: {}]
  %s4 = inlined_call_operand.hbm [shape: f32[2,1,128], index: 4, kind: output, shape index: {}]
  %s5 = sld [smem:[#allocation0]]
  $region26: #{encoder_forward.1} parent=0
    _
  %s7 = ssub.s32 1, %s5
  %s8 = scalar_select 0, %s7, %s5
  $region1: #{encoder_forward.1} parent=0
    #allocation3 [shape = 'u8[1024]{0}', space=vmem, size = 0x400, scoped, tag = 'output window, operand 0, single buffered']
    #allocation4 [shape = 's32[1]{0}', space=sflag, size = 0x4, scoped, tag = 'scoped memory for encoder_forward.1']
    %9 = vsyncpa [#allocation4], 0
    // Predicated region
    $region2: #{encoder_forward.1} parent=1 // pred_check
      _
    $region3: #{encoder_forward.1} parent=1 // pred_check_branch
      %11 = sbr.rel (0) target = $region5
    $region4: #{encoder_forward.1} parent=1 // pred_region
      _
    $region5: #{encoder_forward.1} parent=1 // pred_fallthru
      _
    // Predicated region
    $region6: #{encoder_forward.1} parent=1 // pred_check
      _
    $region7: #{encoder_forward.1} parent=1 // pred_check_branch
      %13 = sbr.rel (0) target = $region9
    $region8: #{encoder_forward.1} parent=1 // pred_region
      _
    $region9: #{encoder_forward.1} parent=1 // pred_fallthru
      _
    // Predicated region
    $region10: #{encoder_forward.1} parent=1 // pred_check
      _
    $region11: #{encoder_forward.1} parent=1 // pred_check_branch
      %15 = sbr.rel (0) target = $region13
    $region12: #{encoder_forward.1} parent=1 // pred_region
      _
    $region13: #{encoder_forward.1} parent=1 // pred_fallthru
      _
    // Predicated region
    $region14: #{encoder_forward.1} parent=1 // pred_check
      _
    $region15: #{encoder_forward.1} parent=1 // pred_check_branch
      %17 = sbr.rel (0) target = $region17
    $region16: #{encoder_forward.1} parent=1 // pred_region
      _
    $region17: #{encoder_forward.1} parent=1 // pred_fallthru
      _
    %v18 = vld [vmem:[%s0] sm:$0xff]
    %v19 = vld [vmem:[%s0 + $0x8] sm:$0xff]
    %v20 = vld [vmem:[%s0 + $0x10] sm:$0xff]
    %v21 = vld [vmem:[%s0 + $0x18] sm:$0xff]
    %v22 = vld [vmem:[%s0 + $0x20] sm:$0xff]
    %v23 = vld [vmem:[%s0 + $0x28] sm:$0xff]
    %v24 = vld [vmem:[%s0 + $0x30] sm:$0xff]
    %v25 = vld [vmem:[%s0 + $0x38] sm:$0xff]
    %v26 = vld [vmem:[%s0 + $0x40] sm:$0xff]
    %v27 = vld [vmem:[%s0 + $0x48] sm:$0xff]
    %v28 = vld [vmem:[%s0 + $0x50] sm:$0xff]
    %v29 = vld [vmem:[%s0 + $0x58] sm:$0xff]
    %v30 = vld [vmem:[%s0 + $0x60] sm:$0xff]
    %v31 = vld [vmem:[%s0 + $0x68] sm:$0xff]
    %v32 = vld [vmem:[%s0 + $0x70] sm:$0xff]
    %v33 = vld [vmem:[%s0 + $0x78] sm:$0xff]
    %v34 = vld [vmem:[%s2] sm:$0xf]
    %v35 = vld [vmem:[%s2 + $0x4] sm:$0xf]
    %v36 = vld [vmem:[%s2 + $0x8] sm:$0xf]
    %v37 = vld [vmem:[%s2 + $0xc] sm:$0xf]
    %v38 = vld [vmem:[%s2 + $0x10] sm:$0xf]
    %v39 = vld [vmem:[%s2 + $0x14] sm:$0xf]
    %v40 = vld [vmem:[%s2 + $0x18] sm:$0xf]
    %v41 = vld [vmem:[%s2 + $0x1c] sm:$0xf]
    %v42 = vld [vmem:[%s2 + $0x20] sm:$0xf]
    %v43 = vld [vmem:[%s2 + $0x24] sm:$0xf]
    %v44 = vld [vmem:[%s2 + $0x28] sm:$0xf]
    %v45 = vld [vmem:[%s2 + $0x2c] sm:$0xf]
    %v46 = vld [vmem:[%s2 + $0x30] sm:$0xf]
    %v47 = vld [vmem:[%s2 + $0x34] sm:$0xf]
    %v48 = vld [vmem:[%s2 + $0x38] sm:$0xf]
    %v49 = vld [vmem:[%s2 + $0x3c] sm:$0xf]
    %v50 = vld [vmem:[%s2 + $0x40] sm:$0xf]
    %v51 = vld [vmem:[%s2 + $0x44] sm:$0xf]
    %v52 = vld [vmem:[%s2 + $0x48] sm:$0xf]
    %v53 = vld [vmem:[%s2 + $0x4c] sm:$0xf]
    %v54 = vld [vmem:[%s2 + $0x50] sm:$0xf]
    %v55 = vld [vmem:[%s2 + $0x54] sm:$0xf]
    %v56 = vld [vmem:[%s2 + $0x58] sm:$0xf]
    %v57 = vld [vmem:[%s2 + $0x5c] sm:$0xf]
    %v58 = vld [vmem:[%s2 + $0x60] sm:$0xf]
    %v59 = vld [vmem:[%s2 + $0x64] sm:$0xf]
    %v60 = vld [vmem:[%s2 + $0x68] sm:$0xf]
    %v61 = vld [vmem:[%s2 + $0x6c] sm:$0xf]
    %v62 = vld [vmem:[%s2 + $0x70] sm:$0xf]
    %v63 = vld [vmem:[%s2 + $0x74] sm:$0xf]
    %v64 = vld [vmem:[%s2 + $0x78] sm:$0xf]
    %v65 = vld [vmem:[%s2 + $0x7c] sm:$0xf]
    %v66 = vld [vmem:[%s3] sm:$0x1]
    %v67 = vperm.slane %v66, 0
    %v84 = vunpack.c.l.b16 %v18
    %v85 = vunpack.c.h.b16 %v18
    %v86 = vunpack.c.l.b16 %v19
    %v87 = vunpack.c.h.b16 %v19
    %v88 = vunpack.c.l.b16 %v20
    %v89 = vunpack.c.h.b16 %v20
    %v90 = vunpack.c.l.b16 %v21
    %v91 = vunpack.c.h.b16 %v21
    %v92 = vunpack.c.l.b16 %v22
    %v93 = vunpack.c.h.b16 %v22
    %v94 = vunpack.c.l.b16 %v23
    %v95 = vunpack.c.h.b16 %v23
    %v96 = vunpack.c.l.b16 %v24
    %v97 = vunpack.c.h.b16 %v24
    %v98 = vunpack.c.l.b16 %v25
    %v99 = vunpack.c.h.b16 %v25
    %v100 = vunpack.c.l.b16 %v26
    %v101 = vunpack.c.h.b16 %v26
    %v102 = vunpack.c.l.b16 %v27
    %v103 = vunpack.c.h.b16 %v27
    %v104 = vunpack.c.l.b16 %v28
    %v105 = vunpack.c.h.b16 %v28
    %v106 = vunpack.c.l.b16 %v29
    %v107 = vunpack.c.h.b16 %v29
    %v108 = vunpack.c.l.b16 %v30
    %v109 = vunpack.c.h.b16 %v30
    %v110 = vunpack.c.l.b16 %v31
    %v111 = vunpack.c.h.b16 %v31
    %v112 = vunpack.c.l.b16 %v32
    %v113 = vunpack.c.h.b16 %v32
    %v114 = vunpack.c.l.b16 %v33
    %v115 = vunpack.c.h.b16 %v33
    %v116 = vpack.c.b16 %v86, %v84
    %v117 = vpack.c.b16 %v87, %v85
    %v118 = vpack.c.b16 %v90, %v88
    %v119 = vpack.c.b16 %v91, %v89
    %v120 = vpack.c.b16 %v94, %v92
    %v121 = vpack.c.b16 %v95, %v93
    %v122 = vpack.c.b16 %v98, %v96
    %v123 = vpack.c.b16 %v99, %v97
    %v124 = vpack.c.b16 %v102, %v100
    %v125 = vpack.c.b16 %v103, %v101
    %v126 = vpack.c.b16 %v106, %v104
    %v127 = vpack.c.b16 %v107, %v105
    %v128 = vpack.c.b16 %v110, %v108
    %v129 = vpack.c.b16 %v111, %v109
    %v130 = vpack.c.b16 %v114, %v112
    %v131 = vpack.c.b16 %v115, %v113
    %v180 = vunpack.c.l.b16 %v34
    %v181 = vunpack.c.l.b16 %v35
    %v182 = vunpack.c.l.b16 %v36
    %v183 = vunpack.c.l.b16 %v37
    %v184 = vunpack.c.l.b16 %v38
    %v185 = vunpack.c.l.b16 %v39
    %v186 = vunpack.c.l.b16 %v40
    %v187 = vunpack.c.l.b16 %v41
    %v188 = vunpack.c.l.b16 %v42
    %v189 = vunpack.c.l.b16 %v43
    %v190 = vunpack.c.l.b16 %v44
    %v191 = vunpack.c.l.b16 %v45
    %v192 = vunpack.c.l.b16 %v46
    %v193 = vunpack.c.l.b16 %v47
    %v194 = vunpack.c.l.b16 %v48
    %v195 = vunpack.c.l.b16 %v49
    %v196 = vunpack.c.l.b16 %v50
    %v197 = vunpack.c.l.b16 %v51
    %v198 = vunpack.c.l.b16 %v52
    %v199 = vunpack.c.l.b16 %v53
    %v200 = vunpack.c.l.b16 %v54
    %v201 = vunpack.c.l.b16 %v55
    %v202 = vunpack.c.l.b16 %v56
    %v203 = vunpack.c.l.b16 %v57
    %v204 = vunpack.c.l.b16 %v58
    %v205 = vunpack.c.l.b16 %v59
    %v206 = vunpack.c.l.b16 %v60
    %v207 = vunpack.c.l.b16 %v61
    %v208 = vunpack.c.l.b16 %v62
    %v209 = vunpack.c.l.b16 %v63
    %v210 = vunpack.c.l.b16 %v64
    %v211 = vunpack.c.l.b16 %v65
    %v212 = vpack.c.b16 %v181, %v180
    %v213 = vpack.c.b16 %v183, %v182
    %v214 = vpack.c.b16 %v185, %v184
    %v215 = vpack.c.b16 %v187, %v186
    %v216 = vpack.c.b16 %v189, %v188
    %v217 = vpack.c.b16 %v191, %v190
    %v218 = vpack.c.b16 %v193, %v192
    %v219 = vpack.c.b16 %v195, %v194
    %v220 = vpack.c.b16 %v197, %v196
    %v221 = vpack.c.b16 %v199, %v198
    %v222 = vpack.c.b16 %v201, %v200
    %v223 = vpack.c.b16 %v203, %v202
    %v224 = vpack.c.b16 %v205, %v204
    %v225 = vpack.c.b16 %v207, %v206
    %v226 = vpack.c.b16 %v209, %v208
    %v227 = vpack.c.b16 %v211, %v210
    %244 = vmatpush.bf16.msra.mxu0 %v219
    %245 = vmatpush.bf16.msra.mxu0 %v218
    %246 = vmatpush.bf16.msra.mxu0 %v217
    %247 = vmatpush.bf16.msra.mxu0 %v216
    %248 = vmatpush.bf16.msra.mxu0 %v215
    %249 = vmatpush.bf16.msra.mxu0 %v214
    %250 = vmatpush.bf16.msra.mxu0 %v213
    %251 = vmatpush.bf16.msra.mxu0 %v212
    %252 = vmatmul.bf16.gmra.mxu0 %v116
    %v253 = vpop.f32.mrf.mxu0
    %v254 = vadd.f32 %v67, %v253
    %v255 = vpop.f32.mrf.mxu0
    %v256 = vadd.f32 %v67, %v255
    %257 = vmatmul.bf16.gmra.mxu0 %v118
    %v258 = vpop.f32.mrf.mxu0
    %v259 = vadd.f32 %v67, %v258
    %v260 = vpop.f32.mrf.mxu0
    %v261 = vadd.f32 %v67, %v260
    %262 = vmatmul.bf16.gmra.mxu0 %v120
    %v263 = vpop.f32.mrf.mxu0
    %v264 = vadd.f32 %v67, %v263
    %v265 = vpop.f32.mrf.mxu0
    %v266 = vadd.f32 %v67, %v265
    %267 = vmatmul.bf16.gmra.mxu0 %v122
    %v268 = vpop.f32.mrf.mxu0
    %v269 = vadd.f32 %v67, %v268
    %v270 = vpop.f32.mrf.mxu0
    %v271 = vadd.f32 %v67, %v270
    %272 = vmatmul.bf16.gmra.mxu0 %v124
    %v273 = vpop.f32.mrf.mxu0
    %v274 = vadd.f32 %v67, %v273
    %v275 = vpop.f32.mrf.mxu0
    %v276 = vadd.f32 %v67, %v275
    %277 = vmatmul.bf16.gmra.mxu0 %v126
    %v278 = vpop.f32.mrf.mxu0
    %v279 = vadd.f32 %v67, %v278
    %v280 = vpop.f32.mrf.mxu0
    %v281 = vadd.f32 %v67, %v280
    %282 = vmatmul.bf16.gmra.mxu0 %v128
    %v283 = vpop.f32.mrf.mxu0
    %v284 = vadd.f32 %v67, %v283
    %v285 = vpop.f32.mrf.mxu0
    %v286 = vadd.f32 %v67, %v285
    %287 = vmatmul.bf16.gmra.mxu0 %v130
    %v288 = vpop.f32.mrf.mxu0
    %v289 = vadd.f32 %v67, %v288
    %v290 = vpop.f32.mrf.mxu0
    %v291 = vadd.f32 %v67, %v290
    %292 = vdwg.mxu0
    %293 = vmatpush.bf16.msra.mxu0 %v227
    %294 = vmatpush.bf16.msra.mxu0 %v226
    %295 = vmatpush.bf16.msra.mxu0 %v225
    %296 = vmatpush.bf16.msra.mxu0 %v224
    %297 = vmatpush.bf16.msra.mxu0 %v223
    %298 = vmatpush.bf16.msra.mxu0 %v222
    %299 = vmatpush.bf16.msra.mxu0 %v221
    %300 = vmatpush.bf16.msra.mxu0 %v220
    %301 = vmatmul.bf16.gmra.mxu0 %v117
    %v302 = vpop.f32.mrf.mxu0
    %v303 = vadd.f32 %v254, %v302
    %v304 = vpop.f32.mrf.mxu0
    %v305 = vadd.f32 %v256, %v304
    %306 = vmatmul.bf16.gmra.mxu0 %v119
    %v307 = vpop.f32.mrf.mxu0
    %v308 = vadd.f32 %v259, %v307
    %v309 = vpop.f32.mrf.mxu0
    %v310 = vadd.f32 %v261, %v309
    %311 = vmatmul.bf16.gmra.mxu0 %v121
    %v312 = vpop.f32.mrf.mxu0
    %v313 = vadd.f32 %v264, %v312
    %v314 = vpop.f32.mrf.mxu0
    %v315 = vadd.f32 %v266, %v314
    %316 = vmatmul.bf16.gmra.mxu0 %v123
    %v317 = vpop.f32.mrf.mxu0
    %v318 = vadd.f32 %v269, %v317
    %v319 = vpop.f32.mrf.mxu0
    %v320 = vadd.f32 %v271, %v319
    %321 = vmatmul.bf16.gmra.mxu0 %v125
    %v322 = vpop.f32.mrf.mxu0
    %v323 = vadd.f32 %v274, %v322
    %v324 = vpop.f32.mrf.mxu0
    %v325 = vadd.f32 %v276, %v324
    %326 = vmatmul.bf16.gmra.mxu0 %v127
    %v327 = vpop.f32.mrf.mxu0
    %v328 = vadd.f32 %v279, %v327
    %v329 = vpop.f32.mrf.mxu0
    %v330 = vadd.f32 %v281, %v329
    %331 = vmatmul.bf16.gmra.mxu0 %v129
    %v332 = vpop.f32.mrf.mxu0
    %v333 = vadd.f32 %v284, %v332
    %v334 = vpop.f32.mrf.mxu0
    %v335 = vadd.f32 %v286, %v334
    %336 = vmatmul.bf16.gmra.mxu0 %v131
    %v337 = vpop.f32.mrf.mxu0
    %v338 = vadd.f32 %v289, %v337
    %v339 = vpop.f32.mrf.mxu0
    %v340 = vadd.f32 %v291, %v339
    %341 = vdwg.mxu0
    %vm342 = vcmp.gt.f32.partialorder %v303, 0.0
    %vm343 = vcmp.gt.f32.partialorder %v305, 0.0
    %vm344 = vcmp.gt.f32.partialorder %v308, 0.0
    %vm345 = vcmp.gt.f32.partialorder %v310, 0.0
    %vm346 = vcmp.gt.f32.partialorder %v313, 0.0
    %vm347 = vcmp.gt.f32.partialorder %v315, 0.0
    %vm348 = vcmp.gt.f32.partialorder %v318, 0.0
    %vm349 = vcmp.gt.f32.partialorder %v320, 0.0
    %vm350 = vcmp.gt.f32.partialorder %v323, 0.0
    %vm351 = vcmp.gt.f32.partialorder %v325, 0.0
    %vm352 = vcmp.gt.f32.partialorder %v328, 0.0
    %vm353 = vcmp.gt.f32.partialorder %v330, 0.0
    %vm354 = vcmp.gt.f32.partialorder %v333, 0.0
    %vm355 = vcmp.gt.f32.partialorder %v335, 0.0
    %vm356 = vcmp.gt.f32.partialorder %v338, 0.0
    %vm357 = vcmp.gt.f32.partialorder %v340, 0.0
    %v358 = vmul.f32 %v303, 0.2
    %v359 = vmul.f32 %v305, 0.2
    %v360 = vmul.f32 %v308, 0.2
    %v361 = vmul.f32 %v310, 0.2
    %v362 = vmul.f32 %v313, 0.2
    %v363 = vmul.f32 %v315, 0.2
    %v364 = vmul.f32 %v318, 0.2
    %v365 = vmul.f32 %v320, 0.2
    %v366 = vmul.f32 %v323, 0.2
    %v367 = vmul.f32 %v325, 0.2
    %v368 = vmul.f32 %v328, 0.2
    %v369 = vmul.f32 %v330, 0.2
    %v370 = vmul.f32 %v333, 0.2
    %v371 = vmul.f32 %v335, 0.2
    %v372 = vmul.f32 %v338, 0.2
    %v373 = vmul.f32 %v340, 0.2
    %v374 = vsel %vm342, %v303, %v358
    %v375 = vsel %vm343, %v305, %v359
    %v376 = vsel %vm344, %v308, %v360
    %v377 = vsel %vm345, %v310, %v361
    %v378 = vsel %vm346, %v313, %v362
    %v379 = vsel %vm347, %v315, %v363
    %v380 = vsel %vm348, %v318, %v364
    %v381 = vsel %vm349, %v320, %v365
    %v382 = vsel %vm350, %v323, %v366
    %v383 = vsel %vm351, %v325, %v367
    %v384 = vsel %vm352, %v328, %v368
    %v385 = vsel %vm353, %v330, %v369
    %v386 = vsel %vm354, %v333, %v370
    %v387 = vsel %vm355, %v335, %v371
    %v388 = vsel %vm356, %v338, %v372
    %v389 = vsel %vm357, %v340, %v373
    %v390 = vpack.c.bf16 %v375, %v374
    %v391 = vpack.c.bf16 %v377, %v376
    %v392 = vpack.c.bf16 %v379, %v378
    %v393 = vpack.c.bf16 %v381, %v380
    %v394 = vpack.c.bf16 %v383, %v382
    %v395 = vpack.c.bf16 %v385, %v384
    %v396 = vpack.c.bf16 %v387, %v386
    %v397 = vpack.c.bf16 %v389, %v388
    %v398 = vld [vmem:[%s2 + $0x100] sm:$0xf]
    %v399 = vld [vmem:[%s2 + $0x104] sm:$0xf]
    %v400 = vld [vmem:[%s2 + $0x108] sm:$0xf]
    %v401 = vld [vmem:[%s2 + $0x10c] sm:$0xf]
    %v402 = vld [vmem:[%s2 + $0x110] sm:$0xf]
    %v403 = vld [vmem:[%s2 + $0x114] sm:$0xf]
    %v404 = vld [vmem:[%s2 + $0x118] sm:$0xf]
    %v405 = vld [vmem:[%s2 + $0x11c] sm:$0xf]
    %v406 = vld [vmem:[%s2 + $0x120] sm:$0xf]
    %v407 = vld [vmem:[%s2 + $0x124] sm:$0xf]
    %v408 = vld [vmem:[%s2 + $0x128] sm:$0xf]
    %v409 = vld [vmem:[%s2 + $0x12c] sm:$0xf]
    %v410 = vld [vmem:[%s2 + $0x130] sm:$0xf]
    %v411 = vld [vmem:[%s2 + $0x134] sm:$0xf]
    %v412 = vld [vmem:[%s2 + $0x138] sm:$0xf]
    %v413 = vld [vmem:[%s2 + $0x13c] sm:$0xf]
    %v414 = vld [vmem:[%s3 + $0x1] sm:$0x1]
    %v415 = vperm.slane %v414, 0
    %v432 = vunpack.c.l.b16 %v398
    %v433 = vunpack.c.l.b16 %v399
    %v434 = vunpack.c.l.b16 %v400
    %v435 = vunpack.c.l.b16 %v401
    %v436 = vunpack.c.l.b16 %v402
    %v437 = vunpack.c.l.b16 %v403
    %v438 = vunpack.c.l.b16 %v404
    %v439 = vunpack.c.l.b16 %v405
    %v440 = vunpack.c.l.b16 %v406
    %v441 = vunpack.c.l.b16 %v407
    %v442 = vunpack.c.l.b16 %v408
    %v443 = vunpack.c.l.b16 %v409
    %v444 = vunpack.c.l.b16 %v410
    %v445 = vunpack.c.l.b16 %v411
    %v446 = vunpack.c.l.b16 %v412
    %v447 = vunpack.c.l.b16 %v413
    %v448 = vpack.c.b16 %v433, %v432
    %v449 = vpack.c.b16 %v435, %v434
    %v450 = vpack.c.b16 %v437, %v436
    %v451 = vpack.c.b16 %v439, %v438
    %v452 = vpack.c.b16 %v441, %v440
    %v453 = vpack.c.b16 %v443, %v442
    %v454 = vpack.c.b16 %v445, %v444
    %v455 = vpack.c.b16 %v447, %v446
    %464 = vmatpush.bf16.msra.mxu0 %v455
    %465 = vmatpush.bf16.msra.mxu0 %v454
    %466 = vmatpush.bf16.msra.mxu0 %v453
    %467 = vmatpush.bf16.msra.mxu0 %v452
    %468 = vmatpush.bf16.msra.mxu0 %v451
    %469 = vmatpush.bf16.msra.mxu0 %v450
    %470 = vmatpush.bf16.msra.mxu0 %v449
    %471 = vmatpush.bf16.msra.mxu0 %v448
    %472 = vmatmul.bf16.gmra.mxu0 %v390
    %v473 = vpop.f32.mrf.mxu0
    %v474 = vadd.f32 %v415, %v473
    %v475 = vpop.f32.mrf.mxu0
    %v476 = vadd.f32 %v415, %v475
    %477 = vmatmul.bf16.gmra.mxu0 %v391
    %v478 = vpop.f32.mrf.mxu0
    %v479 = vadd.f32 %v415, %v478
    %v480 = vpop.f32.mrf.mxu0
    %v481 = vadd.f32 %v415, %v480
    %482 = vmatmul.bf16.gmra.mxu0 %v392
    %v483 = vpop.f32.mrf.mxu0
    %v484 = vadd.f32 %v415, %v483
    %v485 = vpop.f32.mrf.mxu0
    %v486 = vadd.f32 %v415, %v485
    %487 = vmatmul.bf16.gmra.mxu0 %v393
    %v488 = vpop.f32.mrf.mxu0
    %v489 = vadd.f32 %v415, %v488
    %v490 = vpop.f32.mrf.mxu0
    %v491 = vadd.f32 %v415, %v490
    %492 = vmatmul.bf16.gmra.mxu0 %v394
    %v493 = vpop.f32.mrf.mxu0
    %v494 = vadd.f32 %v415, %v493
    %v495 = vpop.f32.mrf.mxu0
    %v496 = vadd.f32 %v415, %v495
    %497 = vmatmul.bf16.gmra.mxu0 %v395
    %v498 = vpop.f32.mrf.mxu0
    %v499 = vadd.f32 %v415, %v498
    %v500 = vpop.f32.mrf.mxu0
    %v501 = vadd.f32 %v415, %v500
    %502 = vmatmul.bf16.gmra.mxu0 %v396
    %v503 = vpop.f32.mrf.mxu0
    %v504 = vadd.f32 %v415, %v503
    %v505 = vpop.f32.mrf.mxu0
    %v506 = vadd.f32 %v415, %v505
    %507 = vmatmul.bf16.gmra.mxu0 %v397
    %v508 = vpop.f32.mrf.mxu0
    %v509 = vadd.f32 %v415, %v508
    %v510 = vpop.f32.mrf.mxu0
    %v511 = vadd.f32 %v415, %v510
    %512 = vdwg.mxu0
    %vm513 = vcmp.gt.f32.partialorder %v474, 0.0
    %vm514 = vcmp.gt.f32.partialorder %v476, 0.0
    %vm515 = vcmp.gt.f32.partialorder %v479, 0.0
    %vm516 = vcmp.gt.f32.partialorder %v481, 0.0
    %vm517 = vcmp.gt.f32.partialorder %v484, 0.0
    %vm518 = vcmp.gt.f32.partialorder %v486, 0.0
    %vm519 = vcmp.gt.f32.partialorder %v489, 0.0
    %vm520 = vcmp.gt.f32.partialorder %v491, 0.0
    %vm521 = vcmp.gt.f32.partialorder %v494, 0.0
    %vm522 = vcmp.gt.f32.partialorder %v496, 0.0
    %vm523 = vcmp.gt.f32.partialorder %v499, 0.0
    %vm524 = vcmp.gt.f32.partialorder %v501, 0.0
    %vm525 = vcmp.gt.f32.partialorder %v504, 0.0
    %vm526 = vcmp.gt.f32.partialorder %v506, 0.0
    %vm527 = vcmp.gt.f32.partialorder %v509, 0.0
    %vm528 = vcmp.gt.f32.partialorder %v511, 0.0
    %v529 = vmul.f32 %v474, 0.2
    %v530 = vmul.f32 %v476, 0.2
    %v531 = vmul.f32 %v479, 0.2
    %v532 = vmul.f32 %v481, 0.2
    %v533 = vmul.f32 %v484, 0.2
    %v534 = vmul.f32 %v486, 0.2
    %v535 = vmul.f32 %v489, 0.2
    %v536 = vmul.f32 %v491, 0.2
    %v537 = vmul.f32 %v494, 0.2
    %v538 = vmul.f32 %v496, 0.2
    %v539 = vmul.f32 %v499, 0.2
    %v540 = vmul.f32 %v501, 0.2
    %v541 = vmul.f32 %v504, 0.2
    %v542 = vmul.f32 %v506, 0.2
    %v543 = vmul.f32 %v509, 0.2
    %v544 = vmul.f32 %v511, 0.2
    %v545 = vsel %vm513, %v474, %v529
    %v546 = vsel %vm514, %v476, %v530
    %v547 = vsel %vm515, %v479, %v531
    %v548 = vsel %vm516, %v481, %v532
    %v549 = vsel %vm517, %v484, %v533
    %v550 = vsel %vm518, %v486, %v534
    %v551 = vsel %vm519, %v489, %v535
    %v552 = vsel %vm520, %v491, %v536
    %v553 = vsel %vm521, %v494, %v537
    %v554 = vsel %vm522, %v496, %v538
    %v555 = vsel %vm523, %v499, %v539
    %v556 = vsel %vm524, %v501, %v540
    %v557 = vsel %vm525, %v504, %v541
    %v558 = vsel %vm526, %v506, %v542
    %v559 = vsel %vm527, %v509, %v543
    %v560 = vsel %vm528, %v511, %v544
    %v561 = vld [vmem:[%s1] sm:$0xff]
    %v562 = vld [vmem:[%s1 + $0x8] sm:$0xff]
    %v563 = vld [vmem:[%s1 + $0x10] sm:$0xff]
    %v564 = vld [vmem:[%s1 + $0x18] sm:$0xff]
    %v565 = vld [vmem:[%s1 + $0x20] sm:$0xff]
    %v566 = vld [vmem:[%s1 + $0x28] sm:$0xff]
    %v567 = vld [vmem:[%s1 + $0x30] sm:$0xff]
    %v568 = vld [vmem:[%s1 + $0x38] sm:$0xff]
    %v569 = vld [vmem:[%s1 + $0x40] sm:$0xff]
    %v570 = vld [vmem:[%s1 + $0x48] sm:$0xff]
    %v571 = vld [vmem:[%s1 + $0x50] sm:$0xff]
    %v572 = vld [vmem:[%s1 + $0x58] sm:$0xff]
    %v573 = vld [vmem:[%s1 + $0x60] sm:$0xff]
    %v574 = vld [vmem:[%s1 + $0x68] sm:$0xff]
    %v575 = vld [vmem:[%s1 + $0x70] sm:$0xff]
    %v576 = vld [vmem:[%s1 + $0x78] sm:$0xff]
    %v577 = vld [vmem:[%s2 + $0x80] sm:$0xf]
    %v578 = vld [vmem:[%s2 + $0x84] sm:$0xf]
    %v579 = vld [vmem:[%s2 + $0x88] sm:$0xf]
    %v580 = vld [vmem:[%s2 + $0x8c] sm:$0xf]
    %v581 = vld [vmem:[%s2 + $0x90] sm:$0xf]
    %v582 = vld [vmem:[%s2 + $0x94] sm:$0xf]
    %v583 = vld [vmem:[%s2 + $0x98] sm:$0xf]
    %v584 = vld [vmem:[%s2 + $0x9c] sm:$0xf]
    %v585 = vld [vmem:[%s2 + $0xa0] sm:$0xf]
    %v586 = vld [vmem:[%s2 + $0xa4] sm:$0xf]
    %v587 = vld [vmem:[%s2 + $0xa8] sm:$0xf]
    %v588 = vld [vmem:[%s2 + $0xac] sm:$0xf]
    %v589 = vld [vmem:[%s2 + $0xb0] sm:$0xf]
    %v590 = vld [vmem:[%s2 + $0xb4] sm:$0xf]
    %v591 = vld [vmem:[%s2 + $0xb8] sm:$0xf]
    %v592 = vld [vmem:[%s2 + $0xbc] sm:$0xf]
    %v593 = vld [vmem:[%s2 + $0xc0] sm:$0xf]
    %v594 = vld [vmem:[%s2 + $0xc4] sm:$0xf]
    %v595 = vld [vmem:[%s2 + $0xc8] sm:$0xf]
    %v596 = vld [vmem:[%s2 + $0xcc] sm:$0xf]
    %v597 = vld [vmem:[%s2 + $0xd0] sm:$0xf]
    %v598 = vld [vmem:[%s2 + $0xd4] sm:$0xf]
    %v599 = vld [vmem:[%s2 + $0xd8] sm:$0xf]
    %v600 = vld [vmem:[%s2 + $0xdc] sm:$0xf]
    %v601 = vld [vmem:[%s2 + $0xe0] sm:$0xf]
    %v602 = vld [vmem:[%s2 + $0xe4] sm:$0xf]
    %v603 = vld [vmem:[%s2 + $0xe8] sm:$0xf]
    %v604 = vld [vmem:[%s2 + $0xec] sm:$0xf]
    %v605 = vld [vmem:[%s2 + $0xf0] sm:$0xf]
    %v606 = vld [vmem:[%s2 + $0xf4] sm:$0xf]
    %v607 = vld [vmem:[%s2 + $0xf8] sm:$0xf]
    %v608 = vld [vmem:[%s2 + $0xfc] sm:$0xf]
    %v609 = vld [vmem:[%s3 + $0x2] sm:$0x1]
    %v610 = vperm.slane %v609, 0
    %v627 = vunpack.c.l.b16 %v561
    %v628 = vunpack.c.h.b16 %v561
    %v629 = vunpack.c.l.b16 %v562
    %v630 = vunpack.c.h.b16 %v562
    %v631 = vunpack.c.l.b16 %v563
    %v632 = vunpack.c.h.b16 %v563
    %v633 = vunpack.c.l.b16 %v564
    %v634 = vunpack.c.h.b16 %v564
    %v635 = vunpack.c.l.b16 %v565
    %v636 = vunpack.c.h.b16 %v565
    %v637 = vunpack.c.l.b16 %v566
    %v638 = vunpack.c.h.b16 %v566
    %v639 = vunpack.c.l.b16 %v567
    %v640 = vunpack.c.h.b16 %v567
    %v641 = vunpack.c.l.b16 %v568
    %v642 = vunpack.c.h.b16 %v568
    %v643 = vunpack.c.l.b16 %v569
    %v644 = vunpack.c.h.b16 %v569
    %v645 = vunpack.c.l.b16 %v570
    %v646 = vunpack.c.h.b16 %v570
    %v647 = vunpack.c.l.b16 %v571
    %v648 = vunpack.c.h.b16 %v571
    %v649 = vunpack.c.l.b16 %v572
    %v650 = vunpack.c.h.b16 %v572
    %v651 = vunpack.c.l.b16 %v573
    %v652 = vunpack.c.h.b16 %v573
    %v653 = vunpack.c.l.b16 %v574
    %v654 = vunpack.c.h.b16 %v574
    %v655 = vunpack.c.l.b16 %v575
    %v656 = vunpack.c.h.b16 %v575
    %v657 = vunpack.c.l.b16 %v576
    %v658 = vunpack.c.h.b16 %v576
    %v659 = vpack.c.b16 %v629, %v627
    %v660 = vpack.c.b16 %v630, %v628
    %v661 = vpack.c.b16 %v633, %v631
    %v662 = vpack.c.b16 %v634, %v632
    %v663 = vpack.c.b16 %v637, %v635
    %v664 = vpack.c.b16 %v638, %v636
    %v665 = vpack.c.b16 %v641, %v639
    %v666 = vpack.c.b16 %v642, %v640
    %v667 = vpack.c.b16 %v645, %v643
    %v668 = vpack.c.b16 %v646, %v644
    %v669 = vpack.c.b16 %v649, %v647
    %v670 = vpack.c.b16 %v650, %v648
    %v671 = vpack.c.b16 %v653, %v651
    %v672 = vpack.c.b16 %v654, %v652
    %v673 = vpack.c.b16 %v657, %v655
    %v674 = vpack.c.b16 %v658, %v656
    %v723 = vunpack.c.l.b16 %v577
    %v724 = vunpack.c.l.b16 %v578
    %v725 = vunpack.c.l.b16 %v579
    %v726 = vunpack.c.l.b16 %v580
    %v727 = vunpack.c.l.b16 %v581
    %v728 = vunpack.c.l.b16 %v582
    %v729 = vunpack.c.l.b16 %v583
    %v730 = vunpack.c.l.b16 %v584
    %v731 = vunpack.c.l.b16 %v585
    %v732 = vunpack.c.l.b16 %v586
    %v733 = vunpack.c.l.b16 %v587
    %v734 = vunpack.c.l.b16 %v588
    %v735 = vunpack.c.l.b16 %v589
    %v736 = vunpack.c.l.b16 %v590
    %v737 = vunpack.c.l.b16 %v591
    %v738 = vunpack.c.l.b16 %v592
    %v739 = vunpack.c.l.b16 %v593
    %v740 = vunpack.c.l.b16 %v594
    %v741 = vunpack.c.l.b16 %v595
    %v742 = vunpack.c.l.b16 %v596
    %v743 = vunpack.c.l.b16 %v597
    %v744 = vunpack.c.l.b16 %v598
    %v745 = vunpack.c.l.b16 %v599
    %v746 = vunpack.c.l.b16 %v600
    %v747 = vunpack.c.l.b16 %v601
    %v748 = vunpack.c.l.b16 %v602
    %v749 = vunpack.c.l.b16 %v603
    %v750 = vunpack.c.l.b16 %v604
    %v751 = vunpack.c.l.b16 %v605
    %v752 = vunpack.c.l.b16 %v606
    %v753 = vunpack.c.l.b16 %v607
    %v754 = vunpack.c.l.b16 %v608
    %v755 = vpack.c.b16 %v724, %v723
    %v756 = vpack.c.b16 %v726, %v725
    %v757 = vpack.c.b16 %v728, %v727
    %v758 = vpack.c.b16 %v730, %v729
    %v759 = vpack.c.b16 %v732, %v731
    %v760 = vpack.c.b16 %v734, %v733
    %v761 = vpack.c.b16 %v736, %v735
    %v762 = vpack.c.b16 %v738, %v737
    %v763 = vpack.c.b16 %v740, %v739
    %v764 = vpack.c.b16 %v742, %v741
    %v765 = vpack.c.b16 %v744, %v743
    %v766 = vpack.c.b16 %v746, %v745
    %v767 = vpack.c.b16 %v748, %v747
    %v768 = vpack.c.b16 %v750, %v749
    %v769 = vpack.c.b16 %v752, %v751
    %v770 = vpack.c.b16 %v754, %v753
    %787 = vmatpush.bf16.msra.mxu0 %v762
    %788 = vmatpush.bf16.msra.mxu0 %v761
    %789 = vmatpush.bf16.msra.mxu0 %v760
    %790 = vmatpush.bf16.msra.mxu0 %v759
    %791 = vmatpush.bf16.msra.mxu0 %v758
    %792 = vmatpush.bf16.msra.mxu0 %v757
    %793 = vmatpush.bf16.msra.mxu0 %v756
    %794 = vmatpush.bf16.msra.mxu0 %v755
    %795 = vmatmul.bf16.gmra.mxu0 %v659
    %v796 = vpop.f32.mrf.mxu0
    %v797 = vadd.f32 %v610, %v796
    %v798 = vpop.f32.mrf.mxu0
    %v799 = vadd.f32 %v610, %v798
    %800 = vmatmul.bf16.gmra.mxu0 %v661
    %v801 = vpop.f32.mrf.mxu0
    %v802 = vadd.f32 %v610, %v801
    %v803 = vpop.f32.mrf.mxu0
    %v804 = vadd.f32 %v610, %v803
    %805 = vmatmul.bf16.gmra.mxu0 %v663
    %v806 = vpop.f32.mrf.mxu0
    %v807 = vadd.f32 %v610, %v806
    %v808 = vpop.f32.mrf.mxu0
    %v809 = vadd.f32 %v610, %v808
    %810 = vmatmul.bf16.gmra.mxu0 %v665
    %v811 = vpop.f32.mrf.mxu0
    %v812 = vadd.f32 %v610, %v811
    %v813 = vpop.f32.mrf.mxu0
    %v814 = vadd.f32 %v610, %v813
    %815 = vmatmul.bf16.gmra.mxu0 %v667
    %v816 = vpop.f32.mrf.mxu0
    %v817 = vadd.f32 %v610, %v816
    %v818 = vpop.f32.mrf.mxu0
    %v819 = vadd.f32 %v610, %v818
    %820 = vmatmul.bf16.gmra.mxu0 %v669
    %v821 = vpop.f32.mrf.mxu0
    %v822 = vadd.f32 %v610, %v821
    %v823 = vpop.f32.mrf.mxu0
    %v824 = vadd.f32 %v610, %v823
    %825 = vmatmul.bf16.gmra.mxu0 %v671
    %v826 = vpop.f32.mrf.mxu0
    %v827 = vadd.f32 %v610, %v826
    %v828 = vpop.f32.mrf.mxu0
    %v829 = vadd.f32 %v610, %v828
    %830 = vmatmul.bf16.gmra.mxu0 %v673
    %v831 = vpop.f32.mrf.mxu0
    %v832 = vadd.f32 %v610, %v831
    %v833 = vpop.f32.mrf.mxu0
    %v834 = vadd.f32 %v610, %v833
    %835 = vdwg.mxu0
    %836 = vmatpush.bf16.msra.mxu0 %v770
    %837 = vmatpush.bf16.msra.mxu0 %v769
    %838 = vmatpush.bf16.msra.mxu0 %v768
    %839 = vmatpush.bf16.msra.mxu0 %v767
    %840 = vmatpush.bf16.msra.mxu0 %v766
    %841 = vmatpush.bf16.msra.mxu0 %v765
    %842 = vmatpush.bf16.msra.mxu0 %v764
    %843 = vmatpush.bf16.msra.mxu0 %v763
    %844 = vmatmul.bf16.gmra.mxu0 %v660
    %v845 = vpop.f32.mrf.mxu0
    %v846 = vadd.f32 %v797, %v845
    %v847 = vpop.f32.mrf.mxu0
    %v848 = vadd.f32 %v799, %v847
    %849 = vmatmul.bf16.gmra.mxu0 %v662
    %v850 = vpop.f32.mrf.mxu0
    %v851 = vadd.f32 %v802, %v850
    %v852 = vpop.f32.mrf.mxu0
    %v853 = vadd.f32 %v804, %v852
    %854 = vmatmul.bf16.gmra.mxu0 %v664
    %v855 = vpop.f32.mrf.mxu0
    %v856 = vadd.f32 %v807, %v855
    %v857 = vpop.f32.mrf.mxu0
    %v858 = vadd.f32 %v809, %v857
    %859 = vmatmul.bf16.gmra.mxu0 %v666
    %v860 = vpop.f32.mrf.mxu0
    %v861 = vadd.f32 %v812, %v860
    %v862 = vpop.f32.mrf.mxu0
    %v863 = vadd.f32 %v814, %v862
    %864 = vmatmul.bf16.gmra.mxu0 %v668
    %v865 = vpop.f32.mrf.mxu0
    %v866 = vadd.f32 %v817, %v865
    %v867 = vpop.f32.mrf.mxu0
    %v868 = vadd.f32 %v819, %v867
    %869 = vmatmul.bf16.gmra.mxu0 %v670
    %v870 = vpop.f32.mrf.mxu0
    %v871 = vadd.f32 %v822, %v870
    %v872 = vpop.f32.mrf.mxu0
    %v873 = vadd.f32 %v824, %v872
    %874 = vmatmul.bf16.gmra.mxu0 %v672
    %v875 = vpop.f32.mrf.mxu0
    %v876 = vadd.f32 %v827, %v875
    %v877 = vpop.f32.mrf.mxu0
    %v878 = vadd.f32 %v829, %v877
    %879 = vmatmul.bf16.gmra.mxu0 %v674
    %v880 = vpop.f32.mrf.mxu0
    %v881 = vadd.f32 %v832, %v880
    %v882 = vpop.f32.mrf.mxu0
    %v883 = vadd.f32 %v834, %v882
    %884 = vdwg.mxu0
    %vm885 = vcmp.gt.f32.partialorder %v846, 0.0
    %vm886 = vcmp.gt.f32.partialorder %v848, 0.0
    %vm887 = vcmp.gt.f32.partialorder %v851, 0.0
    %vm888 = vcmp.gt.f32.partialorder %v853, 0.0
    %vm889 = vcmp.gt.f32.partialorder %v856, 0.0
    %vm890 = vcmp.gt.f32.partialorder %v858, 0.0
    %vm891 = vcmp.gt.f32.partialorder %v861, 0.0
    %vm892 = vcmp.gt.f32.partialorder %v863, 0.0
    %vm893 = vcmp.gt.f32.partialorder %v866, 0.0
    %vm894 = vcmp.gt.f32.partialorder %v868, 0.0
    %vm895 = vcmp.gt.f32.partialorder %v871, 0.0
    %vm896 = vcmp.gt.f32.partialorder %v873, 0.0
    %vm897 = vcmp.gt.f32.partialorder %v876, 0.0
    %vm898 = vcmp.gt.f32.partialorder %v878, 0.0
    %vm899 = vcmp.gt.f32.partialorder %v881, 0.0
    %vm900 = vcmp.gt.f32.partialorder %v883, 0.0
    %v901 = vmul.f32 %v846, 0.2
    %v902 = vmul.f32 %v848, 0.2
    %v903 = vmul.f32 %v851, 0.2
    %v904 = vmul.f32 %v853, 0.2
    %v905 = vmul.f32 %v856, 0.2
    %v906 = vmul.f32 %v858, 0.2
    %v907 = vmul.f32 %v861, 0.2
    %v908 = vmul.f32 %v863, 0.2
    %v909 = vmul.f32 %v866, 0.2
    %v910 = vmul.f32 %v868, 0.2
    %v911 = vmul.f32 %v871, 0.2
    %v912 = vmul.f32 %v873, 0.2
    %v913 = vmul.f32 %v876, 0.2
    %v914 = vmul.f32 %v878, 0.2
    %v915 = vmul.f32 %v881, 0.2
    %v916 = vmul.f32 %v883, 0.2
    %v917 = vsel %vm885, %v846, %v901
    %v918 = vsel %vm886, %v848, %v902
    %v919 = vsel %vm887, %v851, %v903
    %v920 = vsel %vm888, %v853, %v904
    %v921 = vsel %vm889, %v856, %v905
    %v922 = vsel %vm890, %v858, %v906
    %v923 = vsel %vm891, %v861, %v907
    %v924 = vsel %vm892, %v863, %v908
    %v925 = vsel %vm893, %v866, %v909
    %v926 = vsel %vm894, %v868, %v910
    %v927 = vsel %vm895, %v871, %v911
    %v928 = vsel %vm896, %v873, %v912
    %v929 = vsel %vm897, %v876, %v913
    %v930 = vsel %vm898, %v878, %v914
    %v931 = vsel %vm899, %v881, %v915
    %v932 = vsel %vm900, %v883, %v916
    %v933 = vpack.c.bf16 %v918, %v917
    %v934 = vpack.c.bf16 %v920, %v919
    %v935 = vpack.c.bf16 %v922, %v921
    %v936 = vpack.c.bf16 %v924, %v923
    %v937 = vpack.c.bf16 %v926, %v925
    %v938 = vpack.c.bf16 %v928, %v927
    %v939 = vpack.c.bf16 %v930, %v929
    %v940 = vpack.c.bf16 %v932, %v931
    %v941 = vld [vmem:[%s2 + $0x140] sm:$0xf]
    %v942 = vld [vmem:[%s2 + $0x144] sm:$0xf]
    %v943 = vld [vmem:[%s2 + $0x148] sm:$0xf]
    %v944 = vld [vmem:[%s2 + $0x14c] sm:$0xf]
    %v945 = vld [vmem:[%s2 + $0x150] sm:$0xf]
    %v946 = vld [vmem:[%s2 + $0x154] sm:$0xf]
    %v947 = vld [vmem:[%s2 + $0x158] sm:$0xf]
    %v948 = vld [vmem:[%s2 + $0x15c] sm:$0xf]
    %v949 = vld [vmem:[%s2 + $0x160] sm:$0xf]
    %v950 = vld [vmem:[%s2 + $0x164] sm:$0xf]
    %v951 = vld [vmem:[%s2 + $0x168] sm:$0xf]
    %v952 = vld [vmem:[%s2 + $0x16c] sm:$0xf]
    %v953 = vld [vmem:[%s2 + $0x170] sm:$0xf]
    %v954 = vld [vmem:[%s2 + $0x174] sm:$0xf]
    %v955 = vld [vmem:[%s2 + $0x178] sm:$0xf]
    %v956 = vld [vmem:[%s2 + $0x17c] sm:$0xf]
    %v957 = vld [vmem:[%s3 + $0x3] sm:$0x1]
    %v958 = vperm.slane %v957, 0
    %v975 = vunpack.c.l.b16 %v941
    %v976 = vunpack.c.l.b16 %v942
    %v977 = vunpack.c.l.b16 %v943
    %v978 = vunpack.c.l.b16 %v944
    %v979 = vunpack.c.l.b16 %v945
    %v980 = vunpack.c.l.b16 %v946
    %v981 = vunpack.c.l.b16 %v947
    %v982 = vunpack.c.l.b16 %v948
    %v983 = vunpack.c.l.b16 %v949
    %v984 = vunpack.c.l.b16 %v950
    %v985 = vunpack.c.l.b16 %v951
    %v986 = vunpack.c.l.b16 %v952
    %v987 = vunpack.c.l.b16 %v953
    %v988 = vunpack.c.l.b16 %v954
    %v989 = vunpack.c.l.b16 %v955
    %v990 = vunpack.c.l.b16 %v956
    %v991 = vpack.c.b16 %v976, %v975
    %v992 = vpack.c.b16 %v978, %v977
    %v993 = vpack.c.b16 %v980, %v979
    %v994 = vpack.c.b16 %v982, %v981
    %v995 = vpack.c.b16 %v984, %v983
    %v996 = vpack.c.b16 %v986, %v985
    %v997 = vpack.c.b16 %v988, %v987
    %v998 = vpack.c.b16 %v990, %v989
    %1007 = vmatpush.bf16.msra.mxu0 %v998
    %1008 = vmatpush.bf16.msra.mxu0 %v997
    %1009 = vmatpush.bf16.msra.mxu0 %v996
    %1010 = vmatpush.bf16.msra.mxu0 %v995
    %1011 = vmatpush.bf16.msra.mxu0 %v994
    %1012 = vmatpush.bf16.msra.mxu0 %v993
    %1013 = vmatpush.bf16.msra.mxu0 %v992
    %1014 = vmatpush.bf16.msra.mxu0 %v991
    %1015 = vmatmul.bf16.gmra.mxu0 %v933
    %v1016 = vpop.f32.mrf.mxu0
    %v1017 = vadd.f32 %v958, %v1016
    %v1018 = vpop.f32.mrf.mxu0
    %v1019 = vadd.f32 %v958, %v1018
    %1020 = vmatmul.bf16.gmra.mxu0 %v934
    %v1021 = vpop.f32.mrf.mxu0
    %v1022 = vadd.f32 %v958, %v1021
    %v1023 = vpop.f32.mrf.mxu0
    %v1024 = vadd.f32 %v958, %v1023
    %1025 = vmatmul.bf16.gmra.mxu0 %v935
    %v1026 = vpop.f32.mrf.mxu0
    %v1027 = vadd.f32 %v958, %v1026
    %v1028 = vpop.f32.mrf.mxu0
    %v1029 = vadd.f32 %v958, %v1028
    %1030 = vmatmul.bf16.gmra.mxu0 %v936
    %v1031 = vpop.f32.mrf.mxu0
    %v1032 = vadd.f32 %v958, %v1031
    %v1033 = vpop.f32.mrf.mxu0
    %v1034 = vadd.f32 %v958, %v1033
    %1035 = vmatmul.bf16.gmra.mxu0 %v937
    %v1036 = vpop.f32.mrf.mxu0
    %v1037 = vadd.f32 %v958, %v1036
    %v1038 = vpop.f32.mrf.mxu0
    %v1039 = vadd.f32 %v958, %v1038
    %1040 = vmatmul.bf16.gmra.mxu0 %v938
    %v1041 = vpop.f32.mrf.mxu0
    %v1042 = vadd.f32 %v958, %v1041
    %v1043 = vpop.f32.mrf.mxu0
    %v1044 = vadd.f32 %v958, %v1043
    %1045 = vmatmul.bf16.gmra.mxu0 %v939
    %v1046 = vpop.f32.mrf.mxu0
    %v1047 = vadd.f32 %v958, %v1046
    %v1048 = vpop.f32.mrf.mxu0
    %v1049 = vadd.f32 %v958, %v1048
    %1050 = vmatmul.bf16.gmra.mxu0 %v940
    %v1051 = vpop.f32.mrf.mxu0
    %v1052 = vadd.f32 %v958, %v1051
    %v1053 = vpop.f32.mrf.mxu0
    %v1054 = vadd.f32 %v958, %v1053
    %1055 = vdwg.mxu0
    %vm1056 = vcmp.gt.f32.partialorder %v1017, 0.0
    %vm1057 = vcmp.gt.f32.partialorder %v1019, 0.0
    %vm1058 = vcmp.gt.f32.partialorder %v1022, 0.0
    %vm1059 = vcmp.gt.f32.partialorder %v1024, 0.0
    %vm1060 = vcmp.gt.f32.partialorder %v1027, 0.0
    %vm1061 = vcmp.gt.f32.partialorder %v1029, 0.0
    %vm1062 = vcmp.gt.f32.partialorder %v1032, 0.0
    %vm1063 = vcmp.gt.f32.partialorder %v1034, 0.0
    %vm1064 = vcmp.gt.f32.partialorder %v1037, 0.0
    %vm1065 = vcmp.gt.f32.partialorder %v1039, 0.0
    %vm1066 = vcmp.gt.f32.partialorder %v1042, 0.0
    %vm1067 = vcmp.gt.f32.partialorder %v1044, 0.0
    %vm1068 = vcmp.gt.f32.partialorder %v1047, 0.0
    %vm1069 = vcmp.gt.f32.partialorder %v1049, 0.0
    %vm1070 = vcmp.gt.f32.partialorder %v1052, 0.0
    %vm1071 = vcmp.gt.f32.partialorder %v1054, 0.0
    %v1072 = vmul.f32 %v1017, 0.2
    %v1073 = vmul.f32 %v1019, 0.2
    %v1074 = vmul.f32 %v1022, 0.2
    %v1075 = vmul.f32 %v1024, 0.2
    %v1076 = vmul.f32 %v1027, 0.2
    %v1077 = vmul.f32 %v1029, 0.2
    %v1078 = vmul.f32 %v1032, 0.2
    %v1079 = vmul.f32 %v1034, 0.2
    %v1080 = vmul.f32 %v1037, 0.2
    %v1081 = vmul.f32 %v1039, 0.2
    %v1082 = vmul.f32 %v1042, 0.2
    %v1083 = vmul.f32 %v1044, 0.2
    %v1084 = vmul.f32 %v1047, 0.2
    %v1085 = vmul.f32 %v1049, 0.2
    %v1086 = vmul.f32 %v1052, 0.2
    %v1087 = vmul.f32 %v1054, 0.2
    %v1088 = vsel %vm1056, %v1017, %v1072
    %v1089 = vsel %vm1057, %v1019, %v1073
    %v1090 = vsel %vm1058, %v1022, %v1074
    %v1091 = vsel %vm1059, %v1024, %v1075
    %v1092 = vsel %vm1060, %v1027, %v1076
    %v1093 = vsel %vm1061, %v1029, %v1077
    %v1094 = vsel %vm1062, %v1032, %v1078
    %v1095 = vsel %vm1063, %v1034, %v1079
    %v1096 = vsel %vm1064, %v1037, %v1080
    %v1097 = vsel %vm1065, %v1039, %v1081
    %v1098 = vsel %vm1066, %v1042, %v1082
    %v1099 = vsel %vm1067, %v1044, %v1083
    %v1100 = vsel %vm1068, %v1047, %v1084
    %v1101 = vsel %vm1069, %v1049, %v1085
    %v1102 = vsel %vm1070, %v1052, %v1086
    %v1103 = vsel %vm1071, %v1054, %v1087
    %v1104 = vpack.c.bf16 %v546, %v545
    %v1105 = vpack.c.bf16 %v1089, %v1088
    %v1106 = vpack.c.bf16 %v548, %v547
    %v1107 = vpack.c.bf16 %v1091, %v1090
    %v1108 = vpack.c.bf16 %v550, %v549
    %v1109 = vpack.c.bf16 %v1093, %v1092
    %v1110 = vpack.c.bf16 %v552, %v551
    %v1111 = vpack.c.bf16 %v1095, %v1094
    %v1112 = vpack.c.bf16 %v554, %v553
    %v1113 = vpack.c.bf16 %v1097, %v1096
    %v1114 = vpack.c.bf16 %v556, %v555
    %v1115 = vpack.c.bf16 %v1099, %v1098
    %v1116 = vpack.c.bf16 %v558, %v557
    %v1117 = vpack.c.bf16 %v1101, %v1100
    %v1118 = vpack.c.bf16 %v560, %v559
    %v1119 = vpack.c.bf16 %v1103, %v1102
    %v1120 = vld [vmem:[%s2 + $0x180] sm:$0xf]
    %v1121 = vld [vmem:[%s2 + $0x184] sm:$0xf]
    %v1122 = vld [vmem:[%s2 + $0x188] sm:$0xf]
    %v1123 = vld [vmem:[%s2 + $0x18c] sm:$0xf]
    %v1124 = vld [vmem:[%s2 + $0x190] sm:$0xf]
    %v1125 = vld [vmem:[%s2 + $0x194] sm:$0xf]
    %v1126 = vld [vmem:[%s2 + $0x198] sm:$0xf]
    %v1127 = vld [vmem:[%s2 + $0x19c] sm:$0xf]
    %v1128 = vld [vmem:[%s2 + $0x1a0] sm:$0xf]
    %v1129 = vld [vmem:[%s2 + $0x1a4] sm:$0xf]
    %v1130 = vld [vmem:[%s2 + $0x1a8] sm:$0xf]
    %v1131 = vld [vmem:[%s2 + $0x1ac] sm:$0xf]
    %v1132 = vld [vmem:[%s2 + $0x1b0] sm:$0xf]
    %v1133 = vld [vmem:[%s2 + $0x1b4] sm:$0xf]
    %v1134 = vld [vmem:[%s2 + $0x1b8] sm:$0xf]
    %v1135 = vld [vmem:[%s2 + $0x1bc] sm:$0xf]
    %v1136 = vld [vmem:[%s2 + $0x1c0] sm:$0xf]
    %v1137 = vld [vmem:[%s2 + $0x1c4] sm:$0xf]
    %v1138 = vld [vmem:[%s2 + $0x1c8] sm:$0xf]
    %v1139 = vld [vmem:[%s2 + $0x1cc] sm:$0xf]
    %v1140 = vld [vmem:[%s2 + $0x1d0] sm:$0xf]
    %v1141 = vld [vmem:[%s2 + $0x1d4] sm:$0xf]
    %v1142 = vld [vmem:[%s2 + $0x1d8] sm:$0xf]
    %v1143 = vld [vmem:[%s2 + $0x1dc] sm:$0xf]
    %v1144 = vld [vmem:[%s2 + $0x1e0] sm:$0xf]
    %v1145 = vld [vmem:[%s2 + $0x1e4] sm:$0xf]
    %v1146 = vld [vmem:[%s2 + $0x1e8] sm:$0xf]
    %v1147 = vld [vmem:[%s2 + $0x1ec] sm:$0xf]
    %v1148 = vld [vmem:[%s2 + $0x1f0] sm:$0xf]
    %v1149 = vld [vmem:[%s2 + $0x1f4] sm:$0xf]
    %v1150 = vld [vmem:[%s2 + $0x1f8] sm:$0xf]
    %v1151 = vld [vmem:[%s2 + $0x1fc] sm:$0xf]
    %v1152 = vld [vmem:[%s3 + $0x4] sm:$0x1]
    %v1153 = vperm.slane %v1152, 0
    %v1186 = vunpack.c.l.b16 %v1120
    %v1187 = vunpack.c.l.b16 %v1121
    %v1188 = vunpack.c.l.b16 %v1122
    %v1189 = vunpack.c.l.b16 %v1123
    %v1190 = vunpack.c.l.b16 %v1124
    %v1191 = vunpack.c.l.b16 %v1125
    %v1192 = vunpack.c.l.b16 %v1126
    %v1193 = vunpack.c.l.b16 %v1127
    %v1194 = vunpack.c.l.b16 %v1128
    %v1195 = vunpack.c.l.b16 %v1129
    %v1196 = vunpack.c.l.b16 %v1130
    %v1197 = vunpack.c.l.b16 %v1131
    %v1198 = vunpack.c.l.b16 %v1132
    %v1199 = vunpack.c.l.b16 %v1133
    %v1200 = vunpack.c.l.b16 %v1134
    %v1201 = vunpack.c.l.b16 %v1135
    %v1202 = vunpack.c.l.b16 %v1136
    %v1203 = vunpack.c.l.b16 %v1137
    %v1204 = vunpack.c.l.b16 %v1138
    %v1205 = vunpack.c.l.b16 %v1139
    %v1206 = vunpack.c.l.b16 %v1140
    %v1207 = vunpack.c.l.b16 %v1141
    %v1208 = vunpack.c.l.b16 %v1142
    %v1209 = vunpack.c.l.b16 %v1143
    %v1210 = vunpack.c.l.b16 %v1144
    %v1211 = vunpack.c.l.b16 %v1145
    %v1212 = vunpack.c.l.b16 %v1146
    %v1213 = vunpack.c.l.b16 %v1147
    %v1214 = vunpack.c.l.b16 %v1148
    %v1215 = vunpack.c.l.b16 %v1149
    %v1216 = vunpack.c.l.b16 %v1150
    %v1217 = vunpack.c.l.b16 %v1151
    %v1218 = vpack.c.b16 %v1187, %v1186
    %v1219 = vpack.c.b16 %v1189, %v1188
    %v1220 = vpack.c.b16 %v1191, %v1190
    %v1221 = vpack.c.b16 %v1193, %v1192
    %v1222 = vpack.c.b16 %v1195, %v1194
    %v1223 = vpack.c.b16 %v1197, %v1196
    %v1224 = vpack.c.b16 %v1199, %v1198
    %v1225 = vpack.c.b16 %v1201, %v1200
    %v1226 = vpack.c.b16 %v1203, %v1202
    %v1227 = vpack.c.b16 %v1205, %v1204
    %v1228 = vpack.c.b16 %v1207, %v1206
    %v1229 = vpack.c.b16 %v1209, %v1208
    %v1230 = vpack.c.b16 %v1211, %v1210
    %v1231 = vpack.c.b16 %v1213, %v1212
    %v1232 = vpack.c.b16 %v1215, %v1214
    %v1233 = vpack.c.b16 %v1217, %v1216
    %1250 = vmatpush.bf16.msra.mxu0 %v1225
    %1251 = vmatpush.bf16.msra.mxu0 %v1224
    %1252 = vmatpush.bf16.msra.mxu0 %v1223
    %1253 = vmatpush.bf16.msra.mxu0 %v1222
    %1254 = vmatpush.bf16.msra.mxu0 %v1221
    %1255 = vmatpush.bf16.msra.mxu0 %v1220
    %1256 = vmatpush.bf16.msra.mxu0 %v1219
    %1257 = vmatpush.bf16.msra.mxu0 %v1218
    %1258 = vmatmul.bf16.gmra.mxu0 %v1104
    %v1259 = vpop.f32.mrf.mxu0
    %v1260 = vadd.f32 %v1153, %v1259
    %v1261 = vpop.f32.mrf.mxu0
    %v1262 = vadd.f32 %v1153, %v1261
    %1263 = vmatmul.bf16.gmra.mxu0 %v1106
    %v1264 = vpop.f32.mrf.mxu0
    %v1265 = vadd.f32 %v1153, %v1264
    %v1266 = vpop.f32.mrf.mxu0
    %v1267 = vadd.f32 %v1153, %v1266
    %1268 = vmatmul.bf16.gmra.mxu0 %v1108
    %v1269 = vpop.f32.mrf.mxu0
    %v1270 = vadd.f32 %v1153, %v1269
    %v1271 = vpop.f32.mrf.mxu0
    %v1272 = vadd.f32 %v1153, %v1271
    %1273 = vmatmul.bf16.gmra.mxu0 %v1110
    %v1274 = vpop.f32.mrf.mxu0
    %v1275 = vadd.f32 %v1153, %v1274
    %v1276 = vpop.f32.mrf.mxu0
    %v1277 = vadd.f32 %v1153, %v1276
    %1278 = vmatmul.bf16.gmra.mxu0 %v1112
    %v1279 = vpop.f32.mrf.mxu0
    %v1280 = vadd.f32 %v1153, %v1279
    %v1281 = vpop.f32.mrf.mxu0
    %v1282 = vadd.f32 %v1153, %v1281
    %1283 = vmatmul.bf16.gmra.mxu0 %v1114
    %v1284 = vpop.f32.mrf.mxu0
    %v1285 = vadd.f32 %v1153, %v1284
    %v1286 = vpop.f32.mrf.mxu0
    %v1287 = vadd.f32 %v1153, %v1286
    %1288 = vmatmul.bf16.gmra.mxu0 %v1116
    %v1289 = vpop.f32.mrf.mxu0
    %v1290 = vadd.f32 %v1153, %v1289
    %v1291 = vpop.f32.mrf.mxu0
    %v1292 = vadd.f32 %v1153, %v1291
    %1293 = vmatmul.bf16.gmra.mxu0 %v1118
    %v1294 = vpop.f32.mrf.mxu0
    %v1295 = vadd.f32 %v1153, %v1294
    %v1296 = vpop.f32.mrf.mxu0
    %v1297 = vadd.f32 %v1153, %v1296
    %1298 = vdwg.mxu0
    %1299 = vmatpush.bf16.msra.mxu0 %v1233
    %1300 = vmatpush.bf16.msra.mxu0 %v1232
    %1301 = vmatpush.bf16.msra.mxu0 %v1231
    %1302 = vmatpush.bf16.msra.mxu0 %v1230
    %1303 = vmatpush.bf16.msra.mxu0 %v1229
    %1304 = vmatpush.bf16.msra.mxu0 %v1228
    %1305 = vmatpush.bf16.msra.mxu0 %v1227
    %1306 = vmatpush.bf16.msra.mxu0 %v1226
    %1307 = vmatmul.bf16.gmra.mxu0 %v1105
    %v1308 = vpop.f32.mrf.mxu0
    %v1309 = vadd.f32 %v1260, %v1308
    %v1310 = vpop.f32.mrf.mxu0
    %v1311 = vadd.f32 %v1262, %v1310
    %1312 = vmatmul.bf16.gmra.mxu0 %v1107
    %v1313 = vpop.f32.mrf.mxu0
    %v1314 = vadd.f32 %v1265, %v1313
    %v1315 = vpop.f32.mrf.mxu0
    %v1316 = vadd.f32 %v1267, %v1315
    %1317 = vmatmul.bf16.gmra.mxu0 %v1109
    %v1318 = vpop.f32.mrf.mxu0
    %v1319 = vadd.f32 %v1270, %v1318
    %v1320 = vpop.f32.mrf.mxu0
    %v1321 = vadd.f32 %v1272, %v1320
    %1322 = vmatmul.bf16.gmra.mxu0 %v1111
    %v1323 = vpop.f32.mrf.mxu0
    %v1324 = vadd.f32 %v1275, %v1323
    %v1325 = vpop.f32.mrf.mxu0
    %v1326 = vadd.f32 %v1277, %v1325
    %1327 = vmatmul.bf16.gmra.mxu0 %v1113
    %v1328 = vpop.f32.mrf.mxu0
    %v1329 = vadd.f32 %v1280, %v1328
    %v1330 = vpop.f32.mrf.mxu0
    %v1331 = vadd.f32 %v1282, %v1330
    %1332 = vmatmul.bf16.gmra.mxu0 %v1115
    %v1333 = vpop.f32.mrf.mxu0
    %v1334 = vadd.f32 %v1285, %v1333
    %v1335 = vpop.f32.mrf.mxu0
    %v1336 = vadd.f32 %v1287, %v1335
    %1337 = vmatmul.bf16.gmra.mxu0 %v1117
    %v1338 = vpop.f32.mrf.mxu0
    %v1339 = vadd.f32 %v1290, %v1338
    %v1340 = vpop.f32.mrf.mxu0
    %v1341 = vadd.f32 %v1292, %v1340
    %1342 = vmatmul.bf16.gmra.mxu0 %v1119
    %v1343 = vpop.f32.mrf.mxu0
    %v1344 = vadd.f32 %v1295, %v1343
    %v1345 = vpop.f32.mrf.mxu0
    %v1346 = vadd.f32 %v1297, %v1345
    %1347 = vdwg.mxu0
    %1348 = vst [vmem:[#allocation2] sm:$0x1] 0.0
    %1349 = vst [vmem:[#allocation2 + $0x1] sm:$0xff] %v1309
    %1350 = vst [vmem:[#allocation2 + $0x9] sm:$0xff] %v1311
    %1351 = vst [vmem:[#allocation2 + $0x11] sm:$0xff] %v1314
    %1352 = vst [vmem:[#allocation2 + $0x19] sm:$0xff] %v1316
    %1353 = vst [vmem:[#allocation2 + $0x21] sm:$0xff] %v1319
    %1354 = vst [vmem:[#allocation2 + $0x29] sm:$0xff] %v1321
    %1355 = vst [vmem:[#allocation2 + $0x31] sm:$0xff] %v1324
    %1356 = vst [vmem:[#allocation2 + $0x39] sm:$0xff] %v1326
    %1357 = vst [vmem:[#allocation2 + $0x48] sm:$0x1] 0.0
    %1358 = vst [vmem:[#allocation2 + $0x49] sm:$0xff] %v1329
    %1359 = vst [vmem:[#allocation2 + $0x51] sm:$0xff] %v1331
    %1360 = vst [vmem:[#allocation2 + $0x59] sm:$0xff] %v1334
    %1361 = vst [vmem:[#allocation2 + $0x61] sm:$0xff] %v1336
    %1362 = vst [vmem:[#allocation2 + $0x69] sm:$0xff] %v1339
    %1363 = vst [vmem:[#allocation2 + $0x71] sm:$0xff] %v1341
    %1364 = vst [vmem:[#allocation2 + $0x79] sm:$0xff] %v1344
    %1365 = vst [vmem:[#allocation2 + $0x81] sm:$0xff] %v1346
    %v1366 = vld [vmem:[%s2 + $0x200] sm:$0xf]
    %v1367 = vld [vmem:[%s2 + $0x204] sm:$0xf]
    %v1368 = vld [vmem:[%s2 + $0x208] sm:$0xf]
    %v1369 = vld [vmem:[%s2 + $0x20c] sm:$0xf]
    %v1370 = vld [vmem:[%s2 + $0x210] sm:$0xf]
    %v1371 = vld [vmem:[%s2 + $0x214] sm:$0xf]
    %v1372 = vld [vmem:[%s2 + $0x218] sm:$0xf]
    %v1373 = vld [vmem:[%s2 + $0x21c] sm:$0xf]
    %v1374 = vld [vmem:[%s2 + $0x220] sm:$0xf]
    %v1375 = vld [vmem:[%s2 + $0x224] sm:$0xf]
    %v1376 = vld [vmem:[%s2 + $0x228] sm:$0xf]
    %v1377 = vld [vmem:[%s2 + $0x22c] sm:$0xf]
    %v1378 = vld [vmem:[%s2 + $0x230] sm:$0xf]
    %v1379 = vld [vmem:[%s2 + $0x234] sm:$0xf]
    %v1380 = vld [vmem:[%s2 + $0x238] sm:$0xf]
    %v1381 = vld [vmem:[%s2 + $0x23c] sm:$0xf]
    %v1382 = vld [vmem:[%s2 + $0x240] sm:$0xf]
    %v1383 = vld [vmem:[%s2 + $0x244] sm:$0xf]
    %v1384 = vld [vmem:[%s2 + $0x248] sm:$0xf]
    %v1385 = vld [vmem:[%s2 + $0x24c] sm:$0xf]
    %v1386 = vld [vmem:[%s2 + $0x250] sm:$0xf]
    %v1387 = vld [vmem:[%s2 + $0x254] sm:$0xf]
    %v1388 = vld [vmem:[%s2 + $0x258] sm:$0xf]
    %v1389 = vld [vmem:[%s2 + $0x25c] sm:$0xf]
    %v1390 = vld [vmem:[%s2 + $0x260] sm:$0xf]
    %v1391 = vld [vmem:[%s2 + $0x264] sm:$0xf]
    %v1392 = vld [vmem:[%s2 + $0x268] sm:$0xf]
    %v1393 = vld [vmem:[%s2 + $0x26c] sm:$0xf]
    %v1394 = vld [vmem:[%s2 + $0x270] sm:$0xf]
    %v1395 = vld [vmem:[%s2 + $0x274] sm:$0xf]
    %v1396 = vld [vmem:[%s2 + $0x278] sm:$0xf]
    %v1397 = vld [vmem:[%s2 + $0x27c] sm:$0xf]
    %v1398 = vld [vmem:[%s2 + $0x280] sm:$0xf]
    %v1399 = vld [vmem:[%s2 + $0x284] sm:$0xf]
    %v1400 = vld [vmem:[%s2 + $0x288] sm:$0xf]
    %v1401 = vld [vmem:[%s2 + $0x28c] sm:$0xf]
    %v1402 = vld [vmem:[%s2 + $0x290] sm:$0xf]
    %v1403 = vld [vmem:[%s2 + $0x294] sm:$0xf]
    %v1404 = vld [vmem:[%s2 + $0x298] sm:$0xf]
    %v1405 = vld [vmem:[%s2 + $0x29c] sm:$0xf]
    %v1406 = vld [vmem:[%s2 + $0x2a0] sm:$0xf]
    %v1407 = vld [vmem:[%s2 + $0x2a4] sm:$0xf]
    %v1408 = vld [vmem:[%s2 + $0x2a8] sm:$0xf]
    %v1409 = vld [vmem:[%s2 + $0x2ac] sm:$0xf]
    %v1410 = vld [vmem:[%s2 + $0x2b0] sm:$0xf]
    %v1411 = vld [vmem:[%s2 + $0x2b4] sm:$0xf]
    %v1412 = vld [vmem:[%s2 + $0x2b8] sm:$0xf]
    %v1413 = vld [vmem:[%s2 + $0x2bc] sm:$0xf]
    %v1414 = vld [vmem:[%s3 + $0x5] sm:$0x1]
    %v1415 = vld [vmem:[#allocation2] ss:$2 sm:$0xff]
    %s1416 = scalar_lea.vmem [#allocation2], 16
    %v1417 = vld [vmem:[%s1416] ss:$2 sm:$0xff]
    %s1418 = scalar_lea.vmem [#allocation2], 32
    %v1419 = vld [vmem:[%s1418] ss:$2 sm:$0xff]
    %s1420 = scalar_lea.vmem [#allocation2], 48
    %v1421 = vld [vmem:[%s1420] ss:$2 sm:$0xff]
    %s1422 = scalar_lea.vmem [#allocation2], 1
    %v1423 = vld [vmem:[%s1422] ss:$2 sm:$0xff]
    %s1424 = scalar_lea.vmem [#allocation2], 17
    %v1425 = vld [vmem:[%s1424] ss:$2 sm:$0xff]
    %s1426 = scalar_lea.vmem [#allocation2], 33
    %v1427 = vld [vmem:[%s1426] ss:$2 sm:$0xff]
    %s1428 = scalar_lea.vmem [#allocation2], 49
    %v1429 = vld [vmem:[%s1428] ss:$2 sm:$0xff]
    %s1430 = scalar_lea.vmem [#allocation2], 2
    %v1431 = vld [vmem:[%s1430] ss:$2 sm:$0xff]
    %s1432 = scalar_lea.vmem [#allocation2], 18
    %v1433 = vld [vmem:[%s1432] ss:$2 sm:$0xff]
    %s1434 = scalar_lea.vmem [#allocation2], 34
    %v1435 = vld [vmem:[%s1434] ss:$2 sm:$0xff]
    %s1436 = scalar_lea.vmem [#allocation2], 50
    %v1437 = vld [vmem:[%s1436] ss:$2 sm:$0xff]
    %v1438 = vpack.c.bf16 %v1417, %v1415
    %v1439 = vpack.c.bf16 %v1425, %v1423
    %v1440 = vpack.c.bf16 %v1433, %v1431
    %v1441 = vpack.c.bf16 %v1421, %v1419
    %v1442 = vpack.c.bf16 %v1429, %v1427
    %v1443 = vpack.c.bf16 %v1437, %v1435
    %v1444 = vperm.slane %v1414, 0
    %v1493 = vunpack.c.l.b16 %v1366
    %v1494 = vunpack.c.l.b16 %v1367
    %v1495 = vunpack.c.l.b16 %v1368
    %v1496 = vunpack.c.l.b16 %v1369
    %v1497 = vunpack.c.l.b16 %v1370
    %v1498 = vunpack.c.l.b16 %v1371
    %v1499 = vunpack.c.l.b16 %v1372
    %v1500 = vunpack.c.l.b16 %v1373
    %v1501 = vunpack.c.l.b16 %v1374
    %v1502 = vunpack.c.l.b16 %v1375
    %v1503 = vunpack.c.l.b16 %v1376
    %v1504 = vunpack.c.l.b16 %v1377
    %v1505 = vunpack.c.l.b16 %v1378
    %v1506 = vunpack.c.l.b16 %v1379
    %v1507 = vunpack.c.l.b16 %v1380
    %v1508 = vunpack.c.l.b16 %v1381
    %v1509 = vunpack.c.l.b16 %v1382
    %v1510 = vunpack.c.l.b16 %v1383
    %v1511 = vunpack.c.l.b16 %v1384
    %v1512 = vunpack.c.l.b16 %v1385
    %v1513 = vunpack.c.l.b16 %v1386
    %v1514 = vunpack.c.l.b16 %v1387
    %v1515 = vunpack.c.l.b16 %v1388
    %v1516 = vunpack.c.l.b16 %v1389
    %v1517 = vunpack.c.l.b16 %v1390
    %v1518 = vunpack.c.l.b16 %v1391
    %v1519 = vunpack.c.l.b16 %v1392
    %v1520 = vunpack.c.l.b16 %v1393
    %v1521 = vunpack.c.l.b16 %v1394
    %v1522 = vunpack.c.l.b16 %v1395
    %v1523 = vunpack.c.l.b16 %v1396
    %v1524 = vunpack.c.l.b16 %v1397
    %v1525 = vunpack.c.l.b16 %v1398
    %v1526 = vunpack.c.l.b16 %v1399
    %v1527 = vunpack.c.l.b16 %v1400
    %v1528 = vunpack.c.l.b16 %v1401
    %v1529 = vunpack.c.l.b16 %v1402
    %v1530 = vunpack.c.l.b16 %v1403
    %v1531 = vunpack.c.l.b16 %v1404
    %v1532 = vunpack.c.l.b16 %v1405
    %v1533 = vunpack.c.l.b16 %v1406
    %v1534 = vunpack.c.l.b16 %v1407
    %v1535 = vunpack.c.l.b16 %v1408
    %v1536 = vunpack.c.l.b16 %v1409
    %v1537 = vunpack.c.l.b16 %v1410
    %v1538 = vunpack.c.l.b16 %v1411
    %v1539 = vunpack.c.l.b16 %v1412
    %v1540 = vunpack.c.l.b16 %v1413
    %v1541 = vpack.c.b16 %v1494, %v1493
    %v1542 = vpack.c.b16 %v1496, %v1495
    %v1543 = vpack.c.b16 %v1498, %v1497
    %v1544 = vpack.c.b16 %v1500, %v1499
    %v1545 = vpack.c.b16 %v1502, %v1501
    %v1546 = vpack.c.b16 %v1504, %v1503
    %v1547 = vpack.c.b16 %v1506, %v1505
    %v1548 = vpack.c.b16 %v1508, %v1507
    %v1549 = vpack.c.b16 %v1510, %v1509
    %v1550 = vpack.c.b16 %v1512, %v1511
    %v1551 = vpack.c.b16 %v1514, %v1513
    %v1552 = vpack.c.b16 %v1516, %v1515
    %v1553 = vpack.c.b16 %v1518, %v1517
    %v1554 = vpack.c.b16 %v1520, %v1519
    %v1555 = vpack.c.b16 %v1522, %v1521
    %v1556 = vpack.c.b16 %v1524, %v1523
    %v1557 = vpack.c.b16 %v1526, %v1525
    %v1558 = vpack.c.b16 %v1528, %v1527
    %v1559 = vpack.c.b16 %v1530, %v1529
    %v1560 = vpack.c.b16 %v1532, %v1531
    %v1561 = vpack.c.b16 %v1534, %v1533
    %v1562 = vpack.c.b16 %v1536, %v1535
    %v1563 = vpack.c.b16 %v1538, %v1537
    %v1564 = vpack.c.b16 %v1540, %v1539
    %1589 = vmatpush.bf16.msra.mxu0 %v1548
    %1590 = vmatpush.bf16.msra.mxu0 %v1547
    %1591 = vmatpush.bf16.msra.mxu0 %v1546
    %1592 = vmatpush.bf16.msra.mxu0 %v1545
    %1593 = vmatpush.bf16.msra.mxu0 %v1544
    %1594 = vmatpush.bf16.msra.mxu0 %v1543
    %1595 = vmatpush.bf16.msra.mxu0 %v1542
    %1596 = vmatpush.bf16.msra.mxu0 %v1541
    %1597 = vmatmul.bf16.gmra.mxu0 %v1438
    %v1598 = vpop.f32.mrf.mxu0
    %v1599 = vadd.f32 %v1444, %v1598
    %v1600 = vpop.f32.mrf.mxu0
    %v1601 = vadd.f32 %v1444, %v1600
    %1602 = vmatmul.bf16.gmra.mxu0 %v1441
    %v1603 = vpop.f32.mrf.mxu0
    %v1604 = vadd.f32 %v1444, %v1603
    %v1605 = vpop.f32.mrf.mxu0
    %v1606 = vadd.f32 %v1444, %v1605
    %1607 = vdwg.mxu0
    %1608 = vmatpush.bf16.msra.mxu0 %v1556
    %1609 = vmatpush.bf16.msra.mxu0 %v1555
    %1610 = vmatpush.bf16.msra.mxu0 %v1554
    %1611 = vmatpush.bf16.msra.mxu0 %v1553
    %1612 = vmatpush.bf16.msra.mxu0 %v1552
    %1613 = vmatpush.bf16.msra.mxu0 %v1551
    %1614 = vmatpush.bf16.msra.mxu0 %v1550
    %1615 = vmatpush.bf16.msra.mxu0 %v1549
    %1616 = vmatmul.bf16.gmra.mxu0 %v1439
    %v1617 = vpop.f32.mrf.mxu0
    %v1618 = vadd.f32 %v1599, %v1617
    %v1619 = vpop.f32.mrf.mxu0
    %v1620 = vadd.f32 %v1601, %v1619
    %1621 = vmatmul.bf16.gmra.mxu0 %v1442
    %v1622 = vpop.f32.mrf.mxu0
    %v1623 = vadd.f32 %v1604, %v1622
    %v1624 = vpop.f32.mrf.mxu0
    %v1625 = vadd.f32 %v1606, %v1624
    %1626 = vdwg.mxu0
    %1627 = vmatpush.bf16.msra.mxu0 %v1564
    %1628 = vmatpush.bf16.msra.mxu0 %v1563
    %1629 = vmatpush.bf16.msra.mxu0 %v1562
    %1630 = vmatpush.bf16.msra.mxu0 %v1561
    %1631 = vmatpush.bf16.msra.mxu0 %v1560
    %1632 = vmatpush.bf16.msra.mxu0 %v1559
    %1633 = vmatpush.bf16.msra.mxu0 %v1558
    %1634 = vmatpush.bf16.msra.mxu0 %v1557
    %1635 = vmatmul.bf16.gmra.mxu0 %v1440
    %v1636 = vpop.f32.mrf.mxu0
    %v1637 = vadd.f32 %v1618, %v1636
    %v1638 = vpop.f32.mrf.mxu0
    %v1639 = vadd.f32 %v1620, %v1638
    %1640 = vmatmul.bf16.gmra.mxu0 %v1443
    %v1641 = vpop.f32.mrf.mxu0
    %v1642 = vadd.f32 %v1623, %v1641
    %v1643 = vpop.f32.mrf.mxu0
    %v1644 = vadd.f32 %v1625, %v1643
    %1645 = vdwg.mxu0
    %vm1646 = vcmp.gt.f32.partialorder %v1637, 0.0
    %vm1647 = vcmp.gt.f32.partialorder %v1639, 0.0
    %vm1648 = vcmp.gt.f32.partialorder %v1642, 0.0
    %vm1649 = vcmp.gt.f32.partialorder %v1644, 0.0
    %v1650 = vmul.f32 %v1637, 0.2
    %v1651 = vmul.f32 %v1639, 0.2
    %v1652 = vmul.f32 %v1642, 0.2
    %v1653 = vmul.f32 %v1644, 0.2
    %v1654 = vsel %vm1646, %v1637, %v1650
    %v1655 = vsel %vm1647, %v1639, %v1651
    %v1656 = vsel %vm1648, %v1642, %v1652
    %v1657 = vsel %vm1649, %v1644, %v1653
    %1658 = vst [vmem:[#allocation2 + $0x1] sm:$0xff] %v1654
    %1659 = vst [vmem:[#allocation2 + $0x9] sm:$0xff] %v1655
    %1660 = vst [vmem:[#allocation2 + $0x11] sm:$0xff] %v1656
    %1661 = vst [vmem:[#allocation2 + $0x19] sm:$0xff] %v1657
    %s1662 = scalar_lea.vmem [#allocation2], 72
    %v1663 = vld [vmem:[%s1662] ss:$2 sm:$0xff]
    %s1664 = scalar_lea.vmem [#allocation2], 88
    %v1665 = vld [vmem:[%s1664] ss:$2 sm:$0xff]
    %s1666 = scalar_lea.vmem [#allocation2], 104
    %v1667 = vld [vmem:[%s1666] ss:$2 sm:$0xff]
    %s1668 = scalar_lea.vmem [#allocation2], 120
    %v1669 = vld [vmem:[%s1668] ss:$2 sm:$0xff]
    %s1670 = scalar_lea.vmem [#allocation2], 73
    %v1671 = vld [vmem:[%s1670] ss:$2 sm:$0xff]
    %s1672 = scalar_lea.vmem [#allocation2], 89
    %v1673 = vld [vmem:[%s1672] ss:$2 sm:$0xff]
    %s1674 = scalar_lea.vmem [#allocation2], 105
    %v1675 = vld [vmem:[%s1674] ss:$2 sm:$0xff]
    %s1676 = scalar_lea.vmem [#allocation2], 121
    %v1677 = vld [vmem:[%s1676] ss:$2 sm:$0xff]
    %s1678 = scalar_lea.vmem [#allocation2], 74
    %v1679 = vld [vmem:[%s1678] ss:$2 sm:$0xff]
    %s1680 = scalar_lea.vmem [#allocation2], 90
    %v1681 = vld [vmem:[%s1680] ss:$2 sm:$0xff]
    %s1682 = scalar_lea.vmem [#allocation2], 106
    %v1683 = vld [vmem:[%s1682] ss:$2 sm:$0xff]
    %s1684 = scalar_lea.vmem [#allocation2], 122
    %v1685 = vld [vmem:[%s1684] ss:$2 sm:$0xff]
    %v1686 = vpack.c.bf16 %v1665, %v1663
    %v1687 = vpack.c.bf16 %v1673, %v1671
    %v1688 = vpack.c.bf16 %v1681, %v1679
    %v1689 = vpack.c.bf16 %v1669, %v1667
    %v1690 = vpack.c.bf16 %v1677, %v1675
    %v1691 = vpack.c.bf16 %v1685, %v1683
    %1692 = vmatpush.bf16.msra.mxu0 %v1548
    %1693 = vmatpush.bf16.msra.mxu0 %v1547
    %1694 = vmatpush.bf16.msra.mxu0 %v1546
    %1695 = vmatpush.bf16.msra.mxu0 %v1545
    %1696 = vmatpush.bf16.msra.mxu0 %v1544
    %1697 = vmatpush.bf16.msra.mxu0 %v1543
    %1698 = vmatpush.bf16.msra.mxu0 %v1542
    %1699 = vmatpush.bf16.msra.mxu0 %v1541
    %1700 = vmatmul.bf16.gmra.mxu0 %v1686
    %v1701 = vpop.f32.mrf.mxu0
    %v1702 = vadd.f32 %v1444, %v1701
    %v1703 = vpop.f32.mrf.mxu0
    %v1704 = vadd.f32 %v1444, %v1703
    %1705 = vmatmul.bf16.gmra.mxu0 %v1689
    %v1706 = vpop.f32.mrf.mxu0
    %v1707 = vadd.f32 %v1444, %v1706
    %v1708 = vpop.f32.mrf.mxu0
    %v1709 = vadd.f32 %v1444, %v1708
    %1710 = vdwg.mxu0
    %1711 = vmatpush.bf16.msra.mxu0 %v1556
    %1712 = vmatpush.bf16.msra.mxu0 %v1555
    %1713 = vmatpush.bf16.msra.mxu0 %v1554
    %1714 = vmatpush.bf16.msra.mxu0 %v1553
    %1715 = vmatpush.bf16.msra.mxu0 %v1552
    %1716 = vmatpush.bf16.msra.mxu0 %v1551
    %1717 = vmatpush.bf16.msra.mxu0 %v1550
    %1718 = vmatpush.bf16.msra.mxu0 %v1549
    %1719 = vmatmul.bf16.gmra.mxu0 %v1687
    %v1720 = vpop.f32.mrf.mxu0
    %v1721 = vadd.f32 %v1702, %v1720
    %v1722 = vpop.f32.mrf.mxu0
    %v1723 = vadd.f32 %v1704, %v1722
    %1724 = vmatmul.bf16.gmra.mxu0 %v1690
    %v1725 = vpop.f32.mrf.mxu0
    %v1726 = vadd.f32 %v1707, %v1725
    %v1727 = vpop.f32.mrf.mxu0
    %v1728 = vadd.f32 %v1709, %v1727
    %1729 = vdwg.mxu0
    %1730 = vmatpush.bf16.msra.mxu0 %v1564
    %1731 = vmatpush.bf16.msra.mxu0 %v1563
    %1732 = vmatpush.bf16.msra.mxu0 %v1562
    %1733 = vmatpush.bf16.msra.mxu0 %v1561
    %1734 = vmatpush.bf16.msra.mxu0 %v1560
    %1735 = vmatpush.bf16.msra.mxu0 %v1559
    %1736 = vmatpush.bf16.msra.mxu0 %v1558
    %1737 = vmatpush.bf16.msra.mxu0 %v1557
    %1738 = vmatmul.bf16.gmra.mxu0 %v1688
    %v1739 = vpop.f32.mrf.mxu0
    %v1740 = vadd.f32 %v1721, %v1739
    %v1741 = vpop.f32.mrf.mxu0
    %v1742 = vadd.f32 %v1723, %v1741
    %1743 = vmatmul.bf16.gmra.mxu0 %v1691
    %v1744 = vpop.f32.mrf.mxu0
    %v1745 = vadd.f32 %v1726, %v1744
    %v1746 = vpop.f32.mrf.mxu0
    %v1747 = vadd.f32 %v1728, %v1746
    %1748 = vdwg.mxu0
    %vm1749 = vcmp.gt.f32.partialorder %v1740, 0.0
    %vm1750 = vcmp.gt.f32.partialorder %v1742, 0.0
    %vm1751 = vcmp.gt.f32.partialorder %v1745, 0.0
    %vm1752 = vcmp.gt.f32.partialorder %v1747, 0.0
    %v1753 = vmul.f32 %v1740, 0.2
    %v1754 = vmul.f32 %v1742, 0.2
    %v1755 = vmul.f32 %v1745, 0.2
    %v1756 = vmul.f32 %v1747, 0.2
    %v1757 = vsel %vm1749, %v1740, %v1753
    %v1758 = vsel %vm1750, %v1742, %v1754
    %v1759 = vsel %vm1751, %v1745, %v1755
    %v1760 = vsel %vm1752, %v1747, %v1756
    %1761 = vst [vmem:[#allocation2 + $0x49] sm:$0xff] %v1757
    %1762 = vst [vmem:[#allocation2 + $0x51] sm:$0xff] %v1758
    %1763 = vst [vmem:[#allocation2 + $0x59] sm:$0xff] %v1759
    %1764 = vst [vmem:[#allocation2 + $0x61] sm:$0xff] %v1760
    %v1765 = vld [vmem:[%s2 + $0x2c0] sm:$0xf]
    %v1766 = vld [vmem:[%s2 + $0x2c4] sm:$0xf]
    %v1767 = vld [vmem:[%s2 + $0x2c8] sm:$0xf]
    %v1768 = vld [vmem:[%s2 + $0x2cc] sm:$0xf]
    %v1769 = vld [vmem:[%s2 + $0x2d0] sm:$0xf]
    %v1770 = vld [vmem:[%s2 + $0x2d4] sm:$0xf]
    %v1771 = vld [vmem:[%s2 + $0x2d8] sm:$0xf]
    %v1772 = vld [vmem:[%s2 + $0x2dc] sm:$0xf]
    %v1773 = vld [vmem:[%s2 + $0x2e0] sm:$0xf]
    %v1774 = vld [vmem:[%s2 + $0x2e4] sm:$0xf]
    %v1775 = vld [vmem:[%s2 + $0x2e8] sm:$0xf]
    %v1776 = vld [vmem:[%s2 + $0x2ec] sm:$0xf]
    %v1777 = vld [vmem:[%s2 + $0x2f0] sm:$0xf]
    %v1778 = vld [vmem:[%s2 + $0x2f4] sm:$0xf]
    %v1779 = vld [vmem:[%s2 + $0x2f8] sm:$0xf]
    %v1780 = vld [vmem:[%s2 + $0x2fc] sm:$0xf]
    %v1781 = vld [vmem:[%s2 + $0x300] sm:$0xf]
    %v1782 = vld [vmem:[%s2 + $0x304] sm:$0xf]
    %v1783 = vld [vmem:[%s2 + $0x308] sm:$0xf]
    %v1784 = vld [vmem:[%s2 + $0x30c] sm:$0xf]
    %v1785 = vld [vmem:[%s2 + $0x310] sm:$0xf]
    %v1786 = vld [vmem:[%s2 + $0x314] sm:$0xf]
    %v1787 = vld [vmem:[%s2 + $0x318] sm:$0xf]
    %v1788 = vld [vmem:[%s2 + $0x31c] sm:$0xf]
    %v1789 = vld [vmem:[%s2 + $0x320] sm:$0xf]
    %v1790 = vld [vmem:[%s2 + $0x324] sm:$0xf]
    %v1791 = vld [vmem:[%s2 + $0x328] sm:$0xf]
    %v1792 = vld [vmem:[%s2 + $0x32c] sm:$0xf]
    %v1793 = vld [vmem:[%s2 + $0x330] sm:$0xf]
    %v1794 = vld [vmem:[%s2 + $0x334] sm:$0xf]
    %v1795 = vld [vmem:[%s2 + $0x338] sm:$0xf]
    %v1796 = vld [vmem:[%s2 + $0x33c] sm:$0xf]
    %v1797 = vld [vmem:[%s2 + $0x340] sm:$0xf]
    %v1798 = vld [vmem:[%s2 + $0x344] sm:$0xf]
    %v1799 = vld [vmem:[%s2 + $0x348] sm:$0xf]
    %v1800 = vld [vmem:[%s2 + $0x34c] sm:$0xf]
    %v1801 = vld [vmem:[%s2 + $0x350] sm:$0xf]
    %v1802 = vld [vmem:[%s2 + $0x354] sm:$0xf]
    %v1803 = vld [vmem:[%s2 + $0x358] sm:$0xf]
    %v1804 = vld [vmem:[%s2 + $0x35c] sm:$0xf]
    %v1805 = vld [vmem:[%s2 + $0x360] sm:$0xf]
    %v1806 = vld [vmem:[%s2 + $0x364] sm:$0xf]
    %v1807 = vld [vmem:[%s2 + $0x368] sm:$0xf]
    %v1808 = vld [vmem:[%s2 + $0x36c] sm:$0xf]
    %v1809 = vld [vmem:[%s2 + $0x370] sm:$0xf]
    %v1810 = vld [vmem:[%s2 + $0x374] sm:$0xf]
    %v1811 = vld [vmem:[%s2 + $0x378] sm:$0xf]
    %v1812 = vld [vmem:[%s2 + $0x37c] sm:$0xf]
    %v1813 = vld [vmem:[%s3 + $0x6] sm:$0x1]
    %v1814 = vld [vmem:[#allocation2] ss:$2 sm:$0xff]
    %v1815 = vld [vmem:[%s1416] ss:$2 sm:$0xff]
    %v1816 = vld [vmem:[%s1422] ss:$2 sm:$0xff]
    %v1817 = vld [vmem:[%s1424] ss:$2 sm:$0xff]
    %v1818 = vld [vmem:[%s1430] ss:$2 sm:$0xff]
    %v1819 = vld [vmem:[%s1432] ss:$2 sm:$0xff]
    %v1820 = vpack.c.bf16 %v1815, %v1814
    %v1821 = vpack.c.bf16 %v1817, %v1816
    %v1822 = vpack.c.bf16 %v1819, %v1818
    %v1823 = vperm.slane %v1813, 0
    %v1872 = vunpack.c.l.b16 %v1765
    %v1873 = vunpack.c.l.b16 %v1766
    %v1874 = vunpack.c.l.b16 %v1767
    %v1875 = vunpack.c.l.b16 %v1768
    %v1876 = vunpack.c.l.b16 %v1769
    %v1877 = vunpack.c.l.b16 %v1770
    %v1878 = vunpack.c.l.b16 %v1771
    %v1879 = vunpack.c.l.b16 %v1772
    %v1880 = vunpack.c.l.b16 %v1773
    %v1881 = vunpack.c.l.b16 %v1774
    %v1882 = vunpack.c.l.b16 %v1775
    %v1883 = vunpack.c.l.b16 %v1776
    %v1884 = vunpack.c.l.b16 %v1777
    %v1885 = vunpack.c.l.b16 %v1778
    %v1886 = vunpack.c.l.b16 %v1779
    %v1887 = vunpack.c.l.b16 %v1780
    %v1888 = vunpack.c.l.b16 %v1781
    %v1889 = vunpack.c.l.b16 %v1782
    %v1890 = vunpack.c.l.b16 %v1783
    %v1891 = vunpack.c.l.b16 %v1784
    %v1892 = vunpack.c.l.b16 %v1785
    %v1893 = vunpack.c.l.b16 %v1786
    %v1894 = vunpack.c.l.b16 %v1787
    %v1895 = vunpack.c.l.b16 %v1788
    %v1896 = vunpack.c.l.b16 %v1789
    %v1897 = vunpack.c.l.b16 %v1790
    %v1898 = vunpack.c.l.b16 %v1791
    %v1899 = vunpack.c.l.b16 %v1792
    %v1900 = vunpack.c.l.b16 %v1793
    %v1901 = vunpack.c.l.b16 %v1794
    %v1902 = vunpack.c.l.b16 %v1795
    %v1903 = vunpack.c.l.b16 %v1796
    %v1904 = vunpack.c.l.b16 %v1797
    %v1905 = vunpack.c.l.b16 %v1798
    %v1906 = vunpack.c.l.b16 %v1799
    %v1907 = vunpack.c.l.b16 %v1800
    %v1908 = vunpack.c.l.b16 %v1801
    %v1909 = vunpack.c.l.b16 %v1802
    %v1910 = vunpack.c.l.b16 %v1803
    %v1911 = vunpack.c.l.b16 %v1804
    %v1912 = vunpack.c.l.b16 %v1805
    %v1913 = vunpack.c.l.b16 %v1806
    %v1914 = vunpack.c.l.b16 %v1807
    %v1915 = vunpack.c.l.b16 %v1808
    %v1916 = vunpack.c.l.b16 %v1809
    %v1917 = vunpack.c.l.b16 %v1810
    %v1918 = vunpack.c.l.b16 %v1811
    %v1919 = vunpack.c.l.b16 %v1812
    %v1920 = vpack.c.b16 %v1873, %v1872
    %v1921 = vpack.c.b16 %v1875, %v1874
    %v1922 = vpack.c.b16 %v1877, %v1876
    %v1923 = vpack.c.b16 %v1879, %v1878
    %v1924 = vpack.c.b16 %v1881, %v1880
    %v1925 = vpack.c.b16 %v1883, %v1882
    %v1926 = vpack.c.b16 %v1885, %v1884
    %v1927 = vpack.c.b16 %v1887, %v1886
    %v1928 = vpack.c.b16 %v1889, %v1888
    %v1929 = vpack.c.b16 %v1891, %v1890
    %v1930 = vpack.c.b16 %v1893, %v1892
    %v1931 = vpack.c.b16 %v1895, %v1894
    %v1932 = vpack.c.b16 %v1897, %v1896
    %v1933 = vpack.c.b16 %v1899, %v1898
    %v1934 = vpack.c.b16 %v1901, %v1900
    %v1935 = vpack.c.b16 %v1903, %v1902
    %v1936 = vpack.c.b16 %v1905, %v1904
    %v1937 = vpack.c.b16 %v1907, %v1906
    %v1938 = vpack.c.b16 %v1909, %v1908
    %v1939 = vpack.c.b16 %v1911, %v1910
    %v1940 = vpack.c.b16 %v1913, %v1912
    %v1941 = vpack.c.b16 %v1915, %v1914
    %v1942 = vpack.c.b16 %v1917, %v1916
    %v1943 = vpack.c.b16 %v1919, %v1918
    %1968 = vmatpush.bf16.msra.mxu0 %v1927
    %1969 = vmatpush.bf16.msra.mxu0 %v1926
    %1970 = vmatpush.bf16.msra.mxu0 %v1925
    %1971 = vmatpush.bf16.msra.mxu0 %v1924
    %1972 = vmatpush.bf16.msra.mxu0 %v1923
    %1973 = vmatpush.bf16.msra.mxu0 %v1922
    %1974 = vmatpush.bf16.msra.mxu0 %v1921
    %1975 = vmatpush.bf16.msra.mxu0 %v1920
    %1976 = vmatmul.bf16.gmra.mxu0 %v1820
    %v1977 = vpop.f32.mrf.mxu0
    %v1978 = vadd.f32 %v1823, %v1977
    %v1979 = vpop.f32.mrf.mxu0
    %v1980 = vadd.f32 %v1823, %v1979
    %1981 = vdwg.mxu0
    %1982 = vmatpush.bf16.msra.mxu0 %v1935
    %1983 = vmatpush.bf16.msra.mxu0 %v1934
    %1984 = vmatpush.bf16.msra.mxu0 %v1933
    %1985 = vmatpush.bf16.msra.mxu0 %v1932
    %1986 = vmatpush.bf16.msra.mxu0 %v1931
    %1987 = vmatpush.bf16.msra.mxu0 %v1930
    %1988 = vmatpush.bf16.msra.mxu0 %v1929
    %1989 = vmatpush.bf16.msra.mxu0 %v1928
    %1990 = vmatmul.bf16.gmra.mxu0 %v1821
    %v1991 = vpop.f32.mrf.mxu0
    %v1992 = vadd.f32 %v1978, %v1991
    %v1993 = vpop.f32.mrf.mxu0
    %v1994 = vadd.f32 %v1980, %v1993
    %1995 = vdwg.mxu0
    %1996 = vmatpush.bf16.msra.mxu0 %v1943
    %1997 = vmatpush.bf16.msra.mxu0 %v1942
    %1998 = vmatpush.bf16.msra.mxu0 %v1941
    %1999 = vmatpush.bf16.msra.mxu0 %v1940
    %2000 = vmatpush.bf16.msra.mxu0 %v1939
    %2001 = vmatpush.bf16.msra.mxu0 %v1938
    %2002 = vmatpush.bf16.msra.mxu0 %v1937
    %2003 = vmatpush.bf16.msra.mxu0 %v1936
    %2004 = vmatmul.bf16.gmra.mxu0 %v1822
    %v2005 = vpop.f32.mrf.mxu0
    %v2006 = vadd.f32 %v1992, %v2005
    %v2007 = vpop.f32.mrf.mxu0
    %v2008 = vadd.f32 %v1994, %v2007
    %2009 = vdwg.mxu0
    %vm2010 = vcmp.gt.f32.partialorder %v2006, 0.0
    %vm2011 = vcmp.gt.f32.partialorder %v2008, 0.0
    %v2012 = vmul.f32 %v2006, 0.2
    %v2013 = vmul.f32 %v2008, 0.2
    %v2014 = vsel %vm2010, %v2006, %v2012
    %v2015 = vsel %vm2011, %v2008, %v2013
    %2016 = vst [vmem:[#allocation2 + $0x1] sm:$0xff] %v2014
    %2017 = vst [vmem:[#allocation2 + $0x9] sm:$0xff] %v2015
    %v2018 = vld [vmem:[%s1662] ss:$2 sm:$0xff]
    %v2019 = vld [vmem:[%s1664] ss:$2 sm:$0xff]
    %v2020 = vld [vmem:[%s1670] ss:$2 sm:$0xff]
    %v2021 = vld [vmem:[%s1672] ss:$2 sm:$0xff]
    %v2022 = vld [vmem:[%s1678] ss:$2 sm:$0xff]
    %v2023 = vld [vmem:[%s1680] ss:$2 sm:$0xff]
    %v2024 = vpack.c.bf16 %v2019, %v2018
    %v2025 = vpack.c.bf16 %v2021, %v2020
    %v2026 = vpack.c.bf16 %v2023, %v2022
    %2027 = vmatpush.bf16.msra.mxu0 %v1927
    %2028 = vmatpush.bf16.msra.mxu0 %v1926
    %2029 = vmatpush.bf16.msra.mxu0 %v1925
    %2030 = vmatpush.bf16.msra.mxu0 %v1924
    %2031 = vmatpush.bf16.msra.mxu0 %v1923
    %2032 = vmatpush.bf16.msra.mxu0 %v1922
    %2033 = vmatpush.bf16.msra.mxu0 %v1921
    %2034 = vmatpush.bf16.msra.mxu0 %v1920
    %2035 = vmatmul.bf16.gmra.mxu0 %v2024
    %v2036 = vpop.f32.mrf.mxu0
    %v2037 = vadd.f32 %v1823, %v2036
    %v2038 = vpop.f32.mrf.mxu0
    %v2039 = vadd.f32 %v1823, %v2038
    %2040 = vdwg.mxu0
    %2041 = vmatpush.bf16.msra.mxu0 %v1935
    %2042 = vmatpush.bf16.msra.mxu0 %v1934
    %2043 = vmatpush.bf16.msra.mxu0 %v1933
    %2044 = vmatpush.bf16.msra.mxu0 %v1932
    %2045 = vmatpush.bf16.msra.mxu0 %v1931
    %2046 = vmatpush.bf16.msra.mxu0 %v1930
    %2047 = vmatpush.bf16.msra.mxu0 %v1929
    %2048 = vmatpush.bf16.msra.mxu0 %v1928
    %2049 = vmatmul.bf16.gmra.mxu0 %v2025
    %v2050 = vpop.f32.mrf.mxu0
    %v2051 = vadd.f32 %v2037, %v2050
    %v2052 = vpop.f32.mrf.mxu0
    %v2053 = vadd.f32 %v2039, %v2052
    %2054 = vdwg.mxu0
    %2055 = vmatpush.bf16.msra.mxu0 %v1943
    %2056 = vmatpush.bf16.msra.mxu0 %v1942
    %2057 = vmatpush.bf16.msra.mxu0 %v1941
    %2058 = vmatpush.bf16.msra.mxu0 %v1940
    %2059 = vmatpush.bf16.msra.mxu0 %v1939
    %2060 = vmatpush.bf16.msra.mxu0 %v1938
    %2061 = vmatpush.bf16.msra.mxu0 %v1937
    %2062 = vmatpush.bf16.msra.mxu0 %v1936
    %2063 = vmatmul.bf16.gmra.mxu0 %v2026
    %v2064 = vpop.f32.mrf.mxu0
    %v2065 = vadd.f32 %v2051, %v2064
    %v2066 = vpop.f32.mrf.mxu0
    %v2067 = vadd.f32 %v2053, %v2066
    %2068 = vdwg.mxu0
    %vm2069 = vcmp.gt.f32.partialorder %v2065, 0.0
    %vm2070 = vcmp.gt.f32.partialorder %v2067, 0.0
    %v2071 = vmul.f32 %v2065, 0.2
    %v2072 = vmul.f32 %v2067, 0.2
    %v2073 = vsel %vm2069, %v2065, %v2071
    %v2074 = vsel %vm2070, %v2067, %v2072
    %2075 = vst [vmem:[#allocation2 + $0x49] sm:$0xff] %v2073
    %2076 = vst [vmem:[#allocation2 + $0x51] sm:$0xff] %v2074
    %v2077 = vld [vmem:[%s2 + $0x380] sm:$0xf]
    %v2078 = vld [vmem:[%s2 + $0x384] sm:$0xf]
    %v2079 = vld [vmem:[%s2 + $0x388] sm:$0xf]
    %v2080 = vld [vmem:[%s2 + $0x38c] sm:$0xf]
    %v2081 = vld [vmem:[%s2 + $0x390] sm:$0xf]
    %v2082 = vld [vmem:[%s2 + $0x394] sm:$0xf]
    %v2083 = vld [vmem:[%s2 + $0x398] sm:$0xf]
    %v2084 = vld [vmem:[%s2 + $0x39c] sm:$0xf]
    %v2085 = vld [vmem:[%s2 + $0x3a0] sm:$0xf]
    %v2086 = vld [vmem:[%s2 + $0x3a4] sm:$0xf]
    %v2087 = vld [vmem:[%s2 + $0x3a8] sm:$0xf]
    %v2088 = vld [vmem:[%s2 + $0x3ac] sm:$0xf]
    %v2089 = vld [vmem:[%s2 + $0x3b0] sm:$0xf]
    %v2090 = vld [vmem:[%s2 + $0x3b4] sm:$0xf]
    %v2091 = vld [vmem:[%s2 + $0x3b8] sm:$0xf]
    %v2092 = vld [vmem:[%s2 + $0x3bc] sm:$0xf]
    %v2093 = vld [vmem:[%s2 + $0x3c0] sm:$0xf]
    %v2094 = vld [vmem:[%s2 + $0x3c4] sm:$0xf]
    %v2095 = vld [vmem:[%s2 + $0x3c8] sm:$0xf]
    %v2096 = vld [vmem:[%s2 + $0x3cc] sm:$0xf]
    %v2097 = vld [vmem:[%s2 + $0x3d0] sm:$0xf]
    %v2098 = vld [vmem:[%s2 + $0x3d4] sm:$0xf]
    %v2099 = vld [vmem:[%s2 + $0x3d8] sm:$0xf]
    %v2100 = vld [vmem:[%s2 + $0x3dc] sm:$0xf]
    %v2101 = vld [vmem:[%s2 + $0x3e0] sm:$0xf]
    %v2102 = vld [vmem:[%s2 + $0x3e4] sm:$0xf]
    %v2103 = vld [vmem:[%s2 + $0x3e8] sm:$0xf]
    %v2104 = vld [vmem:[%s2 + $0x3ec] sm:$0xf]
    %v2105 = vld [vmem:[%s2 + $0x3f0] sm:$0xf]
    %v2106 = vld [vmem:[%s2 + $0x3f4] sm:$0xf]
    %v2107 = vld [vmem:[%s2 + $0x3f8] sm:$0xf]
    %v2108 = vld [vmem:[%s2 + $0x3fc] sm:$0xf]
    %v2109 = vld [vmem:[%s2 + $0x400] sm:$0xf]
    %v2110 = vld [vmem:[%s2 + $0x404] sm:$0xf]
    %v2111 = vld [vmem:[%s2 + $0x408] sm:$0xf]
    %v2112 = vld [vmem:[%s2 + $0x40c] sm:$0xf]
    %v2113 = vld [vmem:[%s2 + $0x410] sm:$0xf]
    %v2114 = vld [vmem:[%s2 + $0x414] sm:$0xf]
    %v2115 = vld [vmem:[%s2 + $0x418] sm:$0xf]
    %v2116 = vld [vmem:[%s2 + $0x41c] sm:$0xf]
    %v2117 = vld [vmem:[%s2 + $0x420] sm:$0xf]
    %v2118 = vld [vmem:[%s2 + $0x424] sm:$0xf]
    %v2119 = vld [vmem:[%s2 + $0x428] sm:$0xf]
    %v2120 = vld [vmem:[%s2 + $0x42c] sm:$0xf]
    %v2121 = vld [vmem:[%s2 + $0x430] sm:$0xf]
    %v2122 = vld [vmem:[%s2 + $0x434] sm:$0xf]
    %v2123 = vld [vmem:[%s2 + $0x438] sm:$0xf]
    %v2124 = vld [vmem:[%s2 + $0x43c] sm:$0xf]
    %v2125 = vld [vmem:[%s3 + $0x7] sm:$0x1]
    %v2126 = vld [vmem:[#allocation2] ss:$2 sm:$0xff]
    %v2127 = vld [vmem:[%s1422] ss:$2 sm:$0xff]
    %v2128 = vld [vmem:[%s1430] ss:$2 sm:$0xff]
    %v2129 = vpack.c.bf16 %v2126, %v2126
    %v2130 = vpack.c.bf16 %v2127, %v2127
    %v2131 = vpack.c.bf16 %v2128, %v2128
    %v2132 = vperm.slane %v2125, 0
    %v2181 = vunpack.c.l.b16 %v2077
    %v2182 = vunpack.c.l.b16 %v2078
    %v2183 = vunpack.c.l.b16 %v2079
    %v2184 = vunpack.c.l.b16 %v2080
    %v2185 = vunpack.c.l.b16 %v2081
    %v2186 = vunpack.c.l.b16 %v2082
    %v2187 = vunpack.c.l.b16 %v2083
    %v2188 = vunpack.c.l.b16 %v2084
    %v2189 = vunpack.c.l.b16 %v2085
    %v2190 = vunpack.c.l.b16 %v2086
    %v2191 = vunpack.c.l.b16 %v2087
    %v2192 = vunpack.c.l.b16 %v2088
    %v2193 = vunpack.c.l.b16 %v2089
    %v2194 = vunpack.c.l.b16 %v2090
    %v2195 = vunpack.c.l.b16 %v2091
    %v2196 = vunpack.c.l.b16 %v2092
    %v2197 = vunpack.c.l.b16 %v2093
    %v2198 = vunpack.c.l.b16 %v2094
    %v2199 = vunpack.c.l.b16 %v2095
    %v2200 = vunpack.c.l.b16 %v2096
    %v2201 = vunpack.c.l.b16 %v2097
    %v2202 = vunpack.c.l.b16 %v2098
    %v2203 = vunpack.c.l.b16 %v2099
    %v2204 = vunpack.c.l.b16 %v2100
    %v2205 = vunpack.c.l.b16 %v2101
    %v2206 = vunpack.c.l.b16 %v2102
    %v2207 = vunpack.c.l.b16 %v2103
    %v2208 = vunpack.c.l.b16 %v2104
    %v2209 = vunpack.c.l.b16 %v2105
    %v2210 = vunpack.c.l.b16 %v2106
    %v2211 = vunpack.c.l.b16 %v2107
    %v2212 = vunpack.c.l.b16 %v2108
    %v2213 = vunpack.c.l.b16 %v2109
    %v2214 = vunpack.c.l.b16 %v2110
    %v2215 = vunpack.c.l.b16 %v2111
    %v2216 = vunpack.c.l.b16 %v2112
    %v2217 = vunpack.c.l.b16 %v2113
    %v2218 = vunpack.c.l.b16 %v2114
    %v2219 = vunpack.c.l.b16 %v2115
    %v2220 = vunpack.c.l.b16 %v2116
    %v2221 = vunpack.c.l.b16 %v2117
    %v2222 = vunpack.c.l.b16 %v2118
    %v2223 = vunpack.c.l.b16 %v2119
    %v2224 = vunpack.c.l.b16 %v2120
    %v2225 = vunpack.c.l.b16 %v2121
    %v2226 = vunpack.c.l.b16 %v2122
    %v2227 = vunpack.c.l.b16 %v2123
    %v2228 = vunpack.c.l.b16 %v2124
    %v2229 = vpack.c.b16 %v2182, %v2181
    %v2230 = vpack.c.b16 %v2184, %v2183
    %v2231 = vpack.c.b16 %v2186, %v2185
    %v2232 = vpack.c.b16 %v2188, %v2187
    %v2233 = vpack.c.b16 %v2190, %v2189
    %v2234 = vpack.c.b16 %v2192, %v2191
    %v2235 = vpack.c.b16 %v2194, %v2193
    %v2236 = vpack.c.b16 %v2196, %v2195
    %v2237 = vpack.c.b16 %v2198, %v2197
    %v2238 = vpack.c.b16 %v2200, %v2199
    %v2239 = vpack.c.b16 %v2202, %v2201
    %v2240 = vpack.c.b16 %v2204, %v2203
    %v2241 = vpack.c.b16 %v2206, %v2205
    %v2242 = vpack.c.b16 %v2208, %v2207
    %v2243 = vpack.c.b16 %v2210, %v2209
    %v2244 = vpack.c.b16 %v2212, %v2211
    %v2245 = vpack.c.b16 %v2214, %v2213
    %v2246 = vpack.c.b16 %v2216, %v2215
    %v2247 = vpack.c.b16 %v2218, %v2217
    %v2248 = vpack.c.b16 %v2220, %v2219
    %v2249 = vpack.c.b16 %v2222, %v2221
    %v2250 = vpack.c.b16 %v2224, %v2223
    %v2251 = vpack.c.b16 %v2226, %v2225
    %v2252 = vpack.c.b16 %v2228, %v2227
    %2277 = vmatpush.bf16.msra.mxu0 %v2236
    %2278 = vmatpush.bf16.msra.mxu0 %v2235
    %2279 = vmatpush.bf16.msra.mxu0 %v2234
    %2280 = vmatpush.bf16.msra.mxu0 %v2233
    %2281 = vmatpush.bf16.msra.mxu0 %v2232
    %2282 = vmatpush.bf16.msra.mxu0 %v2231
    %2283 = vmatpush.bf16.msra.mxu0 %v2230
    %2284 = vmatpush.bf16.msra.mxu0 %v2229
    %2285 = vmatmul.bf16.gmra.mxu0 %v2129
    %v2286 = vpop.f32.mrf.mxu0
    %v2287 = vadd.f32 %v2132, %v2286
    %v2288 = vpop.f32.mrf.mxu0
    %2289 = vdwg.mxu0
    %2290 = vmatpush.bf16.msra.mxu0 %v2244
    %2291 = vmatpush.bf16.msra.mxu0 %v2243
    %2292 = vmatpush.bf16.msra.mxu0 %v2242
    %2293 = vmatpush.bf16.msra.mxu0 %v2241
    %2294 = vmatpush.bf16.msra.mxu0 %v2240
    %2295 = vmatpush.bf16.msra.mxu0 %v2239
    %2296 = vmatpush.bf16.msra.mxu0 %v2238
    %2297 = vmatpush.bf16.msra.mxu0 %v2237
    %2298 = vmatmul.bf16.gmra.mxu0 %v2130
    %v2299 = vpop.f32.mrf.mxu0
    %v2300 = vadd.f32 %v2287, %v2299
    %v2301 = vpop.f32.mrf.mxu0
    %2302 = vdwg.mxu0
    %2303 = vmatpush.bf16.msra.mxu0 %v2252
    %2304 = vmatpush.bf16.msra.mxu0 %v2251
    %2305 = vmatpush.bf16.msra.mxu0 %v2250
    %2306 = vmatpush.bf16.msra.mxu0 %v2249
    %2307 = vmatpush.bf16.msra.mxu0 %v2248
    %2308 = vmatpush.bf16.msra.mxu0 %v2247
    %2309 = vmatpush.bf16.msra.mxu0 %v2246
    %2310 = vmatpush.bf16.msra.mxu0 %v2245
    %2311 = vmatmul.bf16.gmra.mxu0 %v2131
    %v2312 = vpop.f32.mrf.mxu0
    %v2313 = vadd.f32 %v2300, %v2312
    %v2314 = vpop.f32.mrf.mxu0
    %2315 = vdwg.mxu0
    %vm2316 = vcmp.gt.f32.partialorder %v2313, 0.0
    %v2317 = vmul.f32 %v2313, 0.2
    %v2318 = vsel %vm2316, %v2313, %v2317
    %2319 = vst [vmem:[#allocation2 + $0x1] sm:$0xff] %v2318
    %v2320 = vld [vmem:[%s1662] ss:$2 sm:$0xff]
    %v2321 = vld [vmem:[%s1670] ss:$2 sm:$0xff]
    %v2322 = vld [vmem:[%s1678] ss:$2 sm:$0xff]
    %v2323 = vpack.c.bf16 %v2320, %v2320
    %v2324 = vpack.c.bf16 %v2321, %v2321
    %v2325 = vpack.c.bf16 %v2322, %v2322
    %2326 = vmatpush.bf16.msra.mxu0 %v2236
    %2327 = vmatpush.bf16.msra.mxu0 %v2235
    %2328 = vmatpush.bf16.msra.mxu0 %v2234
    %2329 = vmatpush.bf16.msra.mxu0 %v2233
    %2330 = vmatpush.bf16.msra.mxu0 %v2232
    %2331 = vmatpush.bf16.msra.mxu0 %v2231
    %2332 = vmatpush.bf16.msra.mxu0 %v2230
    %2333 = vmatpush.bf16.msra.mxu0 %v2229
    %2334 = vmatmul.bf16.gmra.mxu0 %v2323
    %v2335 = vpop.f32.mrf.mxu0
    %v2336 = vadd.f32 %v2132, %v2335
    %v2337 = vpop.f32.mrf.mxu0
    %2338 = vdwg.mxu0
    %2339 = vmatpush.bf16.msra.mxu0 %v2244
    %2340 = vmatpush.bf16.msra.mxu0 %v2243
    %2341 = vmatpush.bf16.msra.mxu0 %v2242
    %2342 = vmatpush.bf16.msra.mxu0 %v2241
    %2343 = vmatpush.bf16.msra.mxu0 %v2240
    %2344 = vmatpush.bf16.msra.mxu0 %v2239
    %2345 = vmatpush.bf16.msra.mxu0 %v2238
    %2346 = vmatpush.bf16.msra.mxu0 %v2237
    %2347 = vmatmul.bf16.gmra.mxu0 %v2324
    %v2348 = vpop.f32.mrf.mxu0
    %v2349 = vadd.f32 %v2336, %v2348
    %v2350 = vpop.f32.mrf.mxu0
    %2351 = vdwg.mxu0
    %2352 = vmatpush.bf16.msra.mxu0 %v2252
    %2353 = vmatpush.bf16.msra.mxu0 %v2251
    %2354 = vmatpush.bf16.msra.mxu0 %v2250
    %2355 = vmatpush.bf16.msra.mxu0 %v2249
    %2356 = vmatpush.bf16.msra.mxu0 %v2248
    %2357 = vmatpush.bf16.msra.mxu0 %v2247
    %2358 = vmatpush.bf16.msra.mxu0 %v2246
    %2359 = vmatpush.bf16.msra.mxu0 %v2245
    %2360 = vmatmul.bf16.gmra.mxu0 %v2325
    %v2361 = vpop.f32.mrf.mxu0
    %v2362 = vadd.f32 %v2349, %v2361
    %v2363 = vpop.f32.mrf.mxu0
    %2364 = vdwg.mxu0
    %vm2365 = vcmp.gt.f32.partialorder %v2362, 0.0
    %v2366 = vmul.f32 %v2362, 0.2
    %v2367 = vsel %vm2365, %v2362, %v2366
    %2368 = vst [vmem:[#allocation2 + $0x49] sm:$0xff] %v2367
    %v2369 = vld [vmem:[%s2 + $0x440] sm:$0xf]
    %v2370 = vld [vmem:[%s2 + $0x444] sm:$0xf]
    %v2371 = vld [vmem:[%s2 + $0x448] sm:$0xf]
    %v2372 = vld [vmem:[%s2 + $0x44c] sm:$0xf]
    %v2373 = vld [vmem:[%s2 + $0x450] sm:$0xf]
    %v2374 = vld [vmem:[%s2 + $0x454] sm:$0xf]
    %v2375 = vld [vmem:[%s2 + $0x458] sm:$0xf]
    %v2376 = vld [vmem:[%s2 + $0x45c] sm:$0xf]
    %v2377 = vld [vmem:[%s2 + $0x460] sm:$0xf]
    %v2378 = vld [vmem:[%s2 + $0x464] sm:$0xf]
    %v2379 = vld [vmem:[%s2 + $0x468] sm:$0xf]
    %v2380 = vld [vmem:[%s2 + $0x46c] sm:$0xf]
    %v2381 = vld [vmem:[%s2 + $0x470] sm:$0xf]
    %v2382 = vld [vmem:[%s2 + $0x474] sm:$0xf]
    %v2383 = vld [vmem:[%s2 + $0x478] sm:$0xf]
    %v2384 = vld [vmem:[%s2 + $0x47c] sm:$0xf]
    %v2385 = vld [vmem:[%s2 + $0x480] sm:$0xf]
    %v2386 = vld [vmem:[%s2 + $0x484] sm:$0xf]
    %v2387 = vld [vmem:[%s2 + $0x488] sm:$0xf]
    %v2388 = vld [vmem:[%s2 + $0x48c] sm:$0xf]
    %v2389 = vld [vmem:[%s2 + $0x490] sm:$0xf]
    %v2390 = vld [vmem:[%s2 + $0x494] sm:$0xf]
    %v2391 = vld [vmem:[%s2 + $0x498] sm:$0xf]
    %v2392 = vld [vmem:[%s2 + $0x49c] sm:$0xf]
    %v2393 = vld [vmem:[%s2 + $0x4a0] sm:$0xf]
    %v2394 = vld [vmem:[%s2 + $0x4a4] sm:$0xf]
    %v2395 = vld [vmem:[%s2 + $0x4a8] sm:$0xf]
    %v2396 = vld [vmem:[%s2 + $0x4ac] sm:$0xf]
    %v2397 = vld [vmem:[%s2 + $0x4b0] sm:$0xf]
    %v2398 = vld [vmem:[%s2 + $0x4b4] sm:$0xf]
    %v2399 = vld [vmem:[%s2 + $0x4b8] sm:$0xf]
    %v2400 = vld [vmem:[%s2 + $0x4bc] sm:$0xf]
    %v2401 = vld [vmem:[%s2 + $0x4c0] sm:$0xf]
    %v2402 = vld [vmem:[%s2 + $0x4c4] sm:$0xf]
    %v2403 = vld [vmem:[%s2 + $0x4c8] sm:$0xf]
    %v2404 = vld [vmem:[%s2 + $0x4cc] sm:$0xf]
    %v2405 = vld [vmem:[%s2 + $0x4d0] sm:$0xf]
    %v2406 = vld [vmem:[%s2 + $0x4d4] sm:$0xf]
    %v2407 = vld [vmem:[%s2 + $0x4d8] sm:$0xf]
    %v2408 = vld [vmem:[%s2 + $0x4dc] sm:$0xf]
    %v2409 = vld [vmem:[%s2 + $0x4e0] sm:$0xf]
    %v2410 = vld [vmem:[%s2 + $0x4e4] sm:$0xf]
    %v2411 = vld [vmem:[%s2 + $0x4e8] sm:$0xf]
    %v2412 = vld [vmem:[%s2 + $0x4ec] sm:$0xf]
    %v2413 = vld [vmem:[%s2 + $0x4f0] sm:$0xf]
    %v2414 = vld [vmem:[%s2 + $0x4f4] sm:$0xf]
    %v2415 = vld [vmem:[%s2 + $0x4f8] sm:$0xf]
    %v2416 = vld [vmem:[%s2 + $0x4fc] sm:$0xf]
    %v2417 = vld [vmem:[%s3 + $0x8] sm:$0x1]
    %v2418 = vld [vmem:[#allocation2] ss:$2 sm:$0xf]
    %v2419 = vld [vmem:[%s1422] ss:$2 sm:$0xf]
    %v2420 = vld [vmem:[%s1430] ss:$2 sm:$0xf]
    %v2421 = vpack.c.bf16 %v2418, %v2418
    %v2422 = vpack.c.bf16 %v2419, %v2419
    %v2423 = vpack.c.bf16 %v2420, %v2420
    %v2424 = vperm.slane %v2417, 0
    %v2473 = vunpack.c.l.b16 %v2369
    %v2474 = vunpack.c.l.b16 %v2370
    %v2475 = vunpack.c.l.b16 %v2371
    %v2476 = vunpack.c.l.b16 %v2372
    %v2477 = vunpack.c.l.b16 %v2373
    %v2478 = vunpack.c.l.b16 %v2374
    %v2479 = vunpack.c.l.b16 %v2375
    %v2480 = vunpack.c.l.b16 %v2376
    %v2481 = vunpack.c.l.b16 %v2377
    %v2482 = vunpack.c.l.b16 %v2378
    %v2483 = vunpack.c.l.b16 %v2379
    %v2484 = vunpack.c.l.b16 %v2380
    %v2485 = vunpack.c.l.b16 %v2381
    %v2486 = vunpack.c.l.b16 %v2382
    %v2487 = vunpack.c.l.b16 %v2383
    %v2488 = vunpack.c.l.b16 %v2384
    %v2489 = vunpack.c.l.b16 %v2385
    %v2490 = vunpack.c.l.b16 %v2386
    %v2491 = vunpack.c.l.b16 %v2387
    %v2492 = vunpack.c.l.b16 %v2388
    %v2493 = vunpack.c.l.b16 %v2389
    %v2494 = vunpack.c.l.b16 %v2390
    %v2495 = vunpack.c.l.b16 %v2391
    %v2496 = vunpack.c.l.b16 %v2392
    %v2497 = vunpack.c.l.b16 %v2393
    %v2498 = vunpack.c.l.b16 %v2394
    %v2499 = vunpack.c.l.b16 %v2395
    %v2500 = vunpack.c.l.b16 %v2396
    %v2501 = vunpack.c.l.b16 %v2397
    %v2502 = vunpack.c.l.b16 %v2398
    %v2503 = vunpack.c.l.b16 %v2399
    %v2504 = vunpack.c.l.b16 %v2400
    %v2505 = vunpack.c.l.b16 %v2401
    %v2506 = vunpack.c.l.b16 %v2402
    %v2507 = vunpack.c.l.b16 %v2403
    %v2508 = vunpack.c.l.b16 %v2404
    %v2509 = vunpack.c.l.b16 %v2405
    %v2510 = vunpack.c.l.b16 %v2406
    %v2511 = vunpack.c.l.b16 %v2407
    %v2512 = vunpack.c.l.b16 %v2408
    %v2513 = vunpack.c.l.b16 %v2409
    %v2514 = vunpack.c.l.b16 %v2410
    %v2515 = vunpack.c.l.b16 %v2411
    %v2516 = vunpack.c.l.b16 %v2412
    %v2517 = vunpack.c.l.b16 %v2413
    %v2518 = vunpack.c.l.b16 %v2414
    %v2519 = vunpack.c.l.b16 %v2415
    %v2520 = vunpack.c.l.b16 %v2416
    %v2521 = vpack.c.b16 %v2474, %v2473
    %v2522 = vpack.c.b16 %v2476, %v2475
    %v2523 = vpack.c.b16 %v2478, %v2477
    %v2524 = vpack.c.b16 %v2480, %v2479
    %v2525 = vpack.c.b16 %v2482, %v2481
    %v2526 = vpack.c.b16 %v2484, %v2483
    %v2527 = vpack.c.b16 %v2486, %v2485
    %v2528 = vpack.c.b16 %v2488, %v2487
    %v2529 = vpack.c.b16 %v2490, %v2489
    %v2530 = vpack.c.b16 %v2492, %v2491
    %v2531 = vpack.c.b16 %v2494, %v2493
    %v2532 = vpack.c.b16 %v2496, %v2495
    %v2533 = vpack.c.b16 %v2498, %v2497
    %v2534 = vpack.c.b16 %v2500, %v2499
    %v2535 = vpack.c.b16 %v2502, %v2501
    %v2536 = vpack.c.b16 %v2504, %v2503
    %v2537 = vpack.c.b16 %v2506, %v2505
    %v2538 = vpack.c.b16 %v2508, %v2507
    %v2539 = vpack.c.b16 %v2510, %v2509
    %v2540 = vpack.c.b16 %v2512, %v2511
    %v2541 = vpack.c.b16 %v2514, %v2513
    %v2542 = vpack.c.b16 %v2516, %v2515
    %v2543 = vpack.c.b16 %v2518, %v2517
    %v2544 = vpack.c.b16 %v2520, %v2519
    %2569 = vmatpush.bf16.msra.mxu0 %v2528
    %2570 = vmatpush.bf16.msra.mxu0 %v2527
    %2571 = vmatpush.bf16.msra.mxu0 %v2526
    %2572 = vmatpush.bf16.msra.mxu0 %v2525
    %2573 = vmatpush.bf16.msra.mxu0 %v2524
    %2574 = vmatpush.bf16.msra.mxu0 %v2523
    %2575 = vmatpush.bf16.msra.mxu0 %v2522
    %2576 = vmatpush.bf16.msra.mxu0 %v2521
    %2577 = vmatmul.bf16.gmra.mxu0 %v2421
    %v2578 = vpop.f32.mrf.mxu0
    %v2579 = vadd.f32 %v2424, %v2578
    %v2580 = vpop.f32.mrf.mxu0
    %2581 = vdwg.mxu0
    %2582 = vmatpush.bf16.msra.mxu0 %v2536
    %2583 = vmatpush.bf16.msra.mxu0 %v2535
    %2584 = vmatpush.bf16.msra.mxu0 %v2534
    %2585 = vmatpush.bf16.msra.mxu0 %v2533
    %2586 = vmatpush.bf16.msra.mxu0 %v2532
    %2587 = vmatpush.bf16.msra.mxu0 %v2531
    %2588 = vmatpush.bf16.msra.mxu0 %v2530
    %2589 = vmatpush.bf16.msra.mxu0 %v2529
    %2590 = vmatmul.bf16.gmra.mxu0 %v2422
    %v2591 = vpop.f32.mrf.mxu0
    %v2592 = vadd.f32 %v2579, %v2591
    %v2593 = vpop.f32.mrf.mxu0
    %2594 = vdwg.mxu0
    %2595 = vmatpush.bf16.msra.mxu0 %v2544
    %2596 = vmatpush.bf16.msra.mxu0 %v2543
    %2597 = vmatpush.bf16.msra.mxu0 %v2542
    %2598 = vmatpush.bf16.msra.mxu0 %v2541
    %2599 = vmatpush.bf16.msra.mxu0 %v2540
    %2600 = vmatpush.bf16.msra.mxu0 %v2539
    %2601 = vmatpush.bf16.msra.mxu0 %v2538
    %2602 = vmatpush.bf16.msra.mxu0 %v2537
    %2603 = vmatmul.bf16.gmra.mxu0 %v2423
    %v2604 = vpop.f32.mrf.mxu0
    %v2605 = vadd.f32 %v2592, %v2604
    %v2606 = vpop.f32.mrf.mxu0
    %2607 = vdwg.mxu0
    %vm2608 = vcmp.gt.f32.partialorder %v2605, 0.0
    %v2609 = vmul.f32 %v2605, 0.2
    %v2610 = vsel %vm2608, %v2605, %v2609
    %2611 = vst [vmem:[#allocation2 + $0x1] sm:$0xf] %v2610
    %v2612 = vld [vmem:[%s1662] ss:$2 sm:$0xf]
    %v2613 = vld [vmem:[%s1670] ss:$2 sm:$0xf]
    %v2614 = vld [vmem:[%s1678] ss:$2 sm:$0xf]
    %v2615 = vpack.c.bf16 %v2612, %v2612
    %v2616 = vpack.c.bf16 %v2613, %v2613
    %v2617 = vpack.c.bf16 %v2614, %v2614
    %2618 = vmatpush.bf16.msra.mxu0 %v2528
    %2619 = vmatpush.bf16.msra.mxu0 %v2527
    %2620 = vmatpush.bf16.msra.mxu0 %v2526
    %2621 = vmatpush.bf16.msra.mxu0 %v2525
    %2622 = vmatpush.bf16.msra.mxu0 %v2524
    %2623 = vmatpush.bf16.msra.mxu0 %v2523
    %2624 = vmatpush.bf16.msra.mxu0 %v2522
    %2625 = vmatpush.bf16.msra.mxu0 %v2521
    %2626 = vmatmul.bf16.gmra.mxu0 %v2615
    %v2627 = vpop.f32.mrf.mxu0
    %v2628 = vadd.f32 %v2424, %v2627
    %v2629 = vpop.f32.mrf.mxu0
    %2630 = vdwg.mxu0
    %2631 = vmatpush.bf16.msra.mxu0 %v2536
    %2632 = vmatpush.bf16.msra.mxu0 %v2535
    %2633 = vmatpush.bf16.msra.mxu0 %v2534
    %2634 = vmatpush.bf16.msra.mxu0 %v2533
    %2635 = vmatpush.bf16.msra.mxu0 %v2532
    %2636 = vmatpush.bf16.msra.mxu0 %v2531
    %2637 = vmatpush.bf16.msra.mxu0 %v2530
    %2638 = vmatpush.bf16.msra.mxu0 %v2529
    %2639 = vmatmul.bf16.gmra.mxu0 %v2616
    %v2640 = vpop.f32.mrf.mxu0
    %v2641 = vadd.f32 %v2628, %v2640
    %v2642 = vpop.f32.mrf.mxu0
    %2643 = vdwg.mxu0
    %2644 = vmatpush.bf16.msra.mxu0 %v2544
    %2645 = vmatpush.bf16.msra.mxu0 %v2543
    %2646 = vmatpush.bf16.msra.mxu0 %v2542
    %2647 = vmatpush.bf16.msra.mxu0 %v2541
    %2648 = vmatpush.bf16.msra.mxu0 %v2540
    %2649 = vmatpush.bf16.msra.mxu0 %v2539
    %2650 = vmatpush.bf16.msra.mxu0 %v2538
    %2651 = vmatpush.bf16.msra.mxu0 %v2537
    %2652 = vmatmul.bf16.gmra.mxu0 %v2617
    %v2653 = vpop.f32.mrf.mxu0
    %v2654 = vadd.f32 %v2641, %v2653
    %v2655 = vpop.f32.mrf.mxu0
    %2656 = vdwg.mxu0
    %vm2657 = vcmp.gt.f32.partialorder %v2654, 0.0
    %v2658 = vmul.f32 %v2654, 0.2
    %v2659 = vsel %vm2657, %v2654, %v2658
    %2660 = vst [vmem:[#allocation2 + $0x49] sm:$0xf] %v2659
    %v2661 = vld [vmem:[%s2 + $0x500] sm:$0xf]
    %v2662 = vld [vmem:[%s2 + $0x504] sm:$0xf]
    %v2663 = vld [vmem:[%s2 + $0x508] sm:$0xf]
    %v2664 = vld [vmem:[%s2 + $0x50c] sm:$0xf]
    %v2665 = vld [vmem:[%s2 + $0x510] sm:$0xf]
    %v2666 = vld [vmem:[%s2 + $0x514] sm:$0xf]
    %v2667 = vld [vmem:[%s2 + $0x518] sm:$0xf]
    %v2668 = vld [vmem:[%s2 + $0x51c] sm:$0xf]
    %v2669 = vld [vmem:[%s2 + $0x520] sm:$0xf]
    %v2670 = vld [vmem:[%s2 + $0x524] sm:$0xf]
    %v2671 = vld [vmem:[%s2 + $0x528] sm:$0xf]
    %v2672 = vld [vmem:[%s2 + $0x52c] sm:$0xf]
    %v2673 = vld [vmem:[%s2 + $0x530] sm:$0xf]
    %v2674 = vld [vmem:[%s2 + $0x534] sm:$0xf]
    %v2675 = vld [vmem:[%s2 + $0x538] sm:$0xf]
    %v2676 = vld [vmem:[%s2 + $0x53c] sm:$0xf]
    %v2677 = vld [vmem:[%s2 + $0x540] sm:$0xf]
    %v2678 = vld [vmem:[%s2 + $0x544] sm:$0xf]
    %v2679 = vld [vmem:[%s2 + $0x548] sm:$0xf]
    %v2680 = vld [vmem:[%s2 + $0x54c] sm:$0xf]
    %v2681 = vld [vmem:[%s2 + $0x550] sm:$0xf]
    %v2682 = vld [vmem:[%s2 + $0x554] sm:$0xf]
    %v2683 = vld [vmem:[%s2 + $0x558] sm:$0xf]
    %v2684 = vld [vmem:[%s2 + $0x55c] sm:$0xf]
    %v2685 = vld [vmem:[%s2 + $0x560] sm:$0xf]
    %v2686 = vld [vmem:[%s2 + $0x564] sm:$0xf]
    %v2687 = vld [vmem:[%s2 + $0x568] sm:$0xf]
    %v2688 = vld [vmem:[%s2 + $0x56c] sm:$0xf]
    %v2689 = vld [vmem:[%s2 + $0x570] sm:$0xf]
    %v2690 = vld [vmem:[%s2 + $0x574] sm:$0xf]
    %v2691 = vld [vmem:[%s2 + $0x578] sm:$0xf]
    %v2692 = vld [vmem:[%s2 + $0x57c] sm:$0xf]
    %v2693 = vld [vmem:[%s2 + $0x580] sm:$0xf]
    %v2694 = vld [vmem:[%s2 + $0x584] sm:$0xf]
    %v2695 = vld [vmem:[%s2 + $0x588] sm:$0xf]
    %v2696 = vld [vmem:[%s2 + $0x58c] sm:$0xf]
    %v2697 = vld [vmem:[%s2 + $0x590] sm:$0xf]
    %v2698 = vld [vmem:[%s2 + $0x594] sm:$0xf]
    %v2699 = vld [vmem:[%s2 + $0x598] sm:$0xf]
    %v2700 = vld [vmem:[%s2 + $0x59c] sm:$0xf]
    %v2701 = vld [vmem:[%s2 + $0x5a0] sm:$0xf]
    %v2702 = vld [vmem:[%s2 + $0x5a4] sm:$0xf]
    %v2703 = vld [vmem:[%s2 + $0x5a8] sm:$0xf]
    %v2704 = vld [vmem:[%s2 + $0x5ac] sm:$0xf]
    %v2705 = vld [vmem:[%s2 + $0x5b0] sm:$0xf]
    %v2706 = vld [vmem:[%s2 + $0x5b4] sm:$0xf]
    %v2707 = vld [vmem:[%s2 + $0x5b8] sm:$0xf]
    %v2708 = vld [vmem:[%s2 + $0x5bc] sm:$0xf]
    %v2709 = vld [vmem:[%s3 + $0x9] sm:$0x1]
    %v2710 = vld [vmem:[#allocation2] ss:$2 sm:$0x3]
    %v2711 = vld [vmem:[%s1422] ss:$2 sm:$0x3]
    %v2712 = vld [vmem:[%s1430] ss:$2 sm:$0x3]
    %v2713 = vpack.c.bf16 %v2710, %v2710
    %v2714 = vpack.c.bf16 %v2711, %v2711
    %v2715 = vpack.c.bf16 %v2712, %v2712
    %v2716 = vperm.slane %v2709, 0
    %v2765 = vunpack.c.l.b16 %v2661
    %v2766 = vunpack.c.l.b16 %v2662
    %v2767 = vunpack.c.l.b16 %v2663
    %v2768 = vunpack.c.l.b16 %v2664
    %v2769 = vunpack.c.l.b16 %v2665
    %v2770 = vunpack.c.l.b16 %v2666
    %v2771 = vunpack.c.l.b16 %v2667
    %v2772 = vunpack.c.l.b16 %v2668
    %v2773 = vunpack.c.l.b16 %v2669
    %v2774 = vunpack.c.l.b16 %v2670
    %v2775 = vunpack.c.l.b16 %v2671
    %v2776 = vunpack.c.l.b16 %v2672
    %v2777 = vunpack.c.l.b16 %v2673
    %v2778 = vunpack.c.l.b16 %v2674
    %v2779 = vunpack.c.l.b16 %v2675
    %v2780 = vunpack.c.l.b16 %v2676
    %v2781 = vunpack.c.l.b16 %v2677
    %v2782 = vunpack.c.l.b16 %v2678
    %v2783 = vunpack.c.l.b16 %v2679
    %v2784 = vunpack.c.l.b16 %v2680
    %v2785 = vunpack.c.l.b16 %v2681
    %v2786 = vunpack.c.l.b16 %v2682
    %v2787 = vunpack.c.l.b16 %v2683
    %v2788 = vunpack.c.l.b16 %v2684
    %v2789 = vunpack.c.l.b16 %v2685
    %v2790 = vunpack.c.l.b16 %v2686
    %v2791 = vunpack.c.l.b16 %v2687
    %v2792 = vunpack.c.l.b16 %v2688
    %v2793 = vunpack.c.l.b16 %v2689
    %v2794 = vunpack.c.l.b16 %v2690
    %v2795 = vunpack.c.l.b16 %v2691
    %v2796 = vunpack.c.l.b16 %v2692
    %v2797 = vunpack.c.l.b16 %v2693
    %v2798 = vunpack.c.l.b16 %v2694
    %v2799 = vunpack.c.l.b16 %v2695
    %v2800 = vunpack.c.l.b16 %v2696
    %v2801 = vunpack.c.l.b16 %v2697
    %v2802 = vunpack.c.l.b16 %v2698
    %v2803 = vunpack.c.l.b16 %v2699
    %v2804 = vunpack.c.l.b16 %v2700
    %v2805 = vunpack.c.l.b16 %v2701
    %v2806 = vunpack.c.l.b16 %v2702
    %v2807 = vunpack.c.l.b16 %v2703
    %v2808 = vunpack.c.l.b16 %v2704
    %v2809 = vunpack.c.l.b16 %v2705
    %v2810 = vunpack.c.l.b16 %v2706
    %v2811 = vunpack.c.l.b16 %v2707
    %v2812 = vunpack.c.l.b16 %v2708
    %v2813 = vpack.c.b16 %v2766, %v2765
    %v2814 = vpack.c.b16 %v2768, %v2767
    %v2815 = vpack.c.b16 %v2770, %v2769
    %v2816 = vpack.c.b16 %v2772, %v2771
    %v2817 = vpack.c.b16 %v2774, %v2773
    %v2818 = vpack.c.b16 %v2776, %v2775
    %v2819 = vpack.c.b16 %v2778, %v2777
    %v2820 = vpack.c.b16 %v2780, %v2779
    %v2821 = vpack.c.b16 %v2782, %v2781
    %v2822 = vpack.c.b16 %v2784, %v2783
    %v2823 = vpack.c.b16 %v2786, %v2785
    %v2824 = vpack.c.b16 %v2788, %v2787
    %v2825 = vpack.c.b16 %v2790, %v2789
    %v2826 = vpack.c.b16 %v2792, %v2791
    %v2827 = vpack.c.b16 %v2794, %v2793
    %v2828 = vpack.c.b16 %v2796, %v2795
    %v2829 = vpack.c.b16 %v2798, %v2797
    %v2830 = vpack.c.b16 %v2800, %v2799
    %v2831 = vpack.c.b16 %v2802, %v2801
    %v2832 = vpack.c.b16 %v2804, %v2803
    %v2833 = vpack.c.b16 %v2806, %v2805
    %v2834 = vpack.c.b16 %v2808, %v2807
    %v2835 = vpack.c.b16 %v2810, %v2809
    %v2836 = vpack.c.b16 %v2812, %v2811
    %2861 = vmatpush.bf16.msra.mxu0 %v2820
    %2862 = vmatpush.bf16.msra.mxu0 %v2819
    %2863 = vmatpush.bf16.msra.mxu0 %v2818
    %2864 = vmatpush.bf16.msra.mxu0 %v2817
    %2865 = vmatpush.bf16.msra.mxu0 %v2816
    %2866 = vmatpush.bf16.msra.mxu0 %v2815
    %2867 = vmatpush.bf16.msra.mxu0 %v2814
    %2868 = vmatpush.bf16.msra.mxu0 %v2813
    %2869 = vmatmul.bf16.gmra.mxu0 %v2713
    %v2870 = vpop.f32.mrf.mxu0
    %v2871 = vadd.f32 %v2716, %v2870
    %v2872 = vpop.f32.mrf.mxu0
    %2873 = vdwg.mxu0
    %2874 = vmatpush.bf16.msra.mxu0 %v2828
    %2875 = vmatpush.bf16.msra.mxu0 %v2827
    %2876 = vmatpush.bf16.msra.mxu0 %v2826
    %2877 = vmatpush.bf16.msra.mxu0 %v2825
    %2878 = vmatpush.bf16.msra.mxu0 %v2824
    %2879 = vmatpush.bf16.msra.mxu0 %v2823
    %2880 = vmatpush.bf16.msra.mxu0 %v2822
    %2881 = vmatpush.bf16.msra.mxu0 %v2821
    %2882 = vmatmul.bf16.gmra.mxu0 %v2714
    %v2883 = vpop.f32.mrf.mxu0
    %v2884 = vadd.f32 %v2871, %v2883
    %v2885 = vpop.f32.mrf.mxu0
    %2886 = vdwg.mxu0
    %2887 = vmatpush.bf16.msra.mxu0 %v2836
    %2888 = vmatpush.bf16.msra.mxu0 %v2835
    %2889 = vmatpush.bf16.msra.mxu0 %v2834
    %2890 = vmatpush.bf16.msra.mxu0 %v2833
    %2891 = vmatpush.bf16.msra.mxu0 %v2832
    %2892 = vmatpush.bf16.msra.mxu0 %v2831
    %2893 = vmatpush.bf16.msra.mxu0 %v2830
    %2894 = vmatpush.bf16.msra.mxu0 %v2829
    %2895 = vmatmul.bf16.gmra.mxu0 %v2715
    %v2896 = vpop.f32.mrf.mxu0
    %v2897 = vadd.f32 %v2884, %v2896
    %v2898 = vpop.f32.mrf.mxu0
    %2899 = vdwg.mxu0
    %vm2900 = vcmp.gt.f32.partialorder %v2897, 0.0
    %v2901 = vmul.f32 %v2897, 0.2
    %v2902 = vsel %vm2900, %v2897, %v2901
    %2903 = vst [vmem:[#allocation2 + $0x1] sm:$0x3] %v2902
    %v2904 = vld [vmem:[%s1662] ss:$2 sm:$0x3]
    %v2905 = vld [vmem:[%s1670] ss:$2 sm:$0x3]
    %v2906 = vld [vmem:[%s1678] ss:$2 sm:$0x3]
    %v2907 = vpack.c.bf16 %v2904, %v2904
    %v2908 = vpack.c.bf16 %v2905, %v2905
    %v2909 = vpack.c.bf16 %v2906, %v2906
    %2910 = vmatpush.bf16.msra.mxu0 %v2820
    %2911 = vmatpush.bf16.msra.mxu0 %v2819
    %2912 = vmatpush.bf16.msra.mxu0 %v2818
    %2913 = vmatpush.bf16.msra.mxu0 %v2817
    %2914 = vmatpush.bf16.msra.mxu0 %v2816
    %2915 = vmatpush.bf16.msra.mxu0 %v2815
    %2916 = vmatpush.bf16.msra.mxu0 %v2814
    %2917 = vmatpush.bf16.msra.mxu0 %v2813
    %2918 = vmatmul.bf16.gmra.mxu0 %v2907
    %v2919 = vpop.f32.mrf.mxu0
    %v2920 = vadd.f32 %v2716, %v2919
    %v2921 = vpop.f32.mrf.mxu0
    %2922 = vdwg.mxu0
    %2923 = vmatpush.bf16.msra.mxu0 %v2828
    %2924 = vmatpush.bf16.msra.mxu0 %v2827
    %2925 = vmatpush.bf16.msra.mxu0 %v2826
    %2926 = vmatpush.bf16.msra.mxu0 %v2825
    %2927 = vmatpush.bf16.msra.mxu0 %v2824
    %2928 = vmatpush.bf16.msra.mxu0 %v2823
    %2929 = vmatpush.bf16.msra.mxu0 %v2822
    %2930 = vmatpush.bf16.msra.mxu0 %v2821
    %2931 = vmatmul.bf16.gmra.mxu0 %v2908
    %v2932 = vpop.f32.mrf.mxu0
    %v2933 = vadd.f32 %v2920, %v2932
    %v2934 = vpop.f32.mrf.mxu0
    %2935 = vdwg.mxu0
    %2936 = vmatpush.bf16.msra.mxu0 %v2836
    %2937 = vmatpush.bf16.msra.mxu0 %v2835
    %2938 = vmatpush.bf16.msra.mxu0 %v2834
    %2939 = vmatpush.bf16.msra.mxu0 %v2833
    %2940 = vmatpush.bf16.msra.mxu0 %v2832
    %2941 = vmatpush.bf16.msra.mxu0 %v2831
    %2942 = vmatpush.bf16.msra.mxu0 %v2830
    %2943 = vmatpush.bf16.msra.mxu0 %v2829
    %2944 = vmatmul.bf16.gmra.mxu0 %v2909
    %v2945 = vpop.f32.mrf.mxu0
    %v2946 = vadd.f32 %v2933, %v2945
    %v2947 = vpop.f32.mrf.mxu0
    %2948 = vdwg.mxu0
    %vm2949 = vcmp.gt.f32.partialorder %v2946, 0.0
    %v2950 = vmul.f32 %v2946, 0.2
    %v2951 = vsel %vm2949, %v2946, %v2950
    %2952 = vst [vmem:[#allocation2 + $0x49] sm:$0x3] %v2951
    %v2953 = vld [vmem:[%s2 + $0x5c0] sm:$0xf]
    %v2954 = vld [vmem:[%s2 + $0x5c4] sm:$0xf]
    %v2955 = vld [vmem:[%s2 + $0x5c8] sm:$0xf]
    %v2956 = vld [vmem:[%s2 + $0x5cc] sm:$0xf]
    %v2957 = vld [vmem:[%s2 + $0x5d0] sm:$0xf]
    %v2958 = vld [vmem:[%s2 + $0x5d4] sm:$0xf]
    %v2959 = vld [vmem:[%s2 + $0x5d8] sm:$0xf]
    %v2960 = vld [vmem:[%s2 + $0x5dc] sm:$0xf]
    %v2961 = vld [vmem:[%s2 + $0x5e0] sm:$0xf]
    %v2962 = vld [vmem:[%s2 + $0x5e4] sm:$0xf]
    %v2963 = vld [vmem:[%s2 + $0x5e8] sm:$0xf]
    %v2964 = vld [vmem:[%s2 + $0x5ec] sm:$0xf]
    %v2965 = vld [vmem:[%s2 + $0x5f0] sm:$0xf]
    %v2966 = vld [vmem:[%s2 + $0x5f4] sm:$0xf]
    %v2967 = vld [vmem:[%s2 + $0x5f8] sm:$0xf]
    %v2968 = vld [vmem:[%s2 + $0x5fc] sm:$0xf]
    %v2969 = vld [vmem:[%s2 + $0x600] sm:$0xf]
    %v2970 = vld [vmem:[%s2 + $0x604] sm:$0xf]
    %v2971 = vld [vmem:[%s2 + $0x608] sm:$0xf]
    %v2972 = vld [vmem:[%s2 + $0x60c] sm:$0xf]
    %v2973 = vld [vmem:[%s2 + $0x610] sm:$0xf]
    %v2974 = vld [vmem:[%s2 + $0x614] sm:$0xf]
    %v2975 = vld [vmem:[%s2 + $0x618] sm:$0xf]
    %v2976 = vld [vmem:[%s2 + $0x61c] sm:$0xf]
    %v2977 = vld [vmem:[%s2 + $0x620] sm:$0xf]
    %v2978 = vld [vmem:[%s2 + $0x624] sm:$0xf]
    %v2979 = vld [vmem:[%s2 + $0x628] sm:$0xf]
    %v2980 = vld [vmem:[%s2 + $0x62c] sm:$0xf]
    %v2981 = vld [vmem:[%s2 + $0x630] sm:$0xf]
    %v2982 = vld [vmem:[%s2 + $0x634] sm:$0xf]
    %v2983 = vld [vmem:[%s2 + $0x638] sm:$0xf]
    %v2984 = vld [vmem:[%s2 + $0x63c] sm:$0xf]
    %v2985 = vld [vmem:[%s3 + $0xa] sm:$0x1]
    %v2986 = vld [vmem:[%s1422] ss:$2 sm:$0x1]
    %v2987 = vld [vmem:[%s1430] ss:$2 sm:$0x1]
    %v2988 = vpack.c.bf16 %v2986, %v2986
    %v2989 = vpack.c.bf16 %v2987, %v2987
    %v3022 = vunpack.c.l.b16 %v2953
    %v3023 = vunpack.c.l.b16 %v2954
    %v3024 = vunpack.c.l.b16 %v2955
    %v3025 = vunpack.c.l.b16 %v2956
    %v3026 = vunpack.c.l.b16 %v2957
    %v3027 = vunpack.c.l.b16 %v2958
    %v3028 = vunpack.c.l.b16 %v2959
    %v3029 = vunpack.c.l.b16 %v2960
    %v3030 = vunpack.c.l.b16 %v2961
    %v3031 = vunpack.c.l.b16 %v2962
    %v3032 = vunpack.c.l.b16 %v2963
    %v3033 = vunpack.c.l.b16 %v2964
    %v3034 = vunpack.c.l.b16 %v2965
    %v3035 = vunpack.c.l.b16 %v2966
    %v3036 = vunpack.c.l.b16 %v2967
    %v3037 = vunpack.c.l.b16 %v2968
    %v3038 = vunpack.c.l.b16 %v2969
    %v3039 = vunpack.c.l.b16 %v2970
    %v3040 = vunpack.c.l.b16 %v2971
    %v3041 = vunpack.c.l.b16 %v2972
    %v3042 = vunpack.c.l.b16 %v2973
    %v3043 = vunpack.c.l.b16 %v2974
    %v3044 = vunpack.c.l.b16 %v2975
    %v3045 = vunpack.c.l.b16 %v2976
    %v3046 = vunpack.c.l.b16 %v2977
    %v3047 = vunpack.c.l.b16 %v2978
    %v3048 = vunpack.c.l.b16 %v2979
    %v3049 = vunpack.c.l.b16 %v2980
    %v3050 = vunpack.c.l.b16 %v2981
    %v3051 = vunpack.c.l.b16 %v2982
    %v3052 = vunpack.c.l.b16 %v2983
    %v3053 = vunpack.c.l.b16 %v2984
    %v3054 = vpack.c.b16 %v3023, %v3022
    %v3055 = vpack.c.b16 %v3025, %v3024
    %v3056 = vpack.c.b16 %v3027, %v3026
    %v3057 = vpack.c.b16 %v3029, %v3028
    %v3058 = vpack.c.b16 %v3031, %v3030
    %v3059 = vpack.c.b16 %v3033, %v3032
    %v3060 = vpack.c.b16 %v3035, %v3034
    %v3061 = vpack.c.b16 %v3037, %v3036
    %v3062 = vpack.c.b16 %v3039, %v3038
    %v3063 = vpack.c.b16 %v3041, %v3040
    %v3064 = vpack.c.b16 %v3043, %v3042
    %v3065 = vpack.c.b16 %v3045, %v3044
    %v3066 = vpack.c.b16 %v3047, %v3046
    %v3067 = vpack.c.b16 %v3049, %v3048
    %v3068 = vpack.c.b16 %v3051, %v3050
    %v3069 = vpack.c.b16 %v3053, %v3052
    %3086 = vmatpush.bf16.msra.mxu0 %v3061
    %3087 = vmatpush.bf16.msra.mxu0 %v3060
    %3088 = vmatpush.bf16.msra.mxu0 %v3059
    %3089 = vmatpush.bf16.msra.mxu0 %v3058
    %3090 = vmatpush.bf16.msra.mxu0 %v3057
    %3091 = vmatpush.bf16.msra.mxu0 %v3056
    %3092 = vmatpush.bf16.msra.mxu0 %v3055
    %3093 = vmatpush.bf16.msra.mxu0 %v3054
    %3094 = vmatmul.bf16.gmra.mxu0 %v2988
    %v3095 = vpop.f32.mrf.mxu0
    %v3096 = vadd.f32 %v2985, %v3095
    %v3097 = vpop.f32.mrf.mxu0
    %3098 = vdwg.mxu0
    %3099 = vmatpush.bf16.msra.mxu0 %v3069
    %3100 = vmatpush.bf16.msra.mxu0 %v3068
    %3101 = vmatpush.bf16.msra.mxu0 %v3067
    %3102 = vmatpush.bf16.msra.mxu0 %v3066
    %3103 = vmatpush.bf16.msra.mxu0 %v3065
    %3104 = vmatpush.bf16.msra.mxu0 %v3064
    %3105 = vmatpush.bf16.msra.mxu0 %v3063
    %3106 = vmatpush.bf16.msra.mxu0 %v3062
    %3107 = vmatmul.bf16.gmra.mxu0 %v2989
    %v3108 = vpop.f32.mrf.mxu0
    %v3109 = vadd.f32 %v3096, %v3108
    %v3110 = vpop.f32.mrf.mxu0
    %3111 = vdwg.mxu0
    %3112 = vst [vmem:[#allocation3] sm:$0x1] %v3109
    %v3113 = vld [vmem:[%s1670] ss:$2 sm:$0x1]
    %v3114 = vld [vmem:[%s1678] ss:$2 sm:$0x1]
    %v3115 = vpack.c.bf16 %v3113, %v3113
    %v3116 = vpack.c.bf16 %v3114, %v3114
    %3117 = vmatpush.bf16.msra.mxu0 %v3061
    %3118 = vmatpush.bf16.msra.mxu0 %v3060
    %3119 = vmatpush.bf16.msra.mxu0 %v3059
    %3120 = vmatpush.bf16.msra.mxu0 %v3058
    %3121 = vmatpush.bf16.msra.mxu0 %v3057
    %3122 = vmatpush.bf16.msra.mxu0 %v3056
    %3123 = vmatpush.bf16.msra.mxu0 %v3055
    %3124 = vmatpush.bf16.msra.mxu0 %v3054
    %3125 = vmatmul.bf16.gmra.mxu0 %v3115
    %v3126 = vpop.f32.mrf.mxu0
    %v3127 = vadd.f32 %v2985, %v3126
    %v3128 = vpop.f32.mrf.mxu0
    %3129 = vdwg.mxu0
    %3130 = vmatpush.bf16.msra.mxu0 %v3069
    %3131 = vmatpush.bf16.msra.mxu0 %v3068
    %3132 = vmatpush.bf16.msra.mxu0 %v3067
    %3133 = vmatpush.bf16.msra.mxu0 %v3066
    %3134 = vmatpush.bf16.msra.mxu0 %v3065
    %3135 = vmatpush.bf16.msra.mxu0 %v3064
    %3136 = vmatpush.bf16.msra.mxu0 %v3063
    %3137 = vmatpush.bf16.msra.mxu0 %v3062
    %3138 = vmatmul.bf16.gmra.mxu0 %v3116
    %v3139 = vpop.f32.mrf.mxu0
    %v3140 = vadd.f32 %v3127, %v3139
    %v3141 = vpop.f32.mrf.mxu0
    %3142 = vdwg.mxu0
    %s3143 = scalar_lea.vmem [#allocation3], 1
    %3144 = vst [vmem:[%s3143] sm:$0x1] %v3140
    // Predicated region
    $region18: #{encoder_forward.1} parent=1 // pred_check
      _
    $region19: #{encoder_forward.1} parent=1 // pred_check_branch
      %3146 = sbr.rel (0) target = $region21
    $region20: #{encoder_forward.1} parent=1 // pred_region
      %3148 = vsyncadd [#allocation4], 0
      %s3149 = sshll.u32 [#allocation3], 4
      %s3150 = int_to_ptr.vmem [resolvable:$true] %s3149
      %s3151 = sshll.u32 %s4, 4
      %s3152 = int_to_ptr.hbm [resolvable:$true] %s3151
      %3157 = dma.vmem_to_hbm [thread:$0]  %s3150, 32, %s3152, [#allocation4], 16, 16, 1
    $region21: #{encoder_forward.1} parent=1 // pred_fallthru
      _
    // Predicated region
    $region22: #{encoder_forward.1} parent=1 // pred_check
      _
    $region23: #{encoder_forward.1} parent=1 // pred_check_branch
      %3159 = sbr.rel (0) target = $region25
    $region24: #{encoder_forward.1} parent=1 // pred_region
      %3161 = dma.done [#allocation4], 32
    $region25: #{encoder_forward.1} parent=1 // pred_fallthru
      _
    %3162 = vsyncpa [#allocation4], 1

</llo_original>
